<compile_context>
chip_gen: v7x
topology: tpu7x:2x2x1
jax: 0.10.0
libtpu: 0.0.40
codegen_flags: <defaults>
</compile_context>

<pallas_src>
import functools

import jax
import jax.numpy as jnp
from jax.experimental import pallas as pl
from jax.experimental.pallas import tpu as pltpu

EPS = 1e-5  # PyTorch LayerNorm / GroupNorm default eps
_VMEM_LIMIT = 48 * 1024 * 1024


# ---------------------------------------------------------------------------
# in-kernel numerics helpers
# ---------------------------------------------------------------------------
def _erf_poly(x, recip):
    # Abramowitz-Stegun 7.1.26 rational approximation (|err| ~ 1e-7).
    a1, a2, a3, a4, a5 = (0.254829592, -0.284496736, 1.421413741,
                          -1.453152027, 1.061405429)
    p = 0.3275911
    s = jnp.where(x >= 0.0, 1.0, -1.0)
    z = jnp.abs(x)
    t = recip(1.0 + p * z)
    poly = ((((a5 * t + a4) * t + a3) * t + a2) * t + a1) * t
    return s * (1.0 - poly * jnp.exp(-z * z))


def _gelu_in_kernel(x):
    # exact (erf-based) GELU; reciprocal goes to the EUP slot (approx vrcp).
    return 0.5 * x * (1.0 + _erf_poly(x * 0.7071067811865476,
                                      lambda v: pl.reciprocal(v, approx=True)))


def _groupnorm_cf(a, gamma, beta, mask, maskT, inv_cnt):
    """GroupNorm in channels-first layout.

    a: (C, HW); gamma/beta: (C, 1); mask: (C, G); maskT: (G, C).
    All matmuls are lane-dense (N = HW).
    """
    G = maskT.shape[0]
    HW = a.shape[1]
    gsum = jnp.sum(jnp.dot(maskT, a, preferred_element_type=jnp.float32),
                   axis=1, keepdims=True)                          # (G, 1)
    mean_g = gsum * inv_cnt
    mean_full = jnp.dot(mask, jnp.broadcast_to(mean_g, (G, HW)),
                        preferred_element_type=jnp.float32)        # (C, HW)
    d = a - mean_full
    gss = jnp.sum(jnp.dot(maskT, d * d, preferred_element_type=jnp.float32),
                  axis=1, keepdims=True)                           # (G, 1)
    rstd_g = jax.lax.rsqrt(gss * inv_cnt + EPS)
    rstd_full = jnp.dot(mask, jnp.broadcast_to(rstd_g, (G, HW)),
                        preferred_element_type=jnp.float32)        # (C, HW)
    return d * rstd_full * gamma + beta


# ---------------------------------------------------------------------------
# Kernel 1: modulation + ConvTranspose2d(k=2,s=2) + bias + GELU + pixel shuffle
# ---------------------------------------------------------------------------
def _convt_gelu_kernel(x_ref, r_ref, ce_ref, te_ref, wx_ref, wr_ref, b_ref,
                       s_ref, o_ref, *, CO, HWout):
    xm = x_ref[0] * ce_ref[0] + te_ref[0]          # (C1, NN)  modulation fused
    rm = r_ref[0]                                  # (C2, NN)
    acc = jnp.zeros((CO, HWout), jnp.float32)
    for tap in range(4):                           # tap = di*2 + dj
        y = (jnp.dot(wx_ref[tap], xm, preferred_element_type=jnp.float32) +
             jnp.dot(wr_ref[tap], rm, preferred_element_type=jnp.float32))
        # constant 0/1 scatter matmul writes the 2x2 sub-pixels into their
        # final lane-dense (CO, 2N*2N) positions -> no XLA pixel shuffle.
        acc = acc + jnp.dot(y, s_ref[tap], preferred_element_type=jnp.float32)
    out = _gelu_in_kernel(acc + b_ref[...])
    o_ref[...] = out.reshape(1, CO, HWout)


def convt_gelu(x, r, cemb, temb, wx, wr, bias, scat):
    B, C1, NN = x.shape
    C2 = r.shape[1]
    CO = wx.shape[1]
    HWout = scat.shape[2]
    kern = functools.partial(_convt_gelu_kernel, CO=CO, HWout=HWout)
    return pl.pallas_call(
        kern,
        grid=(B,),
        out_shape=jax.ShapeDtypeStruct((B, CO, HWout), jnp.float32),
        in_specs=[
            pl.BlockSpec((1, C1, NN), lambda b: (b, 0, 0)),
            pl.BlockSpec((1, C2, NN), lambda b: (b, 0, 0)),
            pl.BlockSpec((1, C1, 1), lambda b: (b, 0, 0)),
            pl.BlockSpec((1, C1, 1), lambda b: (b, 0, 0)),
            pl.BlockSpec((4, CO, C1), lambda b: (0, 0, 0)),
            pl.BlockSpec((4, CO, C2), lambda b: (0, 0, 0)),
            pl.BlockSpec((CO, 1), lambda b: (0, 0)),
            pl.BlockSpec((4, NN, HWout), lambda b: (0, 0, 0)),
        ],
        out_specs=pl.BlockSpec((1, CO, HWout), lambda b: (b, 0, 0)),
        compiler_params=pltpu.CompilerParams(
            dimension_semantics=("parallel",),
            vmem_limit_bytes=_VMEM_LIMIT),
    )(x, r, cemb, temb, wx, wr, bias, scat)


# ---------------------------------------------------------------------------
# Kernel 2: fully fused ResidualBlock3
#   conv3x3+GN+GELU -> conv3x3+GN+GELU -> (+residual)+GN, all in VMEM
# ---------------------------------------------------------------------------
def _resblock_kernel(x_ref, w1_ref, w2_ref, g1_ref, b1_ref, g2_ref, b2_ref,
                     g3_ref, b3_ref, mask_ref, maskT_ref, tapm_ref,
                     o_ref, col_ref, *, C, H, W, HW, inv_cnt):
    x = x_ref[0]                                   # (C, HW)

    def conv_gn_gelu(a, w_ref, gamma, beta):
        # Build im2col (9C, HW) in VMEM from shifted + edge-masked views of a.
        # shifted[k] = a[(k + delta) mod HW] via a doubled copy + static slice
        # (wrapped entries are killed by the precomputed tap masks).
        a2 = jnp.concatenate([a, a], axis=1)       # (C, 2*HW)
        for dh in range(3):
            for dw in range(3):
                tap = dh * 3 + dw
                off = ((dh - 1) * W + (dw - 1)) % HW
                shifted = a2[:, off:off + HW]
                col_ref[tap * C:(tap + 1) * C, :] = shifted * tapm_ref[tap]
        # single big MXU matmul: (C, 9C) x (9C, HW), K = 9*C
        y = jnp.dot(w_ref[...], col_ref[...], preferred_element_type=jnp.float32)
        y = _groupnorm_cf(y, gamma, beta, mask_ref[...], maskT_ref[...], inv_cnt)
        return _gelu_in_kernel(y)

    y1 = conv_gn_gelu(x, w1_ref, g1_ref[...], b1_ref[...])
    y2 = conv_gn_gelu(y1, w2_ref, g2_ref[...], b2_ref[...])
    out = _groupnorm_cf(y2 + x, g3_ref[...], b3_ref[...],
                        mask_ref[...], maskT_ref[...], inv_cnt)
    o_ref[...] = out.reshape(1, C, HW)


def residual_block(h, blk, mask, maskT, tapmask, *, H, W):
    B, C, HW = h.shape
    G = mask.shape[1]
    inv_cnt = 1.0 / float(HW * (C // G))
    kern = functools.partial(_resblock_kernel, C=C, H=H, W=W, HW=HW,
                             inv_cnt=inv_cnt)
    cvec = pl.BlockSpec((C, 1), lambda b: (0, 0))
    return pl.pallas_call(
        kern,
        grid=(B,),
        out_shape=jax.ShapeDtypeStruct((B, C, HW), jnp.float32),
        in_specs=[
            pl.BlockSpec((1, C, HW), lambda b: (b, 0, 0)),
            pl.BlockSpec((C, 9 * C), lambda b: (0, 0)),
            pl.BlockSpec((C, 9 * C), lambda b: (0, 0)),
            cvec, cvec, cvec, cvec, cvec, cvec,
            pl.BlockSpec((C, G), lambda b: (0, 0)),
            pl.BlockSpec((G, C), lambda b: (0, 0)),
            pl.BlockSpec((9, 1, HW), lambda b: (0, 0, 0)),
        ],
        out_specs=pl.BlockSpec((1, C, HW), lambda b: (b, 0, 0)),
        scratch_shapes=[pltpu.VMEM((9 * C, HW), jnp.float32)],
        compiler_params=pltpu.CompilerParams(
            dimension_semantics=("parallel",),
            vmem_limit_bytes=_VMEM_LIMIT),
    )(h, blk["w1"], blk["w2"], blk["g1"], blk["b1"], blk["g2"], blk["b2"],
      blk["g3"], blk["b3"], mask, maskT, tapmask)


# ---------------------------------------------------------------------------
# plain-JAX glue: LinearEmbedding MLP (tiny B x few-channel matmuls)
# ---------------------------------------------------------------------------
def _layernorm(x, g, b):
    m = jnp.mean(x, axis=-1, keepdims=True)
    v = jnp.mean(jnp.square(x - m), axis=-1, keepdims=True)
    return (x - m) * jax.lax.rsqrt(v + EPS) * g + b


def linear_embedding_apply(p, x):
    h = x @ p["w1"]
    h = jax.nn.gelu(_layernorm(h, p["ln1_g"], p["ln1_b"]), approximate=False)
    h = h @ p["w2"]
    h = jax.nn.gelu(_layernorm(h, p["ln2_g"], p["ln2_b"]), approximate=False)
    return h @ p["w3"] + p["b3"]


# ---------------------------------------------------------------------------
# full UNetUpsample forward (all reshapes below are metadata-only)
# ---------------------------------------------------------------------------
def unet_upsample_forward(params, x_nchw, times, class_onehot, residual_nchw):
    B, C1, N, _ = x_nchw.shape
    x = x_nchw.reshape(B, C1, N * N)                           # (B, C1, NN)
    r = residual_nchw.reshape(B, residual_nchw.shape[1], N * N)

    t_emb = linear_embedding_apply(params["time"], times.reshape(-1, 1))
    c_emb = linear_embedding_apply(params["cls"], class_onehot)

    # modulation + concat + ConvTranspose2d + bias + GELU + pixel shuffle
    h = convt_gelu(x, r, c_emb[..., None], t_emb[..., None],
                   params["convT_wx"], params["convT_wr"],
                   params["convT_b"], params["scatter"])       # (B, CO, (2N)^2)

    H = 2 * N
    for blk in params["blocks"]:                               # 3x ResidualBlock3
        h = residual_block(h, blk, params["mask"], params["maskT"],
                           params["tapmask"], H=H, W=H)

    CO = h.shape[1]
    return h.reshape(B, CO, H, H)                              # NCHW, free


# ---------------------------------------------------------------------------
# deterministic synthetic parameter / constant init
# ---------------------------------------------------------------------------
def init_params(key, C1, C2, CO, num_classes, N, num_post_residuals=3,
                groups=16):
    keys = iter(jax.random.split(key, 64))

    def nrm(shape, scale):
        return scale * jax.random.normal(next(keys), shape, dtype=jnp.float32)

    def lin_emb(in_f, out_f):
        return dict(
            w1=nrm((in_f, out_f), 0.3),
            ln1_g=1.0 + nrm((out_f,), 0.05), ln1_b=nrm((out_f,), 0.05),
            w2=nrm((out_f, out_f), 0.3),
            ln2_g=1.0 + nrm((out_f,), 0.05), ln2_b=nrm((out_f,), 0.05),
            w3=nrm((out_f, out_f), 0.3), b3=nrm((out_f,), 0.05),
        )

    Cin = C1 + C2
    cg = CO // groups
    H = 2 * N
    NN, HWout = N * N, H * H

    # GroupNorm channel<->group one-hot masks (channels-first orientation)
    mask = (jnp.arange(CO)[:, None] // cg
            == jnp.arange(groups)[None, :]).astype(jnp.float32)   # (CO, G)

    # ConvTranspose2d weight in PyTorch layout (Cin, CO, 2, 2) -> per-tap
    wt = nrm((Cin, CO, 2, 2), 0.2)
    wt_tap = jnp.transpose(wt, (2, 3, 1, 0)).reshape(4, CO, Cin)  # [tap, co, ci]
    convT_wx = wt_tap[:, :, :C1]
    convT_wr = wt_tap[:, :, C1:]

    # pixel-shuffle scatter matrices: S[tap, i*N+j, (2i+di)*2N + 2j+dj] = 1
    ii = jnp.repeat(jnp.arange(N), N)
    jj = jnp.tile(jnp.arange(N), N)
    scat = jnp.zeros((4, NN, HWout), jnp.float32)
    for di in range(2):
        for dj in range(2):
            l = (2 * ii + di) * H + (2 * jj + dj)
            scat = scat.at[di * 2 + dj, jnp.arange(NN), l].set(1.0)

    # 3x3 'same' conv halo-validity masks per tap on the (H, H) output grid
    hh = jnp.repeat(jnp.arange(H), H)
    ww = jnp.tile(jnp.arange(H), H)
    taps = []
    for dh in range(3):
        for dw in range(3):
            valid = ((hh + dh - 1 >= 0) & (hh + dh - 1 < H) &
                     (ww + dw - 1 >= 0) & (ww + dw - 1 < H))
            taps.append(valid.astype(jnp.float32).reshape(1, HWout))
    tapmask = jnp.stack(taps, axis=0)                             # (9, 1, H*H)

    params = dict(
        time=lin_emb(1, C1),
        cls=lin_emb(num_classes, C1),
        convT_wx=convT_wx, convT_wr=convT_wr,
        convT_b=nrm((CO,), 0.05).reshape(CO, 1),
        scatter=scat,
        mask=mask, maskT=mask.T,
        tapmask=tapmask,
        blocks=[],
    )
    for _ in range(num_post_residuals):
        # PyTorch Conv2d layout (out, in, 3, 3) -> (out, tap*in), tap = dh*3+dw
        w1 = nrm((CO, CO, 3, 3), 0.1)
        w2 = nrm((CO, CO, 3, 3), 0.1)
        params["blocks"].append(dict(
            w1=jnp.transpose(w1, (0, 2, 3, 1)).reshape(CO, 9 * CO),
            w2=jnp.transpose(w2, (0, 2, 3, 1)).reshape(CO, 9 * CO),
            g1=(1.0 + nrm((CO,), 0.05)).reshape(CO, 1),
            b1=nrm((CO,), 0.05).reshape(CO, 1),
            g2=(1.0 + nrm((CO,), 0.05)).reshape(CO, 1),
            b2=nrm((CO,), 0.05).reshape(CO, 1),
            g3=(1.0 + nrm((CO,), 0.05)).reshape(CO, 1),
            b3=nrm((CO,), 0.05).reshape(CO, 1),
        ))
    return params


if __name__ == "__main__":
    # out_channels must be a multiple of 16 (GroupNorm num_groups=16)
    B, C1, C2, CO, N, NUM_CLASSES = 2, 4, 4, 16, 8, 10

    key = jax.random.PRNGKey(0)
    kx, kr, kc, kp = jax.random.split(key, 4)
    x = jax.random.normal(kx, (B, C1, N, N), dtype=jnp.float32)
    residual = jax.random.normal(kr, (B, C2, N, N), dtype=jnp.float32)
    times = jnp.array([3.0, 7.0], dtype=jnp.float32)               # (B,)
    labels = jax.random.randint(kc, (B,), 0, NUM_CLASSES)
    # classEncoder is Linear(numClasses -> C1), so labels are fed one-hot
    class_onehot = jax.nn.one_hot(labels, NUM_CLASSES, dtype=jnp.float32)

    params = init_params(kp, C1, C2, CO, NUM_CLASSES, N)

    fwd = jax.jit(unet_upsample_forward)
    out = jax.block_until_ready(fwd(params, x, times, class_onehot, residual))

    assert out.shape == (B, CO, 2 * N, 2 * N), out.shape
    assert bool(jnp.all(jnp.isfinite(out)))
    print("KERNEL_OK")
</pallas_src>

<mosaic_0001>
module attributes {stable_mosaic.version = 11 : i64} {
  func.func @_convt_gelu_kernel(%arg0: i32, %arg1: memref<1x4x64xf32, #tpu.memory_space<vmem>>, %arg2: memref<1x4x64xf32, #tpu.memory_space<vmem>>, %arg3: memref<1x4x1xf32, #tpu.memory_space<vmem>>, %arg4: memref<1x4x1xf32, #tpu.memory_space<vmem>>, %arg5: memref<4x16x4xf32, #tpu.memory_space<vmem>>, %arg6: memref<4x16x4xf32, #tpu.memory_space<vmem>>, %arg7: memref<16x1xf32, #tpu.memory_space<vmem>>, %arg8: memref<4x64x256xf32, #tpu.memory_space<vmem>>, %arg9: memref<1x16x256xf32, #tpu.memory_space<vmem>>) attributes {dimension_semantics = [#tpu.dimension_semantics<parallel>], iteration_bounds = array<i64: 2>, scalar_prefetch = 0 : i64, scratch_operands = 0 : i64, tpu.core_type = #tpu.core_type<tc>, window_params = [{transform_indices = @transform_0, window_bounds = array<i64: 1, 4, 64>}, {transform_indices = @transform_1, window_bounds = array<i64: 1, 4, 64>}, {transform_indices = @transform_2, window_bounds = array<i64: 1, 4, 1>}, {transform_indices = @transform_3, window_bounds = array<i64: 1, 4, 1>}, {pipeline_mode = #tpu.pipeline_mode<synchronous>, transform_indices = @transform_4, window_bounds = array<i64: 4, 16, 4>}, {pipeline_mode = #tpu.pipeline_mode<synchronous>, transform_indices = @transform_5, window_bounds = array<i64: 4, 16, 4>}, {pipeline_mode = #tpu.pipeline_mode<synchronous>, transform_indices = @transform_6, window_bounds = array<i64: 16, 1>}, {pipeline_mode = #tpu.pipeline_mode<synchronous>, transform_indices = @transform_7, window_bounds = array<i64: 4, 64, 256>}, {transform_indices = @transform_8, window_bounds = array<i64: 1, 16, 256>}]} {
    %c0 = arith.constant 0 : index
    %c0_0 = arith.constant 0 : index
    %c0_1 = arith.constant 0 : index
    %0 = vector.load %arg1[%c0, %c0_0, %c0_1] : memref<1x4x64xf32, #tpu.memory_space<vmem>>, vector<1x4x64xf32>
    %1 = vector.shape_cast %0 : vector<1x4x64xf32> to vector<4x64xf32>
    %c0_2 = arith.constant 0 : index
    %c0_3 = arith.constant 0 : index
    %c0_4 = arith.constant 0 : index
    %2 = vector.load %arg3[%c0_2, %c0_3, %c0_4] : memref<1x4x1xf32, #tpu.memory_space<vmem>>, vector<1x4x1xf32>
    %3 = vector.shape_cast %2 : vector<1x4x1xf32> to vector<4x1xf32>
    %4 = vector.broadcast %3 : vector<4x1xf32> to vector<4x64xf32>
    %5 = arith.mulf %1, %4 : vector<4x64xf32>
    %c0_5 = arith.constant 0 : index
    %c0_6 = arith.constant 0 : index
    %c0_7 = arith.constant 0 : index
    %6 = vector.load %arg4[%c0_5, %c0_6, %c0_7] : memref<1x4x1xf32, #tpu.memory_space<vmem>>, vector<1x4x1xf32>
    %7 = vector.shape_cast %6 : vector<1x4x1xf32> to vector<4x1xf32>
    %8 = vector.broadcast %7 : vector<4x1xf32> to vector<4x64xf32>
    %9 = arith.addf %5, %8 : vector<4x64xf32>
    %c0_8 = arith.constant 0 : index
    %c0_9 = arith.constant 0 : index
    %c0_10 = arith.constant 0 : index
    %10 = vector.load %arg2[%c0_8, %c0_9, %c0_10] : memref<1x4x64xf32, #tpu.memory_space<vmem>>, vector<1x4x64xf32>
    %11 = vector.shape_cast %10 : vector<1x4x64xf32> to vector<4x64xf32>
    %cst = arith.constant 0.000000e+00 : f32
    %12 = vector.broadcast %cst : f32 to vector<16x256xf32>
    %c0_11 = arith.constant 0 : index
    %c0_12 = arith.constant 0 : index
    %c0_13 = arith.constant 0 : index
    %13 = vector.load %arg5[%c0_11, %c0_12, %c0_13] : memref<4x16x4xf32, #tpu.memory_space<vmem>>, vector<1x16x4xf32>
    %14 = vector.shape_cast %13 : vector<1x16x4xf32> to vector<16x4xf32>
    %cst_14 = arith.constant dense<0.000000e+00> : vector<16x64xf32>
    %15 = tpu.matmul %14, %9, %cst_14 {dimension_numbers = #tpu.dot_dimension_numbers<[1], [0], [0], [1], [0, 0, 1, 1], [], []>} : vector<16x4xf32>, vector<4x64xf32>, vector<16x64xf32> -> vector<16x64xf32>
    %c0_15 = arith.constant 0 : index
    %c0_16 = arith.constant 0 : index
    %c0_17 = arith.constant 0 : index
    %16 = vector.load %arg6[%c0_15, %c0_16, %c0_17] : memref<4x16x4xf32, #tpu.memory_space<vmem>>, vector<1x16x4xf32>
    %17 = vector.shape_cast %16 : vector<1x16x4xf32> to vector<16x4xf32>
    %cst_18 = arith.constant dense<0.000000e+00> : vector<16x64xf32>
    %18 = tpu.matmul %17, %11, %cst_18 {dimension_numbers = #tpu.dot_dimension_numbers<[1], [0], [0], [1], [0, 0, 1, 1], [], []>} : vector<16x4xf32>, vector<4x64xf32>, vector<16x64xf32> -> vector<16x64xf32>
    %19 = arith.addf %15, %18 : vector<16x64xf32>
    %c0_19 = arith.constant 0 : index
    %c0_20 = arith.constant 0 : index
    %c0_21 = arith.constant 0 : index
    %20 = vector.load %arg8[%c0_19, %c0_20, %c0_21] : memref<4x64x256xf32, #tpu.memory_space<vmem>>, vector<1x64x256xf32>
    %21 = vector.shape_cast %20 : vector<1x64x256xf32> to vector<64x256xf32>
    %cst_22 = arith.constant dense<0.000000e+00> : vector<16x256xf32>
    %22 = tpu.matmul %19, %21, %cst_22 {dimension_numbers = #tpu.dot_dimension_numbers<[1], [0], [0], [1], [0, 0, 1, 1], [], []>} : vector<16x64xf32>, vector<64x256xf32>, vector<16x256xf32> -> vector<16x256xf32>
    %23 = arith.addf %12, %22 : vector<16x256xf32>
    %c1 = arith.constant 1 : index
    %c0_23 = arith.constant 0 : index
    %c0_24 = arith.constant 0 : index
    %24 = vector.load %arg5[%c1, %c0_23, %c0_24] : memref<4x16x4xf32, #tpu.memory_space<vmem>>, vector<1x16x4xf32>
    %25 = vector.shape_cast %24 : vector<1x16x4xf32> to vector<16x4xf32>
    %cst_25 = arith.constant dense<0.000000e+00> : vector<16x64xf32>
    %26 = tpu.matmul %25, %9, %cst_25 {dimension_numbers = #tpu.dot_dimension_numbers<[1], [0], [0], [1], [0, 0, 1, 1], [], []>} : vector<16x4xf32>, vector<4x64xf32>, vector<16x64xf32> -> vector<16x64xf32>
    %c1_26 = arith.constant 1 : index
    %c0_27 = arith.constant 0 : index
    %c0_28 = arith.constant 0 : index
    %27 = vector.load %arg6[%c1_26, %c0_27, %c0_28] : memref<4x16x4xf32, #tpu.memory_space<vmem>>, vector<1x16x4xf32>
    %28 = vector.shape_cast %27 : vector<1x16x4xf32> to vector<16x4xf32>
    %cst_29 = arith.constant dense<0.000000e+00> : vector<16x64xf32>
    %29 = tpu.matmul %28, %11, %cst_29 {dimension_numbers = #tpu.dot_dimension_numbers<[1], [0], [0], [1], [0, 0, 1, 1], [], []>} : vector<16x4xf32>, vector<4x64xf32>, vector<16x64xf32> -> vector<16x64xf32>
    %30 = arith.addf %26, %29 : vector<16x64xf32>
    %c1_30 = arith.constant 1 : index
    %c0_31 = arith.constant 0 : index
    %c0_32 = arith.constant 0 : index
    %31 = vector.load %arg8[%c1_30, %c0_31, %c0_32] : memref<4x64x256xf32, #tpu.memory_space<vmem>>, vector<1x64x256xf32>
    %32 = vector.shape_cast %31 : vector<1x64x256xf32> to vector<64x256xf32>
    %cst_33 = arith.constant dense<0.000000e+00> : vector<16x256xf32>
    %33 = tpu.matmul %30, %32, %cst_33 {dimension_numbers = #tpu.dot_dimension_numbers<[1], [0], [0], [1], [0, 0, 1, 1], [], []>} : vector<16x64xf32>, vector<64x256xf32>, vector<16x256xf32> -> vector<16x256xf32>
    %34 = arith.addf %23, %33 : vector<16x256xf32>
    %c2 = arith.constant 2 : index
    %c0_34 = arith.constant 0 : index
    %c0_35 = arith.constant 0 : index
    %35 = vector.load %arg5[%c2, %c0_34, %c0_35] : memref<4x16x4xf32, #tpu.memory_space<vmem>>, vector<1x16x4xf32>
    %36 = vector.shape_cast %35 : vector<1x16x4xf32> to vector<16x4xf32>
    %cst_36 = arith.constant dense<0.000000e+00> : vector<16x64xf32>
    %37 = tpu.matmul %36, %9, %cst_36 {dimension_numbers = #tpu.dot_dimension_numbers<[1], [0], [0], [1], [0, 0, 1, 1], [], []>} : vector<16x4xf32>, vector<4x64xf32>, vector<16x64xf32> -> vector<16x64xf32>
    %c2_37 = arith.constant 2 : index
    %c0_38 = arith.constant 0 : index
    %c0_39 = arith.constant 0 : index
    %38 = vector.load %arg6[%c2_37, %c0_38, %c0_39] : memref<4x16x4xf32, #tpu.memory_space<vmem>>, vector<1x16x4xf32>
    %39 = vector.shape_cast %38 : vector<1x16x4xf32> to vector<16x4xf32>
    %cst_40 = arith.constant dense<0.000000e+00> : vector<16x64xf32>
    %40 = tpu.matmul %39, %11, %cst_40 {dimension_numbers = #tpu.dot_dimension_numbers<[1], [0], [0], [1], [0, 0, 1, 1], [], []>} : vector<16x4xf32>, vector<4x64xf32>, vector<16x64xf32> -> vector<16x64xf32>
    %41 = arith.addf %37, %40 : vector<16x64xf32>
    %c2_41 = arith.constant 2 : index
    %c0_42 = arith.constant 0 : index
    %c0_43 = arith.constant 0 : index
    %42 = vector.load %arg8[%c2_41, %c0_42, %c0_43] : memref<4x64x256xf32, #tpu.memory_space<vmem>>, vector<1x64x256xf32>
    %43 = vector.shape_cast %42 : vector<1x64x256xf32> to vector<64x256xf32>
    %cst_44 = arith.constant dense<0.000000e+00> : vector<16x256xf32>
    %44 = tpu.matmul %41, %43, %cst_44 {dimension_numbers = #tpu.dot_dimension_numbers<[1], [0], [0], [1], [0, 0, 1, 1], [], []>} : vector<16x64xf32>, vector<64x256xf32>, vector<16x256xf32> -> vector<16x256xf32>
    %45 = arith.addf %34, %44 : vector<16x256xf32>
    %c3 = arith.constant 3 : index
    %c0_45 = arith.constant 0 : index
    %c0_46 = arith.constant 0 : index
    %46 = vector.load %arg5[%c3, %c0_45, %c0_46] : memref<4x16x4xf32, #tpu.memory_space<vmem>>, vector<1x16x4xf32>
    %47 = vector.shape_cast %46 : vector<1x16x4xf32> to vector<16x4xf32>
    %cst_47 = arith.constant dense<0.000000e+00> : vector<16x64xf32>
    %48 = tpu.matmul %47, %9, %cst_47 {dimension_numbers = #tpu.dot_dimension_numbers<[1], [0], [0], [1], [0, 0, 1, 1], [], []>} : vector<16x4xf32>, vector<4x64xf32>, vector<16x64xf32> -> vector<16x64xf32>
    %c3_48 = arith.constant 3 : index
    %c0_49 = arith.constant 0 : index
    %c0_50 = arith.constant 0 : index
    %49 = vector.load %arg6[%c3_48, %c0_49, %c0_50] : memref<4x16x4xf32, #tpu.memory_space<vmem>>, vector<1x16x4xf32>
    %50 = vector.shape_cast %49 : vector<1x16x4xf32> to vector<16x4xf32>
    %cst_51 = arith.constant dense<0.000000e+00> : vector<16x64xf32>
    %51 = tpu.matmul %50, %11, %cst_51 {dimension_numbers = #tpu.dot_dimension_numbers<[1], [0], [0], [1], [0, 0, 1, 1], [], []>} : vector<16x4xf32>, vector<4x64xf32>, vector<16x64xf32> -> vector<16x64xf32>
    %52 = arith.addf %48, %51 : vector<16x64xf32>
    %c3_52 = arith.constant 3 : index
    %c0_53 = arith.constant 0 : index
    %c0_54 = arith.constant 0 : index
    %53 = vector.load %arg8[%c3_52, %c0_53, %c0_54] : memref<4x64x256xf32, #tpu.memory_space<vmem>>, vector<1x64x256xf32>
    %54 = vector.shape_cast %53 : vector<1x64x256xf32> to vector<64x256xf32>
    %cst_55 = arith.constant dense<0.000000e+00> : vector<16x256xf32>
    %55 = tpu.matmul %52, %54, %cst_55 {dimension_numbers = #tpu.dot_dimension_numbers<[1], [0], [0], [1], [0, 0, 1, 1], [], []>} : vector<16x64xf32>, vector<64x256xf32>, vector<16x256xf32> -> vector<16x256xf32>
    %56 = arith.addf %45, %55 : vector<16x256xf32>
    %c0_56 = arith.constant 0 : index
    %c0_57 = arith.constant 0 : index
    %57 = vector.load %arg7[%c0_56, %c0_57] : memref<16x1xf32, #tpu.memory_space<vmem>>, vector<16x1xf32>
    %58 = vector.broadcast %57 : vector<16x1xf32> to vector<16x256xf32>
    %59 = arith.addf %56, %58 : vector<16x256xf32>
    %cst_58 = arith.constant 5.000000e-01 : f32
    %60 = vector.broadcast %cst_58 : f32 to vector<16x256xf32>
    %61 = arith.mulf %60, %59 : vector<16x256xf32>
    %cst_59 = arith.constant 0.707106769 : f32
    %62 = vector.broadcast %cst_59 : f32 to vector<16x256xf32>
    %63 = arith.mulf %59, %62 : vector<16x256xf32>
    %cst_60 = arith.constant 0.000000e+00 : f32
    %64 = vector.broadcast %cst_60 : f32 to vector<16x256xf32>
    %65 = arith.cmpf oge, %63, %64 : vector<16x256xf32>
    %cst_61 = arith.constant 1.000000e+00 : f32
    %cst_62 = arith.constant -1.000000e+00 : f32
    %66 = vector.broadcast %cst_61 : f32 to vector<16x256xf32>
    %67 = vector.broadcast %cst_62 : f32 to vector<16x256xf32>
    %68 = arith.select %65, %66, %67 : vector<16x256xi1>, vector<16x256xf32>
    %69 = math.absf %63 : vector<16x256xf32>
    %cst_63 = arith.constant 0.327591091 : f32
    %70 = vector.broadcast %cst_63 : f32 to vector<16x256xf32>
    %71 = arith.mulf %70, %69 : vector<16x256xf32>
    %cst_64 = arith.constant 1.000000e+00 : f32
    %72 = vector.broadcast %cst_64 : f32 to vector<16x256xf32>
    %73 = arith.addf %72, %71 : vector<16x256xf32>
    %74 = tpu.reciprocal %73 {approx = true} : vector<16x256xf32> -> vector<16x256xf32>
    %cst_65 = arith.constant 1.06140542 : f32
    %75 = vector.broadcast %cst_65 : f32 to vector<16x256xf32>
    %76 = arith.mulf %75, %74 : vector<16x256xf32>
    %cst_66 = arith.constant -1.45315206 : f32
    %77 = vector.broadcast %cst_66 : f32 to vector<16x256xf32>
    %78 = arith.addf %76, %77 : vector<16x256xf32>
    %79 = arith.mulf %78, %74 : vector<16x256xf32>
    %cst_67 = arith.constant 1.42141378 : f32
    %80 = vector.broadcast %cst_67 : f32 to vector<16x256xf32>
    %81 = arith.addf %79, %80 : vector<16x256xf32>
    %82 = arith.mulf %81, %74 : vector<16x256xf32>
    %cst_68 = arith.constant -0.284496725 : f32
    %83 = vector.broadcast %cst_68 : f32 to vector<16x256xf32>
    %84 = arith.addf %82, %83 : vector<16x256xf32>
    %85 = arith.mulf %84, %74 : vector<16x256xf32>
    %cst_69 = arith.constant 0.254829586 : f32
    %86 = vector.broadcast %cst_69 : f32 to vector<16x256xf32>
    %87 = arith.addf %85, %86 : vector<16x256xf32>
    %88 = arith.mulf %87, %74 : vector<16x256xf32>
    %cst_70 = arith.constant 0.000000e+00 : f32
    %89 = vector.broadcast %cst_70 : f32 to vector<16x256xf32>
    %90 = arith.subf %89, %69 : vector<16x256xf32>
    %91 = arith.mulf %90, %69 : vector<16x256xf32>
    %92 = math.exp %91 : vector<16x256xf32>
    %93 = arith.mulf %88, %92 : vector<16x256xf32>
    %cst_71 = arith.constant 1.000000e+00 : f32
    %94 = vector.broadcast %cst_71 : f32 to vector<16x256xf32>
    %95 = arith.subf %94, %93 : vector<16x256xf32>
    %96 = arith.mulf %68, %95 : vector<16x256xf32>
    %cst_72 = arith.constant 1.000000e+00 : f32
    %97 = vector.broadcast %cst_72 : f32 to vector<16x256xf32>
    %98 = arith.addf %97, %96 : vector<16x256xf32>
    %99 = arith.mulf %61, %98 : vector<16x256xf32>
    %100 = vector.shape_cast %99 : vector<16x256xf32> to vector<1x16x256xf32>
    %c0_73 = arith.constant 0 : index
    %c0_74 = arith.constant 0 : index
    %c0_75 = arith.constant 0 : index
    %101 = vector.load %arg9[%c0_73, %c0_74, %c0_75] : memref<1x16x256xf32, #tpu.memory_space<vmem>>, vector<1x16x256xf32>
    tpu.vector_store %arg9[%c0_73, %c0_74, %c0_75], %100 {strides = array<i32>} : memref<1x16x256xf32, #tpu.memory_space<vmem>>, vector<1x16x256xf32>,
    return
  }
  func.func @transform_0(%arg0: i32) -> (i32, i32, i32) {
    %c0_i32 = arith.constant 0 : i32
    %c0_i32_0 = arith.constant 0 : i32
    %c0_i32_1 = arith.constant 0 : i32
    return %arg0, %c0_i32, %c0_i32_0 : i32, i32, i32
  }
  func.func @transform_1(%arg0: i32) -> (i32, i32, i32) {
    %c0_i32 = arith.constant 0 : i32
    %c0_i32_0 = arith.constant 0 : i32
    %c0_i32_1 = arith.constant 0 : i32
    return %arg0, %c0_i32, %c0_i32_0 : i32, i32, i32
  }
  func.func @transform_2(%arg0: i32) -> (i32, i32, i32) {
    %c0_i32 = arith.constant 0 : i32
    %c0_i32_0 = arith.constant 0 : i32
    %c0_i32_1 = arith.constant 0 : i32
    return %arg0, %c0_i32, %c0_i32_0 : i32, i32, i32
  }
  func.func @transform_3(%arg0: i32) -> (i32, i32, i32) {
    %c0_i32 = arith.constant 0 : i32
    %c0_i32_0 = arith.constant 0 : i32
    %c0_i32_1 = arith.constant 0 : i32
    return %arg0, %c0_i32, %c0_i32_0 : i32, i32, i32
  }
  func.func @transform_4(%arg0: i32) -> (i32, i32, i32) {
    %c0_i32 = arith.constant 0 : i32
    %c0_i32_0 = arith.constant 0 : i32
    %c0_i32_1 = arith.constant 0 : i32
    %c0_i32_2 = arith.constant 0 : i32
    return %c0_i32, %c0_i32_0, %c0_i32_1 : i32, i32, i32
  }
  func.func @transform_5(%arg0: i32) -> (i32, i32, i32) {
    %c0_i32 = arith.constant 0 : i32
    %c0_i32_0 = arith.constant 0 : i32
    %c0_i32_1 = arith.constant 0 : i32
    %c0_i32_2 = arith.constant 0 : i32
    return %c0_i32, %c0_i32_0, %c0_i32_1 : i32, i32, i32
  }
  func.func @transform_6(%arg0: i32) -> (i32, i32) {
    %c0_i32 = arith.constant 0 : i32
    %c0_i32_0 = arith.constant 0 : i32
    %c0_i32_1 = arith.constant 0 : i32
    return %c0_i32, %c0_i32_0 : i32, i32
  }
  func.func @transform_7(%arg0: i32) -> (i32, i32, i32) {
    %c0_i32 = arith.constant 0 : i32
    %c0_i32_0 = arith.constant 0 : i32
    %c0_i32_1 = arith.constant 0 : i32
    %c0_i32_2 = arith.constant 0 : i32
    return %c0_i32, %c0_i32_0, %c0_i32_1 : i32, i32, i32
  }
  func.func @transform_8(%arg0: i32) -> (i32, i32, i32) {
    %c0_i32 = arith.constant 0 : i32
    %c0_i32_0 = arith.constant 0 : i32
    %c0_i32_1 = arith.constant 0 : i32
    return %arg0, %c0_i32, %c0_i32_0 : i32, i32, i32
  }
}

module attributes {stable_mosaic.version = 11 : i64} {
  func.func @_resblock_kernel(%arg0: i32, %arg1: memref<1x16x256xf32, #tpu.memory_space<vmem>>, %arg2: memref<16x144xf32, #tpu.memory_space<vmem>>, %arg3: memref<16x144xf32, #tpu.memory_space<vmem>>, %arg4: memref<16x1xf32, #tpu.memory_space<vmem>>, %arg5: memref<16x1xf32, #tpu.memory_space<vmem>>, %arg6: memref<16x1xf32, #tpu.memory_space<vmem>>, %arg7: memref<16x1xf32, #tpu.memory_space<vmem>>, %arg8: memref<16x1xf32, #tpu.memory_space<vmem>>, %arg9: memref<16x1xf32, #tpu.memory_space<vmem>>, %arg10: memref<16x16xf32, #tpu.memory_space<vmem>>, %arg11: memref<16x16xf32, #tpu.memory_space<vmem>>, %arg12: memref<9x1x256xf32, #tpu.memory_space<vmem>>, %arg13: memref<1x16x256xf32, #tpu.memory_space<vmem>>, %arg14: memref<144x256xf32, #tpu.memory_space<vmem>>) attributes {dimension_semantics = [#tpu.dimension_semantics<parallel>], iteration_bounds = array<i64: 2>, scalar_prefetch = 0 : i64, scratch_operands = 1 : i64, tpu.core_type = #tpu.core_type<tc>, window_params = [{transform_indices = @transform_0, window_bounds = array<i64: 1, 16, 256>}, {pipeline_mode = #tpu.pipeline_mode<synchronous>, transform_indices = @transform_1, window_bounds = array<i64: 16, 144>}, {pipeline_mode = #tpu.pipeline_mode<synchronous>, transform_indices = @transform_2, window_bounds = array<i64: 16, 144>}, {pipeline_mode = #tpu.pipeline_mode<synchronous>, transform_indices = @transform_3, window_bounds = array<i64: 16, 1>}, {pipeline_mode = #tpu.pipeline_mode<synchronous>, transform_indices = @transform_4, window_bounds = array<i64: 16, 1>}, {pipeline_mode = #tpu.pipeline_mode<synchronous>, transform_indices = @transform_5, window_bounds = array<i64: 16, 1>}, {pipeline_mode = #tpu.pipeline_mode<synchronous>, transform_indices = @transform_6, window_bounds = array<i64: 16, 1>}, {pipeline_mode = #tpu.pipeline_mode<synchronous>, transform_indices = @transform_7, window_bounds = array<i64: 16, 1>}, {pipeline_mode = #tpu.pipeline_mode<synchronous>, transform_indices = @transform_8, window_bounds = array<i64: 16, 1>}, {pipeline_mode = #tpu.pipeline_mode<synchronous>, transform_indices = @transform_9, window_bounds = array<i64: 16, 16>}, {pipeline_mode = #tpu.pipeline_mode<synchronous>, transform_indices = @transform_10, window_bounds = array<i64: 16, 16>}, {pipeline_mode = #tpu.pipeline_mode<synchronous>, transform_indices = @transform_11, window_bounds = array<i64: 9, 1, 256>}, {transform_indices = @transform_12, window_bounds = array<i64: 1, 16, 256>}]} {
    %c0 = arith.constant 0 : index
    %c0_0 = arith.constant 0 : index
    %c0_1 = arith.constant 0 : index
    %0 = vector.load %arg1[%c0, %c0_0, %c0_1] : memref<1x16x256xf32, #tpu.memory_space<vmem>>, vector<1x16x256xf32>
    %1 = vector.shape_cast %0 : vector<1x16x256xf32> to vector<16x256xf32>
    %c0_2 = arith.constant 0 : index
    %c0_3 = arith.constant 0 : index
    %2 = vector.load %arg4[%c0_2, %c0_3] : memref<16x1xf32, #tpu.memory_space<vmem>>, vector<16x1xf32>
    %c0_4 = arith.constant 0 : index
    %c0_5 = arith.constant 0 : index
    %3 = vector.load %arg5[%c0_4, %c0_5] : memref<16x1xf32, #tpu.memory_space<vmem>>, vector<16x1xf32>
    %4 = tpu.concatenate %1, %1 in 1 : vector<16x256xf32>, vector<16x256xf32> -> vector<16x512xf32>
    %5 = vector.extract_strided_slice %4 {offsets = [0, 239], sizes = [16, 256], strides = [1, 1]} : vector<16x512xf32> to vector<16x256xf32>
    %c0_6 = arith.constant 0 : index
    %c0_7 = arith.constant 0 : index
    %c0_8 = arith.constant 0 : index
    %6 = vector.load %arg12[%c0_6, %c0_7, %c0_8] : memref<9x1x256xf32, #tpu.memory_space<vmem>>, vector<1x1x256xf32>
    %7 = vector.shape_cast %6 : vector<1x1x256xf32> to vector<1x256xf32>
    %8 = vector.broadcast %7 : vector<1x256xf32> to vector<16x256xf32>
    %9 = arith.mulf %5, %8 : vector<16x256xf32>
    %c0_9 = arith.constant 0 : index
    %c0_10 = arith.constant 0 : index
    %10 = vector.load %arg14[%c0_9, %c0_10] : memref<144x256xf32, #tpu.memory_space<vmem>>, vector<16x256xf32>
    tpu.vector_store %arg14[%c0_9, %c0_10], %9 {strides = array<i32>} : memref<144x256xf32, #tpu.memory_space<vmem>>, vector<16x256xf32>,
    %11 = vector.extract_strided_slice %4 {offsets = [0, 240], sizes = [16, 256], strides = [1, 1]} : vector<16x512xf32> to vector<16x256xf32>
    %c1 = arith.constant 1 : index
    %c0_11 = arith.constant 0 : index
    %c0_12 = arith.constant 0 : index
    %12 = vector.load %arg12[%c1, %c0_11, %c0_12] : memref<9x1x256xf32, #tpu.memory_space<vmem>>, vector<1x1x256xf32>
    %13 = vector.shape_cast %12 : vector<1x1x256xf32> to vector<1x256xf32>
    %14 = vector.broadcast %13 : vector<1x256xf32> to vector<16x256xf32>
    %15 = arith.mulf %11, %14 : vector<16x256xf32>
    %c16 = arith.constant 16 : index
    %c0_13 = arith.constant 0 : index
    %16 = vector.load %arg14[%c16, %c0_13] : memref<144x256xf32, #tpu.memory_space<vmem>>, vector<16x256xf32>
    tpu.vector_store %arg14[%c16, %c0_13], %15 {strides = array<i32>} : memref<144x256xf32, #tpu.memory_space<vmem>>, vector<16x256xf32>,
    %17 = vector.extract_strided_slice %4 {offsets = [0, 241], sizes = [16, 256], strides = [1, 1]} : vector<16x512xf32> to vector<16x256xf32>
    %c2 = arith.constant 2 : index
    %c0_14 = arith.constant 0 : index
    %c0_15 = arith.constant 0 : index
    %18 = vector.load %arg12[%c2, %c0_14, %c0_15] : memref<9x1x256xf32, #tpu.memory_space<vmem>>, vector<1x1x256xf32>
    %19 = vector.shape_cast %18 : vector<1x1x256xf32> to vector<1x256xf32>
    %20 = vector.broadcast %19 : vector<1x256xf32> to vector<16x256xf32>
    %21 = arith.mulf %17, %20 : vector<16x256xf32>
    %c32 = arith.constant 32 : index
    %c0_16 = arith.constant 0 : index
    %22 = vector.load %arg14[%c32, %c0_16] : memref<144x256xf32, #tpu.memory_space<vmem>>, vector<16x256xf32>
    tpu.vector_store %arg14[%c32, %c0_16], %21 {strides = array<i32>} : memref<144x256xf32, #tpu.memory_space<vmem>>, vector<16x256xf32>,
    %23 = vector.extract_strided_slice %4 {offsets = [0, 255], sizes = [16, 256], strides = [1, 1]} : vector<16x512xf32> to vector<16x256xf32>
    %c3 = arith.constant 3 : index
    %c0_17 = arith.constant 0 : index
    %c0_18 = arith.constant 0 : index
    %24 = vector.load %arg12[%c3, %c0_17, %c0_18] : memref<9x1x256xf32, #tpu.memory_space<vmem>>, vector<1x1x256xf32>
    %25 = vector.shape_cast %24 : vector<1x1x256xf32> to vector<1x256xf32>
    %26 = vector.broadcast %25 : vector<1x256xf32> to vector<16x256xf32>
    %27 = arith.mulf %23, %26 : vector<16x256xf32>
    %c48 = arith.constant 48 : index
    %c0_19 = arith.constant 0 : index
    %28 = vector.load %arg14[%c48, %c0_19] : memref<144x256xf32, #tpu.memory_space<vmem>>, vector<16x256xf32>
    tpu.vector_store %arg14[%c48, %c0_19], %27 {strides = array<i32>} : memref<144x256xf32, #tpu.memory_space<vmem>>, vector<16x256xf32>,
    %29 = vector.extract_strided_slice %4 {offsets = [0, 0], sizes = [16, 256], strides = [1, 1]} : vector<16x512xf32> to vector<16x256xf32>
    %c4 = arith.constant 4 : index
    %c0_20 = arith.constant 0 : index
    %c0_21 = arith.constant 0 : index
    %30 = vector.load %arg12[%c4, %c0_20, %c0_21] : memref<9x1x256xf32, #tpu.memory_space<vmem>>, vector<1x1x256xf32>
    %31 = vector.shape_cast %30 : vector<1x1x256xf32> to vector<1x256xf32>
    %32 = vector.broadcast %31 : vector<1x256xf32> to vector<16x256xf32>
    %33 = arith.mulf %29, %32 : vector<16x256xf32>
    %c64 = arith.constant 64 : index
    %c0_22 = arith.constant 0 : index
    %34 = vector.load %arg14[%c64, %c0_22] : memref<144x256xf32, #tpu.memory_space<vmem>>, vector<16x256xf32>
    tpu.vector_store %arg14[%c64, %c0_22], %33 {strides = array<i32>} : memref<144x256xf32, #tpu.memory_space<vmem>>, vector<16x256xf32>,
    %35 = vector.extract_strided_slice %4 {offsets = [0, 1], sizes = [16, 256], strides = [1, 1]} : vector<16x512xf32> to vector<16x256xf32>
    %c5 = arith.constant 5 : index
    %c0_23 = arith.constant 0 : index
    %c0_24 = arith.constant 0 : index
    %36 = vector.load %arg12[%c5, %c0_23, %c0_24] : memref<9x1x256xf32, #tpu.memory_space<vmem>>, vector<1x1x256xf32>
    %37 = vector.shape_cast %36 : vector<1x1x256xf32> to vector<1x256xf32>
    %38 = vector.broadcast %37 : vector<1x256xf32> to vector<16x256xf32>
    %39 = arith.mulf %35, %38 : vector<16x256xf32>
    %c80 = arith.constant 80 : index
    %c0_25 = arith.constant 0 : index
    %40 = vector.load %arg14[%c80, %c0_25] : memref<144x256xf32, #tpu.memory_space<vmem>>, vector<16x256xf32>
    tpu.vector_store %arg14[%c80, %c0_25], %39 {strides = array<i32>} : memref<144x256xf32, #tpu.memory_space<vmem>>, vector<16x256xf32>,
    %41 = vector.extract_strided_slice %4 {offsets = [0, 15], sizes = [16, 256], strides = [1, 1]} : vector<16x512xf32> to vector<16x256xf32>
    %c6 = arith.constant 6 : index
    %c0_26 = arith.constant 0 : index
    %c0_27 = arith.constant 0 : index
    %42 = vector.load %arg12[%c6, %c0_26, %c0_27] : memref<9x1x256xf32, #tpu.memory_space<vmem>>, vector<1x1x256xf32>
    %43 = vector.shape_cast %42 : vector<1x1x256xf32> to vector<1x256xf32>
    %44 = vector.broadcast %43 : vector<1x256xf32> to vector<16x256xf32>
    %45 = arith.mulf %41, %44 : vector<16x256xf32>
    %c96 = arith.constant 96 : index
    %c0_28 = arith.constant 0 : index
    %46 = vector.load %arg14[%c96, %c0_28] : memref<144x256xf32, #tpu.memory_space<vmem>>, vector<16x256xf32>
    tpu.vector_store %arg14[%c96, %c0_28], %45 {strides = array<i32>} : memref<144x256xf32, #tpu.memory_space<vmem>>, vector<16x256xf32>,
    %47 = vector.extract_strided_slice %4 {offsets = [0, 16], sizes = [16, 256], strides = [1, 1]} : vector<16x512xf32> to vector<16x256xf32>
    %c7 = arith.constant 7 : index
    %c0_29 = arith.constant 0 : index
    %c0_30 = arith.constant 0 : index
    %48 = vector.load %arg12[%c7, %c0_29, %c0_30] : memref<9x1x256xf32, #tpu.memory_space<vmem>>, vector<1x1x256xf32>
    %49 = vector.shape_cast %48 : vector<1x1x256xf32> to vector<1x256xf32>
    %50 = vector.broadcast %49 : vector<1x256xf32> to vector<16x256xf32>
    %51 = arith.mulf %47, %50 : vector<16x256xf32>
    %c112 = arith.constant 112 : index
    %c0_31 = arith.constant 0 : index
    %52 = vector.load %arg14[%c112, %c0_31] : memref<144x256xf32, #tpu.memory_space<vmem>>, vector<16x256xf32>
    tpu.vector_store %arg14[%c112, %c0_31], %51 {strides = array<i32>} : memref<144x256xf32, #tpu.memory_space<vmem>>, vector<16x256xf32>,
    %53 = vector.extract_strided_slice %4 {offsets = [0, 17], sizes = [16, 256], strides = [1, 1]} : vector<16x512xf32> to vector<16x256xf32>
    %c8 = arith.constant 8 : index
    %c0_32 = arith.constant 0 : index
    %c0_33 = arith.constant 0 : index
    %54 = vector.load %arg12[%c8, %c0_32, %c0_33] : memref<9x1x256xf32, #tpu.memory_space<vmem>>, vector<1x1x256xf32>
    %55 = vector.shape_cast %54 : vector<1x1x256xf32> to vector<1x256xf32>
    %56 = vector.broadcast %55 : vector<1x256xf32> to vector<16x256xf32>
    %57 = arith.mulf %53, %56 : vector<16x256xf32>
    %c128 = arith.constant 128 : index
    %c0_34 = arith.constant 0 : index
    %58 = vector.load %arg14[%c128, %c0_34] : memref<144x256xf32, #tpu.memory_space<vmem>>, vector<16x256xf32>
    tpu.vector_store %arg14[%c128, %c0_34], %57 {strides = array<i32>} : memref<144x256xf32, #tpu.memory_space<vmem>>, vector<16x256xf32>,
    %c0_35 = arith.constant 0 : index
    %c0_36 = arith.constant 0 : index
    %59 = vector.load %arg2[%c0_35, %c0_36] : memref<16x144xf32, #tpu.memory_space<vmem>>, vector<16x144xf32>
    %c0_37 = arith.constant 0 : index
    %c0_38 = arith.constant 0 : index
    %60 = vector.load %arg14[%c0_37, %c0_38] : memref<144x256xf32, #tpu.memory_space<vmem>>, vector<144x256xf32>
    %cst = arith.constant dense<0.000000e+00> : vector<16x256xf32>
    %61 = tpu.matmul %59, %60, %cst {dimension_numbers = #tpu.dot_dimension_numbers<[1], [0], [0], [1], [0, 0, 1, 1], [], []>} : vector<16x144xf32>, vector<144x256xf32>, vector<16x256xf32> -> vector<16x256xf32>
    %c0_39 = arith.constant 0 : index
    %c0_40 = arith.constant 0 : index
    %62 = vector.load %arg10[%c0_39, %c0_40] : memref<16x16xf32, #tpu.memory_space<vmem>>, vector<16x16xf32>
    %c0_41 = arith.constant 0 : index
    %c0_42 = arith.constant 0 : index
    %63 = vector.load %arg11[%c0_41, %c0_42] : memref<16x16xf32, #tpu.memory_space<vmem>>, vector<16x16xf32>
    %cst_43 = arith.constant dense<0.000000e+00> : vector<16x256xf32>
    %64 = tpu.matmul %63, %61, %cst_43 {dimension_numbers = #tpu.dot_dimension_numbers<[1], [0], [0], [1], [0, 0, 1, 1], [], []>} : vector<16x16xf32>, vector<16x256xf32>, vector<16x256xf32> -> vector<16x256xf32>
    %cst_44 = arith.constant dense<0.000000e+00> : vector<16xf32>
    %65 = vector.multi_reduction <add>, %64, %cst_44 [1] : vector<16x256xf32> to vector<16xf32>
    %66 = vector.shape_cast %65 : vector<16xf32> to vector<16x1xf32>
    %cst_45 = arith.constant 3.906250e-03 : f32
    %67 = vector.broadcast %cst_45 : f32 to vector<16x1xf32>
    %68 = arith.mulf %66, %67 : vector<16x1xf32>
    %69 = vector.shape_cast %68 : vector<16x1xf32> to vector<16x1xf32>
    %70 = vector.broadcast %69 : vector<16x1xf32> to vector<16x256xf32>
    %cst_46 = arith.constant dense<0.000000e+00> : vector<16x256xf32>
    %71 = tpu.matmul %62, %70, %cst_46 {dimension_numbers = #tpu.dot_dimension_numbers<[1], [0], [0], [1], [0, 0, 1, 1], [], []>} : vector<16x16xf32>, vector<16x256xf32>, vector<16x256xf32> -> vector<16x256xf32>
    %72 = arith.subf %61, %71 : vector<16x256xf32>
    %73 = arith.mulf %72, %72 : vector<16x256xf32>
    %cst_47 = arith.constant dense<0.000000e+00> : vector<16x256xf32>
    %74 = tpu.matmul %63, %73, %cst_47 {dimension_numbers = #tpu.dot_dimension_numbers<[1], [0], [0], [1], [0, 0, 1, 1], [], []>} : vector<16x16xf32>, vector<16x256xf32>, vector<16x256xf32> -> vector<16x256xf32>
    %cst_48 = arith.constant dense<0.000000e+00> : vector<16xf32>
    %75 = vector.multi_reduction <add>, %74, %cst_48 [1] : vector<16x256xf32> to vector<16xf32>
    %76 = vector.shape_cast %75 : vector<16xf32> to vector<16x1xf32>
    %cst_49 = arith.constant 3.906250e-03 : f32
    %77 = vector.broadcast %cst_49 : f32 to vector<16x1xf32>
    %78 = arith.mulf %76, %77 : vector<16x1xf32>
    %cst_50 = arith.constant 9.99999974E-6 : f32
    %79 = vector.broadcast %cst_50 : f32 to vector<16x1xf32>
    %80 = arith.addf %78, %79 : vector<16x1xf32>
    %81 = math.rsqrt %80 : vector<16x1xf32>
    %82 = vector.shape_cast %81 : vector<16x1xf32> to vector<16x1xf32>
    %83 = vector.broadcast %82 : vector<16x1xf32> to vector<16x256xf32>
    %cst_51 = arith.constant dense<0.000000e+00> : vector<16x256xf32>
    %84 = tpu.matmul %62, %83, %cst_51 {dimension_numbers = #tpu.dot_dimension_numbers<[1], [0], [0], [1], [0, 0, 1, 1], [], []>} : vector<16x16xf32>, vector<16x256xf32>, vector<16x256xf32> -> vector<16x256xf32>
    %85 = arith.mulf %72, %84 : vector<16x256xf32>
    %86 = vector.broadcast %2 : vector<16x1xf32> to vector<16x256xf32>
    %87 = arith.mulf %85, %86 : vector<16x256xf32>
    %88 = vector.broadcast %3 : vector<16x1xf32> to vector<16x256xf32>
    %89 = arith.addf %87, %88 : vector<16x256xf32>
    %cst_52 = arith.constant 5.000000e-01 : f32
    %90 = vector.broadcast %cst_52 : f32 to vector<16x256xf32>
    %91 = arith.mulf %90, %89 : vector<16x256xf32>
    %cst_53 = arith.constant 0.707106769 : f32
    %92 = vector.broadcast %cst_53 : f32 to vector<16x256xf32>
    %93 = arith.mulf %89, %92 : vector<16x256xf32>
    %cst_54 = arith.constant 0.000000e+00 : f32
    %94 = vector.broadcast %cst_54 : f32 to vector<16x256xf32>
    %95 = arith.cmpf oge, %93, %94 : vector<16x256xf32>
    %cst_55 = arith.constant 1.000000e+00 : f32
    %cst_56 = arith.constant -1.000000e+00 : f32
    %96 = vector.broadcast %cst_55 : f32 to vector<16x256xf32>
    %97 = vector.broadcast %cst_56 : f32 to vector<16x256xf32>
    %98 = arith.select %95, %96, %97 : vector<16x256xi1>, vector<16x256xf32>
    %99 = math.absf %93 : vector<16x256xf32>
    %cst_57 = arith.constant 0.327591091 : f32
    %100 = vector.broadcast %cst_57 : f32 to vector<16x256xf32>
    %101 = arith.mulf %100, %99 : vector<16x256xf32>
    %cst_58 = arith.constant 1.000000e+00 : f32
    %102 = vector.broadcast %cst_58 : f32 to vector<16x256xf32>
    %103 = arith.addf %102, %101 : vector<16x256xf32>
    %104 = tpu.reciprocal %103 {approx = true} : vector<16x256xf32> -> vector<16x256xf32>
    %cst_59 = arith.constant 1.06140542 : f32
    %105 = vector.broadcast %cst_59 : f32 to vector<16x256xf32>
    %106 = arith.mulf %105, %104 : vector<16x256xf32>
    %cst_60 = arith.constant -1.45315206 : f32
    %107 = vector.broadcast %cst_60 : f32 to vector<16x256xf32>
    %108 = arith.addf %106, %107 : vector<16x256xf32>
    %109 = arith.mulf %108, %104 : vector<16x256xf32>
    %cst_61 = arith.constant 1.42141378 : f32
    %110 = vector.broadcast %cst_61 : f32 to vector<16x256xf32>
    %111 = arith.addf %109, %110 : vector<16x256xf32>
    %112 = arith.mulf %111, %104 : vector<16x256xf32>
    %cst_62 = arith.constant -0.284496725 : f32
    %113 = vector.broadcast %cst_62 : f32 to vector<16x256xf32>
    %114 = arith.addf %112, %113 : vector<16x256xf32>
    %115 = arith.mulf %114, %104 : vector<16x256xf32>
    %cst_63 = arith.constant 0.254829586 : f32
    %116 = vector.broadcast %cst_63 : f32 to vector<16x256xf32>
    %117 = arith.addf %115, %116 : vector<16x256xf32>
    %118 = arith.mulf %117, %104 : vector<16x256xf32>
    %cst_64 = arith.constant 0.000000e+00 : f32
    %119 = vector.broadcast %cst_64 : f32 to vector<16x256xf32>
    %120 = arith.subf %119, %99 : vector<16x256xf32>
    %121 = arith.mulf %120, %99 : vector<16x256xf32>
    %122 = math.exp %121 : vector<16x256xf32>
    %123 = arith.mulf %118, %122 : vector<16x256xf32>
    %cst_65 = arith.constant 1.000000e+00 : f32
    %124 = vector.broadcast %cst_65 : f32 to vector<16x256xf32>
    %125 = arith.subf %124, %123 : vector<16x256xf32>
    %126 = arith.mulf %98, %125 : vector<16x256xf32>
    %cst_66 = arith.constant 1.000000e+00 : f32
    %127 = vector.broadcast %cst_66 : f32 to vector<16x256xf32>
    %128 = arith.addf %127, %126 : vector<16x256xf32>
    %129 = arith.mulf %91, %128 : vector<16x256xf32>
    %c0_67 = arith.constant 0 : index
    %c0_68 = arith.constant 0 : index
    %130 = vector.load %arg6[%c0_67, %c0_68] : memref<16x1xf32, #tpu.memory_space<vmem>>, vector<16x1xf32>
    %c0_69 = arith.constant 0 : index
    %c0_70 = arith.constant 0 : index
    %131 = vector.load %arg7[%c0_69, %c0_70] : memref<16x1xf32, #tpu.memory_space<vmem>>, vector<16x1xf32>
    %132 = tpu.concatenate %129, %129 in 1 : vector<16x256xf32>, vector<16x256xf32> -> vector<16x512xf32>
    %133 = vector.extract_strided_slice %132 {offsets = [0, 239], sizes = [16, 256], strides = [1, 1]} : vector<16x512xf32> to vector<16x256xf32>
    %c0_71 = arith.constant 0 : index
    %c0_72 = arith.constant 0 : index
    %c0_73 = arith.constant 0 : index
    %134 = vector.load %arg12[%c0_71, %c0_72, %c0_73] : memref<9x1x256xf32, #tpu.memory_space<vmem>>, vector<1x1x256xf32>
    %135 = vector.shape_cast %134 : vector<1x1x256xf32> to vector<1x256xf32>
    %136 = vector.broadcast %135 : vector<1x256xf32> to vector<16x256xf32>
    %137 = arith.mulf %133, %136 : vector<16x256xf32>
    %c0_74 = arith.constant 0 : index
    %c0_75 = arith.constant 0 : index
    %138 = vector.load %arg14[%c0_74, %c0_75] : memref<144x256xf32, #tpu.memory_space<vmem>>, vector<16x256xf32>
    tpu.vector_store %arg14[%c0_74, %c0_75], %137 {strides = array<i32>} : memref<144x256xf32, #tpu.memory_space<vmem>>, vector<16x256xf32>,
    %139 = vector.extract_strided_slice %132 {offsets = [0, 240], sizes = [16, 256], strides = [1, 1]} : vector<16x512xf32> to vector<16x256xf32>
    %c1_76 = arith.constant 1 : index
    %c0_77 = arith.constant 0 : index
    %c0_78 = arith.constant 0 : index
    %140 = vector.load %arg12[%c1_76, %c0_77, %c0_78] : memref<9x1x256xf32, #tpu.memory_space<vmem>>, vector<1x1x256xf32>
    %141 = vector.shape_cast %140 : vector<1x1x256xf32> to vector<1x256xf32>
    %142 = vector.broadcast %141 : vector<1x256xf32> to vector<16x256xf32>
    %143 = arith.mulf %139, %142 : vector<16x256xf32>
    %c16_79 = arith.constant 16 : index
    %c0_80 = arith.constant 0 : index
    %144 = vector.load %arg14[%c16_79, %c0_80] : memref<144x256xf32, #tpu.memory_space<vmem>>, vector<16x256xf32>
    tpu.vector_store %arg14[%c16_79, %c0_80], %143 {strides = array<i32>} : memref<144x256xf32, #tpu.memory_space<vmem>>, vector<16x256xf32>,
    %145 = vector.extract_strided_slice %132 {offsets = [0, 241], sizes = [16, 256], strides = [1, 1]} : vector<16x512xf32> to vector<16x256xf32>
    %c2_81 = arith.constant 2 : index
    %c0_82 = arith.constant 0 : index
    %c0_83 = arith.constant 0 : index
    %146 = vector.load %arg12[%c2_81, %c0_82, %c0_83] : memref<9x1x256xf32, #tpu.memory_space<vmem>>, vector<1x1x256xf32>
    %147 = vector.shape_cast %146 : vector<1x1x256xf32> to vector<1x256xf32>
    %148 = vector.broadcast %147 : vector<1x256xf32> to vector<16x256xf32>
    %149 = arith.mulf %145, %148 : vector<16x256xf32>
    %c32_84 = arith.constant 32 : index
    %c0_85 = arith.constant 0 : index
    %150 = vector.load %arg14[%c32_84, %c0_85] : memref<144x256xf32, #tpu.memory_space<vmem>>, vector<16x256xf32>
    tpu.vector_store %arg14[%c32_84, %c0_85], %149 {strides = array<i32>} : memref<144x256xf32, #tpu.memory_space<vmem>>, vector<16x256xf32>,
    %151 = vector.extract_strided_slice %132 {offsets = [0, 255], sizes = [16, 256], strides = [1, 1]} : vector<16x512xf32> to vector<16x256xf32>
    %c3_86 = arith.constant 3 : index
    %c0_87 = arith.constant 0 : index
    %c0_88 = arith.constant 0 : index
    %152 = vector.load %arg12[%c3_86, %c0_87, %c0_88] : memref<9x1x256xf32, #tpu.memory_space<vmem>>, vector<1x1x256xf32>
    %153 = vector.shape_cast %152 : vector<1x1x256xf32> to vector<1x256xf32>
    %154 = vector.broadcast %153 : vector<1x256xf32> to vector<16x256xf32>
    %155 = arith.mulf %151, %154 : vector<16x256xf32>
    %c48_89 = arith.constant 48 : index
    %c0_90 = arith.constant 0 : index
    %156 = vector.load %arg14[%c48_89, %c0_90] : memref<144x256xf32, #tpu.memory_space<vmem>>, vector<16x256xf32>
    tpu.vector_store %arg14[%c48_89, %c0_90], %155 {strides = array<i32>} : memref<144x256xf32, #tpu.memory_space<vmem>>, vector<16x256xf32>,
    %157 = vector.extract_strided_slice %132 {offsets = [0, 0], sizes = [16, 256], strides = [1, 1]} : vector<16x512xf32> to vector<16x256xf32>
    %c4_91 = arith.constant 4 : index
    %c0_92 = arith.constant 0 : index
    %c0_93 = arith.constant 0 : index
    %158 = vector.load %arg12[%c4_91, %c0_92, %c0_93] : memref<9x1x256xf32, #tpu.memory_space<vmem>>, vector<1x1x256xf32>
    %159 = vector.shape_cast %158 : vector<1x1x256xf32> to vector<1x256xf32>
    %160 = vector.broadcast %159 : vector<1x256xf32> to vector<16x256xf32>
    %161 = arith.mulf %157, %160 : vector<16x256xf32>
    %c64_94 = arith.constant 64 : index
    %c0_95 = arith.constant 0 : index
    %162 = vector.load %arg14[%c64_94, %c0_95] : memref<144x256xf32, #tpu.memory_space<vmem>>, vector<16x256xf32>
    tpu.vector_store %arg14[%c64_94, %c0_95], %161 {strides = array<i32>} : memref<144x256xf32, #tpu.memory_space<vmem>>, vector<16x256xf32>,
    %163 = vector.extract_strided_slice %132 {offsets = [0, 1], sizes = [16, 256], strides = [1, 1]} : vector<16x512xf32> to vector<16x256xf32>
    %c5_96 = arith.constant 5 : index
    %c0_97 = arith.constant 0 : index
    %c0_98 = arith.constant 0 : index
    %164 = vector.load %arg12[%c5_96, %c0_97, %c0_98] : memref<9x1x256xf32, #tpu.memory_space<vmem>>, vector<1x1x256xf32>
    %165 = vector.shape_cast %164 : vector<1x1x256xf32> to vector<1x256xf32>
    %166 = vector.broadcast %165 : vector<1x256xf32> to vector<16x256xf32>
    %167 = arith.mulf %163, %166 : vector<16x256xf32>
    %c80_99 = arith.constant 80 : index
    %c0_100 = arith.constant 0 : index
    %168 = vector.load %arg14[%c80_99, %c0_100] : memref<144x256xf32, #tpu.memory_space<vmem>>, vector<16x256xf32>
    tpu.vector_store %arg14[%c80_99, %c0_100], %167 {strides = array<i32>} : memref<144x256xf32, #tpu.memory_space<vmem>>, vector<16x256xf32>,
    %169 = vector.extract_strided_slice %132 {offsets = [0, 15], sizes = [16, 256], strides = [1, 1]} : vector<16x512xf32> to vector<16x256xf32>
    %c6_101 = arith.constant 6 : index
    %c0_102 = arith.constant 0 : index
    %c0_103 = arith.constant 0 : index
    %170 = vector.load %arg12[%c6_101, %c0_102, %c0_103] : memref<9x1x256xf32, #tpu.memory_space<vmem>>, vector<1x1x256xf32>
    %171 = vector.shape_cast %170 : vector<1x1x256xf32> to vector<1x256xf32>
    %172 = vector.broadcast %171 : vector<1x256xf32> to vector<16x256xf32>
    %173 = arith.mulf %169, %172 : vector<16x256xf32>
    %c96_104 = arith.constant 96 : index
    %c0_105 = arith.constant 0 : index
    %174 = vector.load %arg14[%c96_104, %c0_105] : memref<144x256xf32, #tpu.memory_space<vmem>>, vector<16x256xf32>
    tpu.vector_store %arg14[%c96_104, %c0_105], %173 {strides = array<i32>} : memref<144x256xf32, #tpu.memory_space<vmem>>, vector<16x256xf32>,
    %175 = vector.extract_strided_slice %132 {offsets = [0, 16], sizes = [16, 256], strides = [1, 1]} : vector<16x512xf32> to vector<16x256xf32>
    %c7_106 = arith.constant 7 : index
    %c0_107 = arith.constant 0 : index
    %c0_108 = arith.constant 0 : index
    %176 = vector.load %arg12[%c7_106, %c0_107, %c0_108] : memref<9x1x256xf32, #tpu.memory_space<vmem>>, vector<1x1x256xf32>
    %177 = vector.shape_cast %176 : vector<1x1x256xf32> to vector<1x256xf32>
    %178 = vector.broadcast %177 : vector<1x256xf32> to vector<16x256xf32>
    %179 = arith.mulf %175, %178 : vector<16x256xf32>
    %c112_109 = arith.constant 112 : index
    %c0_110 = arith.constant 0 : index
    %180 = vector.load %arg14[%c112_109, %c0_110] : memref<144x256xf32, #tpu.memory_space<vmem>>, vector<16x256xf32>
    tpu.vector_store %arg14[%c112_109, %c0_110], %179 {strides = array<i32>} : memref<144x256xf32, #tpu.memory_space<vmem>>, vector<16x256xf32>,
    %181 = vector.extract_strided_slice %132 {offsets = [0, 17], sizes = [16, 256], strides = [1, 1]} : vector<16x512xf32> to vector<16x256xf32>
    %c8_111 = arith.constant 8 : index
    %c0_112 = arith.constant 0 : index
    %c0_113 = arith.constant 0 : index
    %182 = vector.load %arg12[%c8_111, %c0_112, %c0_113] : memref<9x1x256xf32, #tpu.memory_space<vmem>>, vector<1x1x256xf32>
    %183 = vector.shape_cast %182 : vector<1x1x256xf32> to vector<1x256xf32>
    %184 = vector.broadcast %183 : vector<1x256xf32> to vector<16x256xf32>
    %185 = arith.mulf %181, %184 : vector<16x256xf32>
    %c128_114 = arith.constant 128 : index
    %c0_115 = arith.constant 0 : index
    %186 = vector.load %arg14[%c128_114, %c0_115] : memref<144x256xf32, #tpu.memory_space<vmem>>, vector<16x256xf32>
    tpu.vector_store %arg14[%c128_114, %c0_115], %185 {strides = array<i32>} : memref<144x256xf32, #tpu.memory_space<vmem>>, vector<16x256xf32>,
    %c0_116 = arith.constant 0 : index
    %c0_117 = arith.constant 0 : index
    %187 = vector.load %arg3[%c0_116, %c0_117] : memref<16x144xf32, #tpu.memory_space<vmem>>, vector<16x144xf32>
    %c0_118 = arith.constant 0 : index
    %c0_119 = arith.constant 0 : index
    %188 = vector.load %arg14[%c0_118, %c0_119] : memref<144x256xf32, #tpu.memory_space<vmem>>, vector<144x256xf32>
    %cst_120 = arith.constant dense<0.000000e+00> : vector<16x256xf32>
    %189 = tpu.matmul %187, %188, %cst_120 {dimension_numbers = #tpu.dot_dimension_numbers<[1], [0], [0], [1], [0, 0, 1, 1], [], []>} : vector<16x144xf32>, vector<144x256xf32>, vector<16x256xf32> -> vector<16x256xf32>
    %c0_121 = arith.constant 0 : index
    %c0_122 = arith.constant 0 : index
    %190 = vector.load %arg10[%c0_121, %c0_122] : memref<16x16xf32, #tpu.memory_space<vmem>>, vector<16x16xf32>
    %c0_123 = arith.constant 0 : index
    %c0_124 = arith.constant 0 : index
    %191 = vector.load %arg11[%c0_123, %c0_124] : memref<16x16xf32, #tpu.memory_space<vmem>>, vector<16x16xf32>
    %cst_125 = arith.constant dense<0.000000e+00> : vector<16x256xf32>
    %192 = tpu.matmul %191, %189, %cst_125 {dimension_numbers = #tpu.dot_dimension_numbers<[1], [0], [0], [1], [0, 0, 1, 1], [], []>} : vector<16x16xf32>, vector<16x256xf32>, vector<16x256xf32> -> vector<16x256xf32>
    %cst_126 = arith.constant dense<0.000000e+00> : vector<16xf32>
    %193 = vector.multi_reduction <add>, %192, %cst_126 [1] : vector<16x256xf32> to vector<16xf32>
    %194 = vector.shape_cast %193 : vector<16xf32> to vector<16x1xf32>
    %cst_127 = arith.constant 3.906250e-03 : f32
    %195 = vector.broadcast %cst_127 : f32 to vector<16x1xf32>
    %196 = arith.mulf %194, %195 : vector<16x1xf32>
    %197 = vector.shape_cast %196 : vector<16x1xf32> to vector<16x1xf32>
    %198 = vector.broadcast %197 : vector<16x1xf32> to vector<16x256xf32>
    %cst_128 = arith.constant dense<0.000000e+00> : vector<16x256xf32>
    %199 = tpu.matmul %190, %198, %cst_128 {dimension_numbers = #tpu.dot_dimension_numbers<[1], [0], [0], [1], [0, 0, 1, 1], [], []>} : vector<16x16xf32>, vector<16x256xf32>, vector<16x256xf32> -> vector<16x256xf32>
    %200 = arith.subf %189, %199 : vector<16x256xf32>
    %201 = arith.mulf %200, %200 : vector<16x256xf32>
    %cst_129 = arith.constant dense<0.000000e+00> : vector<16x256xf32>
    %202 = tpu.matmul %191, %201, %cst_129 {dimension_numbers = #tpu.dot_dimension_numbers<[1], [0], [0], [1], [0, 0, 1, 1], [], []>} : vector<16x16xf32>, vector<16x256xf32>, vector<16x256xf32> -> vector<16x256xf32>
    %cst_130 = arith.constant dense<0.000000e+00> : vector<16xf32>
    %203 = vector.multi_reduction <add>, %202, %cst_130 [1] : vector<16x256xf32> to vector<16xf32>
    %204 = vector.shape_cast %203 : vector<16xf32> to vector<16x1xf32>
    %cst_131 = arith.constant 3.906250e-03 : f32
    %205 = vector.broadcast %cst_131 : f32 to vector<16x1xf32>
    %206 = arith.mulf %204, %205 : vector<16x1xf32>
    %cst_132 = arith.constant 9.99999974E-6 : f32
    %207 = vector.broadcast %cst_132 : f32 to vector<16x1xf32>
    %208 = arith.addf %206, %207 : vector<16x1xf32>
    %209 = math.rsqrt %208 : vector<16x1xf32>
    %210 = vector.shape_cast %209 : vector<16x1xf32> to vector<16x1xf32>
    %211 = vector.broadcast %210 : vector<16x1xf32> to vector<16x256xf32>
    %cst_133 = arith.constant dense<0.000000e+00> : vector<16x256xf32>
    %212 = tpu.matmul %190, %211, %cst_133 {dimension_numbers = #tpu.dot_dimension_numbers<[1], [0], [0], [1], [0, 0, 1, 1], [], []>} : vector<16x16xf32>, vector<16x256xf32>, vector<16x256xf32> -> vector<16x256xf32>
    %213 = arith.mulf %200, %212 : vector<16x256xf32>
    %214 = vector.broadcast %130 : vector<16x1xf32> to vector<16x256xf32>
    %215 = arith.mulf %213, %214 : vector<16x256xf32>
    %216 = vector.broadcast %131 : vector<16x1xf32> to vector<16x256xf32>
    %217 = arith.addf %215, %216 : vector<16x256xf32>
    %cst_134 = arith.constant 5.000000e-01 : f32
    %218 = vector.broadcast %cst_134 : f32 to vector<16x256xf32>
    %219 = arith.mulf %218, %217 : vector<16x256xf32>
    %cst_135 = arith.constant 0.707106769 : f32
    %220 = vector.broadcast %cst_135 : f32 to vector<16x256xf32>
    %221 = arith.mulf %217, %220 : vector<16x256xf32>
    %cst_136 = arith.constant 0.000000e+00 : f32
    %222 = vector.broadcast %cst_136 : f32 to vector<16x256xf32>
    %223 = arith.cmpf oge, %221, %222 : vector<16x256xf32>
    %cst_137 = arith.constant 1.000000e+00 : f32
    %cst_138 = arith.constant -1.000000e+00 : f32
    %224 = vector.broadcast %cst_137 : f32 to vector<16x256xf32>
    %225 = vector.broadcast %cst_138 : f32 to vector<16x256xf32>
    %226 = arith.select %223, %224, %225 : vector<16x256xi1>, vector<16x256xf32>
    %227 = math.absf %221 : vector<16x256xf32>
    %cst_139 = arith.constant 0.327591091 : f32
    %228 = vector.broadcast %cst_139 : f32 to vector<16x256xf32>
    %229 = arith.mulf %228, %227 : vector<16x256xf32>
    %cst_140 = arith.constant 1.000000e+00 : f32
    %230 = vector.broadcast %cst_140 : f32 to vector<16x256xf32>
    %231 = arith.addf %230, %229 : vector<16x256xf32>
    %232 = tpu.reciprocal %231 {approx = true} : vector<16x256xf32> -> vector<16x256xf32>
    %cst_141 = arith.constant 1.06140542 : f32
    %233 = vector.broadcast %cst_141 : f32 to vector<16x256xf32>
    %234 = arith.mulf %233, %232 : vector<16x256xf32>
    %cst_142 = arith.constant -1.45315206 : f32
    %235 = vector.broadcast %cst_142 : f32 to vector<16x256xf32>
    %236 = arith.addf %234, %235 : vector<16x256xf32>
    %237 = arith.mulf %236, %232 : vector<16x256xf32>
    %cst_143 = arith.constant 1.42141378 : f32
    %238 = vector.broadcast %cst_143 : f32 to vector<16x256xf32>
    %239 = arith.addf %237, %238 : vector<16x256xf32>
    %240 = arith.mulf %239, %232 : vector<16x256xf32>
    %cst_144 = arith.constant -0.284496725 : f32
    %241 = vector.broadcast %cst_144 : f32 to vector<16x256xf32>
    %242 = arith.addf %240, %241 : vector<16x256xf32>
    %243 = arith.mulf %242, %232 : vector<16x256xf32>
    %cst_145 = arith.constant 0.254829586 : f32
    %244 = vector.broadcast %cst_145 : f32 to vector<16x256xf32>
    %245 = arith.addf %243, %244 : vector<16x256xf32>
    %246 = arith.mulf %245, %232 : vector<16x256xf32>
    %cst_146 = arith.constant 0.000000e+00 : f32
    %247 = vector.broadcast %cst_146 : f32 to vector<16x256xf32>
    %248 = arith.subf %247, %227 : vector<16x256xf32>
    %249 = arith.mulf %248, %227 : vector<16x256xf32>
    %250 = math.exp %249 : vector<16x256xf32>
    %251 = arith.mulf %246, %250 : vector<16x256xf32>
    %cst_147 = arith.constant 1.000000e+00 : f32
    %252 = vector.broadcast %cst_147 : f32 to vector<16x256xf32>
    %253 = arith.subf %252, %251 : vector<16x256xf32>
    %254 = arith.mulf %226, %253 : vector<16x256xf32>
    %cst_148 = arith.constant 1.000000e+00 : f32
    %255 = vector.broadcast %cst_148 : f32 to vector<16x256xf32>
    %256 = arith.addf %255, %254 : vector<16x256xf32>
    %257 = arith.mulf %219, %256 : vector<16x256xf32>
    %258 = arith.addf %257, %1 : vector<16x256xf32>
    %c0_149 = arith.constant 0 : index
    %c0_150 = arith.constant 0 : index
    %259 = vector.load %arg8[%c0_149, %c0_150] : memref<16x1xf32, #tpu.memory_space<vmem>>, vector<16x1xf32>
    %c0_151 = arith.constant 0 : index
    %c0_152 = arith.constant 0 : index
    %260 = vector.load %arg9[%c0_151, %c0_152] : memref<16x1xf32, #tpu.memory_space<vmem>>, vector<16x1xf32>
    %c0_153 = arith.constant 0 : index
    %c0_154 = arith.constant 0 : index
    %261 = vector.load %arg10[%c0_153, %c0_154] : memref<16x16xf32, #tpu.memory_space<vmem>>, vector<16x16xf32>
    %c0_155 = arith.constant 0 : index
    %c0_156 = arith.constant 0 : index
    %262 = vector.load %arg11[%c0_155, %c0_156] : memref<16x16xf32, #tpu.memory_space<vmem>>, vector<16x16xf32>
    %cst_157 = arith.constant dense<0.000000e+00> : vector<16x256xf32>
    %263 = tpu.matmul %262, %258, %cst_157 {dimension_numbers = #tpu.dot_dimension_numbers<[1], [0], [0], [1], [0, 0, 1, 1], [], []>} : vector<16x16xf32>, vector<16x256xf32>, vector<16x256xf32> -> vector<16x256xf32>
    %cst_158 = arith.constant dense<0.000000e+00> : vector<16xf32>
    %264 = vector.multi_reduction <add>, %263, %cst_158 [1] : vector<16x256xf32> to vector<16xf32>
    %265 = vector.shape_cast %264 : vector<16xf32> to vector<16x1xf32>
    %cst_159 = arith.constant 3.906250e-03 : f32
    %266 = vector.broadcast %cst_159 : f32 to vector<16x1xf32>
    %267 = arith.mulf %265, %266 : vector<16x1xf32>
    %268 = vector.shape_cast %267 : vector<16x1xf32> to vector<16x1xf32>
    %269 = vector.broadcast %268 : vector<16x1xf32> to vector<16x256xf32>
    %cst_160 = arith.constant dense<0.000000e+00> : vector<16x256xf32>
    %270 = tpu.matmul %261, %269, %cst_160 {dimension_numbers = #tpu.dot_dimension_numbers<[1], [0], [0], [1], [0, 0, 1, 1], [], []>} : vector<16x16xf32>, vector<16x256xf32>, vector<16x256xf32> -> vector<16x256xf32>
    %271 = arith.subf %258, %270 : vector<16x256xf32>
    %272 = arith.mulf %271, %271 : vector<16x256xf32>
    %cst_161 = arith.constant dense<0.000000e+00> : vector<16x256xf32>
    %273 = tpu.matmul %262, %272, %cst_161 {dimension_numbers = #tpu.dot_dimension_numbers<[1], [0], [0], [1], [0, 0, 1, 1], [], []>} : vector<16x16xf32>, vector<16x256xf32>, vector<16x256xf32> -> vector<16x256xf32>
    %cst_162 = arith.constant dense<0.000000e+00> : vector<16xf32>
    %274 = vector.multi_reduction <add>, %273, %cst_162 [1] : vector<16x256xf32> to vector<16xf32>
    %275 = vector.shape_cast %274 : vector<16xf32> to vector<16x1xf32>
    %cst_163 = arith.constant 3.906250e-03 : f32
    %276 = vector.broadcast %cst_163 : f32 to vector<16x1xf32>
    %277 = arith.mulf %275, %276 : vector<16x1xf32>
    %cst_164 = arith.constant 9.99999974E-6 : f32
    %278 = vector.broadcast %cst_164 : f32 to vector<16x1xf32>
    %279 = arith.addf %277, %278 : vector<16x1xf32>
    %280 = math.rsqrt %279 : vector<16x1xf32>
    %281 = vector.shape_cast %280 : vector<16x1xf32> to vector<16x1xf32>
    %282 = vector.broadcast %281 : vector<16x1xf32> to vector<16x256xf32>
    %cst_165 = arith.constant dense<0.000000e+00> : vector<16x256xf32>
    %283 = tpu.matmul %261, %282, %cst_165 {dimension_numbers = #tpu.dot_dimension_numbers<[1], [0], [0], [1], [0, 0, 1, 1], [], []>} : vector<16x16xf32>, vector<16x256xf32>, vector<16x256xf32> -> vector<16x256xf32>
    %284 = arith.mulf %271, %283 : vector<16x256xf32>
    %285 = vector.broadcast %259 : vector<16x1xf32> to vector<16x256xf32>
    %286 = arith.mulf %284, %285 : vector<16x256xf32>
    %287 = vector.broadcast %260 : vector<16x1xf32> to vector<16x256xf32>
    %288 = arith.addf %286, %287 : vector<16x256xf32>
    %289 = vector.shape_cast %288 : vector<16x256xf32> to vector<1x16x256xf32>
    %c0_166 = arith.constant 0 : index
    %c0_167 = arith.constant 0 : index
    %c0_168 = arith.constant 0 : index
    %290 = vector.load %arg13[%c0_166, %c0_167, %c0_168] : memref<1x16x256xf32, #tpu.memory_space<vmem>>, vector<1x16x256xf32>
    tpu.vector_store %arg13[%c0_166, %c0_167, %c0_168], %289 {strides = array<i32>} : memref<1x16x256xf32, #tpu.memory_space<vmem>>, vector<1x16x256xf32>,
    return
  }
  func.func @transform_0(%arg0: i32) -> (i32, i32, i32) {
    %c0_i32 = arith.constant 0 : i32
    %c0_i32_0 = arith.constant 0 : i32
    %c0_i32_1 = arith.constant 0 : i32
    return %arg0, %c0_i32, %c0_i32_0 : i32, i32, i32
  }
  func.func @transform_1(%arg0: i32) -> (i32, i32) {
    %c0_i32 = arith.constant 0 : i32
    %c0_i32_0 = arith.constant 0 : i32
    %c0_i32_1 = arith.constant 0 : i32
    return %c0_i32, %c0_i32_0 : i32, i32
  }
  func.func @transform_2(%arg0: i32) -> (i32, i32) {
    %c0_i32 = arith.constant 0 : i32
    %c0_i32_0 = arith.constant 0 : i32
    %c0_i32_1 = arith.constant 0 : i32
    return %c0_i32, %c0_i32_0 : i32, i32
  }
  func.func @transform_3(%arg0: i32) -> (i32, i32) {
    %c0_i32 = arith.constant 0 : i32
    %c0_i32_0 = arith.constant 0 : i32
    %c0_i32_1 = arith.constant 0 : i32
    return %c0_i32, %c0_i32_0 : i32, i32
  }
  func.func @transform_4(%arg0: i32) -> (i32, i32) {
    %c0_i32 = arith.constant 0 : i32
    %c0_i32_0 = arith.constant 0 : i32
    %c0_i32_1 = arith.constant 0 : i32
    return %c0_i32, %c0_i32_0 : i32, i32
  }
  func.func @transform_5(%arg0: i32) -> (i32, i32) {
    %c0_i32 = arith.constant 0 : i32
    %c0_i32_0 = arith.constant 0 : i32
    %c0_i32_1 = arith.constant 0 : i32
    return %c0_i32, %c0_i32_0 : i32, i32
  }
  func.func @transform_6(%arg0: i32) -> (i32, i32) {
    %c0_i32 = arith.constant 0 : i32
    %c0_i32_0 = arith.constant 0 : i32
    %c0_i32_1 = arith.constant 0 : i32
    return %c0_i32, %c0_i32_0 : i32, i32
  }
  func.func @transform_7(%arg0: i32) -> (i32, i32) {
    %c0_i32 = arith.constant 0 : i32
    %c0_i32_0 = arith.constant 0 : i32
    %c0_i32_1 = arith.constant 0 : i32
    return %c0_i32, %c0_i32_0 : i32, i32
  }
  func.func @transform_8(%arg0: i32) -> (i32, i32) {
    %c0_i32 = arith.constant 0 : i32
    %c0_i32_0 = arith.constant 0 : i32
    %c0_i32_1 = arith.constant 0 : i32
    return %c0_i32, %c0_i32_0 : i32, i32
  }
  func.func @transform_9(%arg0: i32) -> (i32, i32) {
    %c0_i32 = arith.constant 0 : i32
    %c0_i32_0 = arith.constant 0 : i32
    %c0_i32_1 = arith.constant 0 : i32
    return %c0_i32, %c0_i32_0 : i32, i32
  }
  func.func @transform_10(%arg0: i32) -> (i32, i32) {
    %c0_i32 = arith.constant 0 : i32
    %c0_i32_0 = arith.constant 0 : i32
    %c0_i32_1 = arith.constant 0 : i32
    return %c0_i32, %c0_i32_0 : i32, i32
  }
  func.func @transform_11(%arg0: i32) -> (i32, i32, i32) {
    %c0_i32 = arith.constant 0 : i32
    %c0_i32_0 = arith.constant 0 : i32
    %c0_i32_1 = arith.constant 0 : i32
    %c0_i32_2 = arith.constant 0 : i32
    return %c0_i32, %c0_i32_0, %c0_i32_1 : i32, i32, i32
  }
  func.func @transform_12(%arg0: i32) -> (i32, i32, i32) {
    %c0_i32 = arith.constant 0 : i32
    %c0_i32_0 = arith.constant 0 : i32
    %c0_i32_1 = arith.constant 0 : i32
    return %arg0, %c0_i32, %c0_i32_0 : i32, i32, i32
  }
}

</mosaic_0001>

<llo_original>
// kernel: unet_upsample_forward.4
$region0: #{unet_upsample_forward.4}
  #allocation0 [shape = 'u32[]', space=smem, size = 0x4, offset = 0x4, fixed_abs, tag = 'smem constant byte address 0x4 - core index']
  #allocation1 [shape = 'u32[144,128]{1,0:T(1,128)}', space=vmem, size = 0x12000, scoped, tag = 'internal scratch']
  %s0 = inlined_call_operand.vmem [shape: f32[2,4,64], index: 0, kind: input, shape index: {}]
  %s1 = inlined_call_operand.vmem [shape: f32[2,4,64], index: 1, kind: input, shape index: {}]
  %s2 = inlined_call_operand.vmem [shape: f32[2,4,1], index: 2, kind: input, shape index: {}]
  %s3 = inlined_call_operand.vmem [shape: f32[2,4,1], index: 3, kind: input, shape index: {}]
  %s4 = inlined_call_operand.vmem [shape: f32[4,16,4], index: 4, kind: input, shape index: {}]
  %s5 = inlined_call_operand.vmem [shape: f32[4,16,4], index: 5, kind: input, shape index: {}]
  %s6 = inlined_call_operand.vmem [shape: f32[16,1], index: 6, kind: input, shape index: {}]
  %s7 = inlined_call_operand.vmem [shape: f32[4,64,256], index: 7, kind: input, shape index: {}]
  %s8 = inlined_call_operand.vmem [shape: f32[2,16,256], index: 8, kind: output, shape index: {}]
  %s9 = sld [smem:[#allocation0]]
  $region65: #{unet_upsample_forward.4} parent=0
    _
  %s11 = ssub.s32 1, %s9
  %s12 = scalar_select 0, %s11, %s9
  loop: start=0, step=1, limit=4
  $region2: #{unet_upsample_forward.4} parent=0 // loop_pre_header
    _
  $region3: #{unet_upsample_forward.4} parent=0 // loop_header
    %s14 = sphi 0, %s18
    %p15 = scmp.ge.s32.totalorder %s14, 4
    %s24 = sphi 0, %s26
    %s27 = sphi 0, %s24
    %s28 = sphi 0, %s27
    %s44 = sphi 0, %s28
    %s50 = sphi 0, %s52
    %s53 = sphi 0, %s50
    %s54 = sphi 0, %s53
    %s70 = sphi 0, %s54
    %s76 = sphi 0, %s78
    %s79 = sphi 0, %s76
    %s80 = sphi 0, %s79
    %s96 = sphi 0, %s80
    %s102 = sphi 0, %s104
    %s105 = sphi 0, %s102
    %s106 = sphi 0, %s105
    %s122 = sphi 0, %s106
    %s126 = sphi 0, %s126
    %s128 = sphi 0, %s126
    %s129 = sphi 0, %s128
    %s143 = sphi 0, %s129
    %s147 = sphi 0, %s147
    %s149 = sphi 0, %s147
    %s150 = sphi 0, %s149
    %s164 = sphi 0, %s150
    %s168 = sphi 0, %s168
    %s170 = sphi 0, %s168
    %s171 = sphi 0, %s170
    %s185 = sphi 0, %s171
    %s189 = sphi 0, %s189
    %s191 = sphi 0, %s189
    %s192 = sphi 0, %s191
    %s206 = sphi 0, %s192
    %s212 = sphi 0, %s214
    %s215 = sphi 0, %s212
    %s216 = sphi 0, %s215
    %s232 = sphi 0, %s216
  $region4: #{unet_upsample_forward.4} parent=0 // loop_header_branch
    %17 = sbr.rel (%p15) target = $region8
  $region5: #{unet_upsample_forward.4} parent=0 // loop_body
    %s19 = ssub.s32 %s14, 1
    %s20 = ssub.s32 %s14, 2
    %s21 = sadd.s32 %s14, 1
    %s22 = ssub.s32 %s14, %s21
    %p23 = scmp.eq.s32.totalorder %s22, 0
    %s25 = sadd.s32 %s24, 1
    %s26 = scalar_select %p23, %s24, %s25
    %p29 = pneg %p23
    %p30 = scmp.eq.s32.totalorder %s14, 1
    %p31 = por %p29, %p30
    %p32 = scmp.ne.s32.totalorder %s24, %s27
    %p33 = scmp.eq.s32.totalorder %s14, 0
    %p34 = por %p32, %p33
    %p35 = scmp.ne.s32.totalorder %s24, %s27
    %p36 = scmp.eq.s32.totalorder %s19, 1
    %p37 = por %p35, %p36
    %p38 = scmp.ne.s32.totalorder %s27, %s28
    %p39 = scmp.eq.s32.totalorder %s19, 0
    %p40 = por %p38, %p39
    %p41 = scmp.ne.s32.totalorder %s27, %s28
    %p42 = scmp.eq.s32.totalorder %s20, 1
    %p43 = por %p41, %p42
    %p45 = scmp.ne.s32.totalorder %s28, %s44
    %p46 = scmp.eq.s32.totalorder %s20, 0
    %p47 = por %p45, %p46
    %s48 = ssub.s32 %s14, %s21
    %p49 = scmp.eq.s32.totalorder %s48, 0
    %s51 = sadd.s32 %s50, 1
    %s52 = scalar_select %p49, %s50, %s51
    %p55 = pneg %p49
    %p56 = scmp.eq.s32.totalorder %s14, 1
    %p57 = por %p55, %p56
    %p58 = scmp.ne.s32.totalorder %s50, %s53
    %p59 = scmp.eq.s32.totalorder %s14, 0
    %p60 = por %p58, %p59
    %p61 = scmp.ne.s32.totalorder %s50, %s53
    %p62 = scmp.eq.s32.totalorder %s19, 1
    %p63 = por %p61, %p62
    %p64 = scmp.ne.s32.totalorder %s53, %s54
    %p65 = scmp.eq.s32.totalorder %s19, 0
    %p66 = por %p64, %p65
    %p67 = scmp.ne.s32.totalorder %s53, %s54
    %p68 = scmp.eq.s32.totalorder %s20, 1
    %p69 = por %p67, %p68
    %p71 = scmp.ne.s32.totalorder %s54, %s70
    %p72 = scmp.eq.s32.totalorder %s20, 0
    %p73 = por %p71, %p72
    %s74 = ssub.s32 %s14, %s21
    %p75 = scmp.eq.s32.totalorder %s74, 0
    %s77 = sadd.s32 %s76, 1
    %s78 = scalar_select %p75, %s76, %s77
    %p81 = pneg %p75
    %p82 = scmp.eq.s32.totalorder %s14, 1
    %p83 = por %p81, %p82
    %p84 = scmp.ne.s32.totalorder %s76, %s79
    %p85 = scmp.eq.s32.totalorder %s14, 0
    %p86 = por %p84, %p85
    %p87 = scmp.ne.s32.totalorder %s76, %s79
    %p88 = scmp.eq.s32.totalorder %s19, 1
    %p89 = por %p87, %p88
    %p90 = scmp.ne.s32.totalorder %s79, %s80
    %p91 = scmp.eq.s32.totalorder %s19, 0
    %p92 = por %p90, %p91
    %p93 = scmp.ne.s32.totalorder %s79, %s80
    %p94 = scmp.eq.s32.totalorder %s20, 1
    %p95 = por %p93, %p94
    %p97 = scmp.ne.s32.totalorder %s80, %s96
    %p98 = scmp.eq.s32.totalorder %s20, 0
    %p99 = por %p97, %p98
    %s100 = ssub.s32 %s14, %s21
    %p101 = scmp.eq.s32.totalorder %s100, 0
    %s103 = sadd.s32 %s102, 1
    %s104 = scalar_select %p101, %s102, %s103
    %p107 = pneg %p101
    %p108 = scmp.eq.s32.totalorder %s14, 1
    %p109 = por %p107, %p108
    %p110 = scmp.ne.s32.totalorder %s102, %s105
    %p111 = scmp.eq.s32.totalorder %s14, 0
    %p112 = por %p110, %p111
    %p113 = scmp.ne.s32.totalorder %s102, %s105
    %p114 = scmp.eq.s32.totalorder %s19, 1
    %p115 = por %p113, %p114
    %p116 = scmp.ne.s32.totalorder %s105, %s106
    %p117 = scmp.eq.s32.totalorder %s19, 0
    %p118 = por %p116, %p117
    %p119 = scmp.ne.s32.totalorder %s105, %s106
    %p120 = scmp.eq.s32.totalorder %s20, 1
    %p121 = por %p119, %p120
    %p123 = scmp.ne.s32.totalorder %s106, %s122
    %p124 = scmp.eq.s32.totalorder %s20, 0
    %p125 = por %p123, %p124
    %s127 = sadd.s32 %s126, 1
    %p130 = scmp.eq.s32.totalorder %s14, 1
    %p131 = scmp.ne.s32.totalorder %s126, %s128
    %p132 = scmp.eq.s32.totalorder %s14, 0
    %p133 = por %p131, %p132
    %p134 = scmp.ne.s32.totalorder %s126, %s128
    %p135 = scmp.eq.s32.totalorder %s19, 1
    %p136 = por %p134, %p135
    %p137 = scmp.ne.s32.totalorder %s128, %s129
    %p138 = scmp.eq.s32.totalorder %s19, 0
    %p139 = por %p137, %p138
    %p140 = scmp.ne.s32.totalorder %s128, %s129
    %p141 = scmp.eq.s32.totalorder %s20, 1
    %p142 = por %p140, %p141
    %p144 = scmp.ne.s32.totalorder %s129, %s143
    %p145 = scmp.eq.s32.totalorder %s20, 0
    %p146 = por %p144, %p145
    %s148 = sadd.s32 %s147, 1
    %p151 = scmp.eq.s32.totalorder %s14, 1
    %p152 = scmp.ne.s32.totalorder %s147, %s149
    %p153 = scmp.eq.s32.totalorder %s14, 0
    %p154 = por %p152, %p153
    %p155 = scmp.ne.s32.totalorder %s147, %s149
    %p156 = scmp.eq.s32.totalorder %s19, 1
    %p157 = por %p155, %p156
    %p158 = scmp.ne.s32.totalorder %s149, %s150
    %p159 = scmp.eq.s32.totalorder %s19, 0
    %p160 = por %p158, %p159
    %p161 = scmp.ne.s32.totalorder %s149, %s150
    %p162 = scmp.eq.s32.totalorder %s20, 1
    %p163 = por %p161, %p162
    %p165 = scmp.ne.s32.totalorder %s150, %s164
    %p166 = scmp.eq.s32.totalorder %s20, 0
    %p167 = por %p165, %p166
    %s169 = sadd.s32 %s168, 1
    %p172 = scmp.eq.s32.totalorder %s14, 1
    %p173 = scmp.ne.s32.totalorder %s168, %s170
    %p174 = scmp.eq.s32.totalorder %s14, 0
    %p175 = por %p173, %p174
    %p176 = scmp.ne.s32.totalorder %s168, %s170
    %p177 = scmp.eq.s32.totalorder %s19, 1
    %p178 = por %p176, %p177
    %p179 = scmp.ne.s32.totalorder %s170, %s171
    %p180 = scmp.eq.s32.totalorder %s19, 0
    %p181 = por %p179, %p180
    %p182 = scmp.ne.s32.totalorder %s170, %s171
    %p183 = scmp.eq.s32.totalorder %s20, 1
    %p184 = por %p182, %p183
    %p186 = scmp.ne.s32.totalorder %s171, %s185
    %p187 = scmp.eq.s32.totalorder %s20, 0
    %p188 = por %p186, %p187
    %s190 = sadd.s32 %s189, 1
    %p193 = scmp.eq.s32.totalorder %s14, 1
    %p194 = scmp.ne.s32.totalorder %s189, %s191
    %p195 = scmp.eq.s32.totalorder %s14, 0
    %p196 = por %p194, %p195
    %p197 = scmp.ne.s32.totalorder %s189, %s191
    %p198 = scmp.eq.s32.totalorder %s19, 1
    %p199 = por %p197, %p198
    %p200 = scmp.ne.s32.totalorder %s191, %s192
    %p201 = scmp.eq.s32.totalorder %s19, 0
    %p202 = por %p200, %p201
    %p203 = scmp.ne.s32.totalorder %s191, %s192
    %p204 = scmp.eq.s32.totalorder %s20, 1
    %p205 = por %p203, %p204
    %p207 = scmp.ne.s32.totalorder %s192, %s206
    %p208 = scmp.eq.s32.totalorder %s20, 0
    %p209 = por %p207, %p208
    %s210 = ssub.s32 %s14, %s21
    %p211 = scmp.eq.s32.totalorder %s210, 0
    %s213 = sadd.s32 %s212, 1
    %s214 = scalar_select %p211, %s212, %s213
    %p217 = pneg %p211
    %p218 = scmp.eq.s32.totalorder %s14, 1
    %p219 = por %p217, %p218
    %p220 = scmp.ne.s32.totalorder %s212, %s215
    %p221 = scmp.eq.s32.totalorder %s14, 0
    %p222 = por %p220, %p221
    %p223 = scmp.ne.s32.totalorder %s212, %s215
    %p224 = scmp.eq.s32.totalorder %s19, 1
    %p225 = por %p223, %p224
    %p226 = scmp.ne.s32.totalorder %s215, %s216
    %p227 = scmp.eq.s32.totalorder %s19, 0
    %p228 = por %p226, %p227
    %p229 = scmp.ne.s32.totalorder %s215, %s216
    %p230 = scmp.eq.s32.totalorder %s20, 1
    %p231 = por %p229, %p230
    %p233 = scmp.ne.s32.totalorder %s216, %s232
    %p234 = scmp.eq.s32.totalorder %s20, 0
    %p235 = por %p233, %p234
    %p236 = scmp.le.s32.totalorder 1, %s14
    %p237 = scmp.lt.s32.totalorder %s14, 3
    %p238 = pnand %p236, %p237
    %p239 = pneg %p238
    // Predicated region
    $region9: #{unet_upsample_forward.4} parent=5 // pred_check
      _
    $region10: #{unet_upsample_forward.4} parent=5 // pred_check_branch
      %241 = sbr.rel (%p238) target = $region12
    $region11: #{unet_upsample_forward.4} parent=5 // pred_region
      %s242 = ssub.s32 %s14, 1
      // Predicated region
      $region13: #{unet_upsample_forward.4} parent=11 // pred_check
        %p243 = pneg %p139
      $region14: #{unet_upsample_forward.4} parent=11 // pred_check_branch
        %245 = sbr.rel (%p243) target = $region16
      $region15: #{unet_upsample_forward.4} parent=11 // pred_region
        _
      $region16: #{unet_upsample_forward.4} parent=11 // pred_fallthru
        _
      // Predicated region
      $region17: #{unet_upsample_forward.4} parent=11 // pred_check
        %p246 = pneg %p160
      $region18: #{unet_upsample_forward.4} parent=11 // pred_check_branch
        %248 = sbr.rel (%p246) target = $region20
      $region19: #{unet_upsample_forward.4} parent=11 // pred_region
        _
      $region20: #{unet_upsample_forward.4} parent=11 // pred_fallthru
        _
      // Predicated region
      $region21: #{unet_upsample_forward.4} parent=11 // pred_check
        %p249 = pneg %p181
      $region22: #{unet_upsample_forward.4} parent=11 // pred_check_branch
        %251 = sbr.rel (%p249) target = $region24
      $region23: #{unet_upsample_forward.4} parent=11 // pred_region
        _
      $region24: #{unet_upsample_forward.4} parent=11 // pred_fallthru
        _
      // Predicated region
      $region25: #{unet_upsample_forward.4} parent=11 // pred_check
        %p252 = pneg %p202
      $region26: #{unet_upsample_forward.4} parent=11 // pred_check_branch
        %254 = sbr.rel (%p252) target = $region28
      $region27: #{unet_upsample_forward.4} parent=11 // pred_region
        _
      $region28: #{unet_upsample_forward.4} parent=11 // pred_fallthru
        _
    $region12: #{unet_upsample_forward.4} parent=5 // pred_fallthru
      _
    %p255 = scmp.lt.s32.totalorder %s14, 2
    // Predicated region
    $region29: #{unet_upsample_forward.4} parent=5 // pred_check
      %p256 = pneg %p255
    $region30: #{unet_upsample_forward.4} parent=5 // pred_check_branch
      %258 = sbr.rel (%p256) target = $region32
    $region31: #{unet_upsample_forward.4} parent=5 // pred_region
      // Predicated region
      $region33: #{unet_upsample_forward.4} parent=31 // pred_check
        %p259 = pneg %p34
      $region34: #{unet_upsample_forward.4} parent=31 // pred_check_branch
        %261 = sbr.rel (%p259) target = $region36
      $region35: #{unet_upsample_forward.4} parent=31 // pred_region
        %p262 = scmp.lt.s32.totalorder %s14, 1
        %s263 = scalar_select %p262, %s14, 1
        %s264 = smul.addr %s263, 4
        %s265 = scalar_lea.vmem %s0, %s264
      $region36: #{unet_upsample_forward.4} parent=31 // pred_fallthru
        _
      // Predicated region
      $region37: #{unet_upsample_forward.4} parent=31 // pred_check
        %p266 = pneg %p60
      $region38: #{unet_upsample_forward.4} parent=31 // pred_check_branch
        %268 = sbr.rel (%p266) target = $region40
      $region39: #{unet_upsample_forward.4} parent=31 // pred_region
        %p269 = scmp.lt.s32.totalorder %s14, 1
        %s270 = scalar_select %p269, %s14, 1
        %s271 = smul.addr %s270, 4
        %s272 = scalar_lea.vmem %s1, %s271
      $region40: #{unet_upsample_forward.4} parent=31 // pred_fallthru
        _
      // Predicated region
      $region41: #{unet_upsample_forward.4} parent=31 // pred_check
        %p273 = pneg %p86
      $region42: #{unet_upsample_forward.4} parent=31 // pred_check_branch
        %275 = sbr.rel (%p273) target = $region44
      $region43: #{unet_upsample_forward.4} parent=31 // pred_region
        %p276 = scmp.lt.s32.totalorder %s14, 1
        %s277 = scalar_select %p276, %s14, 1
        %s278 = smul.addr %s277, 4
        %s279 = scalar_lea.vmem %s2, %s278
      $region44: #{unet_upsample_forward.4} parent=31 // pred_fallthru
        _
      // Predicated region
      $region45: #{unet_upsample_forward.4} parent=31 // pred_check
        %p280 = pneg %p112
      $region46: #{unet_upsample_forward.4} parent=31 // pred_check_branch
        %282 = sbr.rel (%p280) target = $region48
      $region47: #{unet_upsample_forward.4} parent=31 // pred_region
        %p283 = scmp.lt.s32.totalorder %s14, 1
        %s284 = scalar_select %p283, %s14, 1
        %s285 = smul.addr %s284, 4
        %s286 = scalar_lea.vmem %s3, %s285
      $region48: #{unet_upsample_forward.4} parent=31 // pred_fallthru
        _
    $region32: #{unet_upsample_forward.4} parent=5 // pred_fallthru
      _
    %p287 = scmp.le.s32.totalorder 1, %s14
    %p288 = scmp.lt.s32.totalorder %s14, 3
    %p289 = pnand %p287, %p288
    %p290 = pneg %p289
    // Predicated region
    $region49: #{unet_upsample_forward.4} parent=5 // pred_check
      _
    $region50: #{unet_upsample_forward.4} parent=5 // pred_check_branch
      %292 = sbr.rel (%p289) target = $region52
    $region51: #{unet_upsample_forward.4} parent=5 // pred_region
      %s293 = ssub.s32 %s14, 1
      %p294 = scmp.lt.s32.totalorder %s19, 1
      %s295 = scalar_select %p294, %s19, 1
      %s296 = smul.addr %s295, 4
      %s297 = scalar_lea.vmem %s0, %s296
      %p298 = pneg %p40
      %p299 = pneg %p37
      %p300 = scmp.lt.s32.totalorder %s19, 1
      %s301 = scalar_select %p300, %s19, 1
      %s302 = smul.addr %s301, 4
      %s303 = scalar_lea.vmem %s1, %s302
      %p304 = pneg %p66
      %p305 = pneg %p63
      %p306 = scmp.lt.s32.totalorder %s19, 1
      %s307 = scalar_select %p306, %s19, 1
      %s308 = smul.addr %s307, 4
      %s309 = scalar_lea.vmem %s2, %s308
      %p310 = pneg %p92
      %p311 = pneg %p89
      %p312 = scmp.lt.s32.totalorder %s19, 1
      %s313 = scalar_select %p312, %s19, 1
      %s314 = smul.addr %s313, 4
      %s315 = scalar_lea.vmem %s3, %s314
      %p316 = pneg %p118
      %p317 = pneg %p115
      %p318 = pneg %p139
      %p319 = pneg %p136
      %p320 = pneg %p160
      %p321 = pneg %p157
      %p322 = pneg %p181
      %p323 = pneg %p178
      %p324 = pneg %p202
      %p325 = pneg %p199
      %p326 = pneg %p228
      %p327 = pneg %p225
      %p328 = scmp.lt.s32.totalorder %s19, 1
      %s329 = scalar_select %p328, %s19, 1
      %s330 = smul.addr %s329, 4
      %s331 = smul.addr %s330, 8
      %s332 = scalar_lea.vmem %s8, %s331
      %p333 = scmp.lt.s32.totalorder %s19, 1
      %s334 = scalar_select %p333, %s19, 1
      %s335 = smul.addr %s334, 4
      %s336 = scalar_lea.vmem %s0, %s335
      %p337 = scmp.lt.s32.totalorder %s19, 1
      %s338 = scalar_select %p337, %s19, 1
      %s339 = smul.addr %s338, 4
      %s340 = scalar_lea.vmem %s1, %s339
      %p341 = scmp.lt.s32.totalorder %s19, 1
      %s342 = scalar_select %p341, %s19, 1
      %s343 = smul.addr %s342, 4
      %s344 = scalar_lea.vmem %s2, %s343
      %p345 = scmp.lt.s32.totalorder %s19, 1
      %s346 = scalar_select %p345, %s19, 1
      %s347 = smul.addr %s346, 4
      %s348 = scalar_lea.vmem %s3, %s347
      %p349 = scmp.lt.s32.totalorder %s19, 1
      %s350 = scalar_select %p349, %s19, 1
      %s351 = smul.addr %s350, 4
      %s352 = smul.addr %s351, 8
      %s353 = scalar_lea.vmem %s8, %s352
      %v354 = vld [vmem:[%s336] sm:$0xf]
      %v355 = vld [vmem:[%s344] sm:$0xf]
      %357 = vset.pattern.permute.xlu0 0
      %358 = vperm.xlu0 %357, %v355
      %v359 = vpop.permute.xlu0 %358
      %v361 = vmul.f32 %v354, %v359
      %v362 = vld [vmem:[%s348] sm:$0xf]
      %364 = vset.pattern.permute.xlu0 0
      %365 = vperm.xlu0 %364, %v362
      %v366 = vpop.permute.xlu0 %365
      %v368 = vadd.f32 %v361, %v366
      %v369 = vld [vmem:[%s340] sm:$0xf]
      %v370 = vld [vmem:[%s4] sm:$0xff]
      %v371 = vld [vmem:[%s4 + $0x8] sm:$0xff]
      %v372 = vld [vmem:[%s5] sm:$0xff]
      %v373 = vld [vmem:[%s5 + $0x8] sm:$0xff]
      %vm374 = vcmask 31744
      %v376 = vsel %vm374, %v372, 0
      %v379 = vsel %vm374, %v373, 0
      %vm381 = vcmask 1043456
      %v383 = vsel %vm381, %v369, 0
      %385 = vmatprep.subr.mxu0 0.0
      %386 = vmatpush1.msra.mxu0 %v383
      %387 = vmatprep.subr.mxu0 0.0
      %388 = vmatpush1.msra.mxu0 0.0
      %389 = vmatprep.subr.mxu0 0.0
      %390 = vmatpush1.msra.mxu0 0.0
      %391 = vmatprep.subr.mxu0 0.0
      %392 = vmatpush1.msra.mxu0 0.0
      %393 = vmatprep.subr.mxu0 0.0
      %394 = vmatpush1.msra.mxu0 0.0
      %395 = vmatprep.subr.mxu0 0.0
      %396 = vmatpush1.msra.mxu0 0.0
      %397 = vmatprep.subr.mxu0 0.0
      %398 = vmatpush1.msra.mxu0 0.0
      %399 = vmatprep.subr.mxu0 0.0
      %400 = vmatpush1.msra.mxu0 0.0
      %401 = vmatprep.subr.mxu0 0.0
      %402 = vmatpush1.msra.mxu0 0.0
      %403 = vmatprep.subr.mxu0 0.0
      %404 = vmatpush1.msra.mxu0 0.0
      %405 = vmatprep.subr.mxu0 0.0
      %406 = vmatpush1.msra.mxu0 0.0
      %407 = vmatprep.subr.mxu0 0.0
      %408 = vmatpush1.msra.mxu0 0.0
      %409 = vmatprep.subr.mxu0 0.0
      %410 = vmatpush1.msra.mxu0 0.0
      %411 = vmatprep.subr.mxu0 0.0
      %412 = vmatpush1.msra.mxu0 0.0
      %413 = vmatprep.subr.mxu0 0.0
      %414 = vmatpush1.msra.mxu0 0.0
      %415 = vmatprep.subr.mxu0 0.0
      %416 = vmatpush1.msra.mxu0 0.0
      %417 = vmatprep.subr.mxu0 0.0
      %418 = vmatpush1.msra.mxu0 0.0
      %419 = vmatprep.subr.mxu0 0.0
      %420 = vmatpush1.msra.mxu0 0.0
      %421 = vmatprep.subr.mxu0 0.0
      %422 = vmatpush1.msra.mxu0 0.0
      %423 = vmatprep.subr.mxu0 0.0
      %424 = vmatpush1.msra.mxu0 0.0
      %425 = vmatprep.subr.mxu0 0.0
      %426 = vmatpush1.msra.mxu0 0.0
      %427 = vmatprep.subr.mxu0 0.0
      %428 = vmatpush1.msra.mxu0 0.0
      %429 = vmatprep.subr.mxu0 0.0
      %430 = vmatpush1.msra.mxu0 0.0
      %431 = vmatprep.subr.mxu0 0.0
      %432 = vmatpush1.msra.mxu0 0.0
      %433 = vmatprep.subr.mxu0 0.0
      %434 = vmatpush1.msra.mxu0 0.0
      %435 = vmatprep.subr.mxu0 0.0
      %436 = vmatpush1.msra.mxu0 0.0
      %437 = vmatprep.subr.mxu0 0.0
      %438 = vmatpush1.msra.mxu0 0.0
      %439 = vmatprep.subr.mxu0 0.0
      %440 = vmatpush1.msra.mxu0 0.0
      %441 = vmatprep.subr.mxu0 0.0
      %442 = vmatpush1.msra.mxu0 0.0
      %443 = vmatprep.subr.mxu0 0.0
      %444 = vmatpush1.msra.mxu0 0.0
      %445 = vmatprep.subr.mxu0 0.0
      %446 = vmatpush1.msra.mxu0 0.0
      %447 = vmatprep.subr.mxu0 0.0
      %448 = vmatpush1.msra.mxu0 0.0
      %449 = vmatprep.mubr.f32.mxu0 0.0
      %450 = vmatmul.mubr.f32.gmra.mrb[0].mxu0 %v376
      %v451 = vpop.f32.mrb[0].mxu0
      %v452 = vadd.f32 0.0, %v451
      %v453 = vpop.f32.mrb[0].mxu0
      %454 = vmatprep.mubr.f32.mxu0 0.0
      %455 = vmatmul.mubr.f32.gmra.mrb[0].mxu0 %v379
      %v456 = vpop.f32.mrb[0].mxu0
      %v457 = vadd.f32 0.0, %v456
      %v458 = vpop.f32.mrb[0].mxu0
      %459 = vdwg.mxu0
      %v461 = vsel %vm374, %v370, 0
      %v464 = vsel %vm374, %v371, 0
      %v467 = vsel %vm381, %v368, 0
      %469 = vmatprep.subr.mxu0 0.0
      %470 = vmatpush1.msra.mxu0 %v467
      %471 = vmatprep.subr.mxu0 0.0
      %472 = vmatpush1.msra.mxu0 0.0
      %473 = vmatprep.subr.mxu0 0.0
      %474 = vmatpush1.msra.mxu0 0.0
      %475 = vmatprep.subr.mxu0 0.0
      %476 = vmatpush1.msra.mxu0 0.0
      %477 = vmatprep.subr.mxu0 0.0
      %478 = vmatpush1.msra.mxu0 0.0
      %479 = vmatprep.subr.mxu0 0.0
      %480 = vmatpush1.msra.mxu0 0.0
      %481 = vmatprep.subr.mxu0 0.0
      %482 = vmatpush1.msra.mxu0 0.0
      %483 = vmatprep.subr.mxu0 0.0
      %484 = vmatpush1.msra.mxu0 0.0
      %485 = vmatprep.subr.mxu0 0.0
      %486 = vmatpush1.msra.mxu0 0.0
      %487 = vmatprep.subr.mxu0 0.0
      %488 = vmatpush1.msra.mxu0 0.0
      %489 = vmatprep.subr.mxu0 0.0
      %490 = vmatpush1.msra.mxu0 0.0
      %491 = vmatprep.subr.mxu0 0.0
      %492 = vmatpush1.msra.mxu0 0.0
      %493 = vmatprep.subr.mxu0 0.0
      %494 = vmatpush1.msra.mxu0 0.0
      %495 = vmatprep.subr.mxu0 0.0
      %496 = vmatpush1.msra.mxu0 0.0
      %497 = vmatprep.subr.mxu0 0.0
      %498 = vmatpush1.msra.mxu0 0.0
      %499 = vmatprep.subr.mxu0 0.0
      %500 = vmatpush1.msra.mxu0 0.0
      %501 = vmatprep.subr.mxu0 0.0
      %502 = vmatpush1.msra.mxu0 0.0
      %503 = vmatprep.subr.mxu0 0.0
      %504 = vmatpush1.msra.mxu0 0.0
      %505 = vmatprep.subr.mxu0 0.0
      %506 = vmatpush1.msra.mxu0 0.0
      %507 = vmatprep.subr.mxu0 0.0
      %508 = vmatpush1.msra.mxu0 0.0
      %509 = vmatprep.subr.mxu0 0.0
      %510 = vmatpush1.msra.mxu0 0.0
      %511 = vmatprep.subr.mxu0 0.0
      %512 = vmatpush1.msra.mxu0 0.0
      %513 = vmatprep.subr.mxu0 0.0
      %514 = vmatpush1.msra.mxu0 0.0
      %515 = vmatprep.subr.mxu0 0.0
      %516 = vmatpush1.msra.mxu0 0.0
      %517 = vmatprep.subr.mxu0 0.0
      %518 = vmatpush1.msra.mxu0 0.0
      %519 = vmatprep.subr.mxu0 0.0
      %520 = vmatpush1.msra.mxu0 0.0
      %521 = vmatprep.subr.mxu0 0.0
      %522 = vmatpush1.msra.mxu0 0.0
      %523 = vmatprep.subr.mxu0 0.0
      %524 = vmatpush1.msra.mxu0 0.0
      %525 = vmatprep.subr.mxu0 0.0
      %526 = vmatpush1.msra.mxu0 0.0
      %527 = vmatprep.subr.mxu0 0.0
      %528 = vmatpush1.msra.mxu0 0.0
      %529 = vmatprep.subr.mxu0 0.0
      %530 = vmatpush1.msra.mxu0 0.0
      %531 = vmatprep.subr.mxu0 0.0
      %532 = vmatpush1.msra.mxu0 0.0
      %533 = vmatprep.mubr.f32.mxu0 0.0
      %534 = vmatmul.mubr.f32.gmra.mrb[0].mxu0 %v461
      %v535 = vpop.f32.mrb[0].mxu0
      %v536 = vadd.f32 %v452, %v535
      %v537 = vpop.f32.mrb[0].mxu0
      %538 = vmatprep.mubr.f32.mxu0 0.0
      %539 = vmatmul.mubr.f32.gmra.mrb[0].mxu0 %v464
      %v540 = vpop.f32.mrb[0].mxu0
      %v541 = vadd.f32 %v457, %v540
      %v542 = vpop.f32.mrb[0].mxu0
      %543 = vdwg.mxu0
      %v544 = vld [vmem:[%s7] sm:$0xff]
      %v545 = vld [vmem:[%s7 + $0x8] sm:$0xff]
      %v546 = vld [vmem:[%s7 + $0x10] sm:$0xff]
      %v547 = vld [vmem:[%s7 + $0x18] sm:$0xff]
      %v548 = vld [vmem:[%s7 + $0x20] sm:$0xff]
      %v549 = vld [vmem:[%s7 + $0x28] sm:$0xff]
      %v550 = vld [vmem:[%s7 + $0x30] sm:$0xff]
      %v551 = vld [vmem:[%s7 + $0x38] sm:$0xff]
      %v552 = vld [vmem:[%s7 + $0x40] sm:$0xff]
      %v553 = vld [vmem:[%s7 + $0x48] sm:$0xff]
      %v554 = vld [vmem:[%s7 + $0x50] sm:$0xff]
      %v555 = vld [vmem:[%s7 + $0x58] sm:$0xff]
      %v556 = vld [vmem:[%s7 + $0x60] sm:$0xff]
      %v557 = vld [vmem:[%s7 + $0x68] sm:$0xff]
      %v558 = vld [vmem:[%s7 + $0x70] sm:$0xff]
      %v559 = vld [vmem:[%s7 + $0x78] sm:$0xff]
      %s560 = scalar_lea.vmem %s4, 16
      %v561 = vld [vmem:[%s560] sm:$0xff]
      %v562 = vld [vmem:[%s560 + $0x8] sm:$0xff]
      %s563 = scalar_lea.vmem %s5, 16
      %v564 = vld [vmem:[%s563] sm:$0xff]
      %v565 = vld [vmem:[%s563 + $0x8] sm:$0xff]
      %v567 = vsel %vm374, %v564, 0
      %v570 = vsel %vm374, %v565, 0
      %572 = vmatprep.subr.mxu0 0.0
      %573 = vmatpush1.msra.mxu0 %v383
      %574 = vmatprep.subr.mxu0 0.0
      %575 = vmatpush1.msra.mxu0 0.0
      %576 = vmatprep.subr.mxu0 0.0
      %577 = vmatpush1.msra.mxu0 0.0
      %578 = vmatprep.subr.mxu0 0.0
      %579 = vmatpush1.msra.mxu0 0.0
      %580 = vmatprep.subr.mxu0 0.0
      %581 = vmatpush1.msra.mxu0 0.0
      %582 = vmatprep.subr.mxu0 0.0
      %583 = vmatpush1.msra.mxu0 0.0
      %584 = vmatprep.subr.mxu0 0.0
      %585 = vmatpush1.msra.mxu0 0.0
      %586 = vmatprep.subr.mxu0 0.0
      %587 = vmatpush1.msra.mxu0 0.0
      %588 = vmatprep.subr.mxu0 0.0
      %589 = vmatpush1.msra.mxu0 0.0
      %590 = vmatprep.subr.mxu0 0.0
      %591 = vmatpush1.msra.mxu0 0.0
      %592 = vmatprep.subr.mxu0 0.0
      %593 = vmatpush1.msra.mxu0 0.0
      %594 = vmatprep.subr.mxu0 0.0
      %595 = vmatpush1.msra.mxu0 0.0
      %596 = vmatprep.subr.mxu0 0.0
      %597 = vmatpush1.msra.mxu0 0.0
      %598 = vmatprep.subr.mxu0 0.0
      %599 = vmatpush1.msra.mxu0 0.0
      %600 = vmatprep.subr.mxu0 0.0
      %601 = vmatpush1.msra.mxu0 0.0
      %602 = vmatprep.subr.mxu0 0.0
      %603 = vmatpush1.msra.mxu0 0.0
      %604 = vmatprep.subr.mxu0 0.0
      %605 = vmatpush1.msra.mxu0 0.0
      %606 = vmatprep.subr.mxu0 0.0
      %607 = vmatpush1.msra.mxu0 0.0
      %608 = vmatprep.subr.mxu0 0.0
      %609 = vmatpush1.msra.mxu0 0.0
      %610 = vmatprep.subr.mxu0 0.0
      %611 = vmatpush1.msra.mxu0 0.0
      %612 = vmatprep.subr.mxu0 0.0
      %613 = vmatpush1.msra.mxu0 0.0
      %614 = vmatprep.subr.mxu0 0.0
      %615 = vmatpush1.msra.mxu0 0.0
      %616 = vmatprep.subr.mxu0 0.0
      %617 = vmatpush1.msra.mxu0 0.0
      %618 = vmatprep.subr.mxu0 0.0
      %619 = vmatpush1.msra.mxu0 0.0
      %620 = vmatprep.subr.mxu0 0.0
      %621 = vmatpush1.msra.mxu0 0.0
      %622 = vmatprep.subr.mxu0 0.0
      %623 = vmatpush1.msra.mxu0 0.0
      %624 = vmatprep.subr.mxu0 0.0
      %625 = vmatpush1.msra.mxu0 0.0
      %626 = vmatprep.subr.mxu0 0.0
      %627 = vmatpush1.msra.mxu0 0.0
      %628 = vmatprep.subr.mxu0 0.0
      %629 = vmatpush1.msra.mxu0 0.0
      %630 = vmatprep.subr.mxu0 0.0
      %631 = vmatpush1.msra.mxu0 0.0
      %632 = vmatprep.subr.mxu0 0.0
      %633 = vmatpush1.msra.mxu0 0.0
      %634 = vmatprep.subr.mxu0 0.0
      %635 = vmatpush1.msra.mxu0 0.0
      %636 = vmatprep.mubr.f32.mxu0 0.0
      %637 = vmatmul.mubr.f32.gmra.mrb[0].mxu0 %v567
      %v638 = vpop.f32.mrb[0].mxu0
      %v639 = vadd.f32 0.0, %v638
      %v640 = vpop.f32.mrb[0].mxu0
      %641 = vmatprep.mubr.f32.mxu0 0.0
      %642 = vmatmul.mubr.f32.gmra.mrb[0].mxu0 %v570
      %v643 = vpop.f32.mrb[0].mxu0
      %v644 = vadd.f32 0.0, %v643
      %v645 = vpop.f32.mrb[0].mxu0
      %646 = vdwg.mxu0
      %v648 = vsel %vm374, %v561, 0
      %v651 = vsel %vm374, %v562, 0
      %653 = vmatprep.subr.mxu0 0.0
      %654 = vmatpush1.msra.mxu0 %v467
      %655 = vmatprep.subr.mxu0 0.0
      %656 = vmatpush1.msra.mxu0 0.0
      %657 = vmatprep.subr.mxu0 0.0
      %658 = vmatpush1.msra.mxu0 0.0
      %659 = vmatprep.subr.mxu0 0.0
      %660 = vmatpush1.msra.mxu0 0.0
      %661 = vmatprep.subr.mxu0 0.0
      %662 = vmatpush1.msra.mxu0 0.0
      %663 = vmatprep.subr.mxu0 0.0
      %664 = vmatpush1.msra.mxu0 0.0
      %665 = vmatprep.subr.mxu0 0.0
      %666 = vmatpush1.msra.mxu0 0.0
      %667 = vmatprep.subr.mxu0 0.0
      %668 = vmatpush1.msra.mxu0 0.0
      %669 = vmatprep.subr.mxu0 0.0
      %670 = vmatpush1.msra.mxu0 0.0
      %671 = vmatprep.subr.mxu0 0.0
      %672 = vmatpush1.msra.mxu0 0.0
      %673 = vmatprep.subr.mxu0 0.0
      %674 = vmatpush1.msra.mxu0 0.0
      %675 = vmatprep.subr.mxu0 0.0
      %676 = vmatpush1.msra.mxu0 0.0
      %677 = vmatprep.subr.mxu0 0.0
      %678 = vmatpush1.msra.mxu0 0.0
      %679 = vmatprep.subr.mxu0 0.0
      %680 = vmatpush1.msra.mxu0 0.0
      %681 = vmatprep.subr.mxu0 0.0
      %682 = vmatpush1.msra.mxu0 0.0
      %683 = vmatprep.subr.mxu0 0.0
      %684 = vmatpush1.msra.mxu0 0.0
      %685 = vmatprep.subr.mxu0 0.0
      %686 = vmatpush1.msra.mxu0 0.0
      %687 = vmatprep.subr.mxu0 0.0
      %688 = vmatpush1.msra.mxu0 0.0
      %689 = vmatprep.subr.mxu0 0.0
      %690 = vmatpush1.msra.mxu0 0.0
      %691 = vmatprep.subr.mxu0 0.0
      %692 = vmatpush1.msra.mxu0 0.0
      %693 = vmatprep.subr.mxu0 0.0
      %694 = vmatpush1.msra.mxu0 0.0
      %695 = vmatprep.subr.mxu0 0.0
      %696 = vmatpush1.msra.mxu0 0.0
      %697 = vmatprep.subr.mxu0 0.0
      %698 = vmatpush1.msra.mxu0 0.0
      %699 = vmatprep.subr.mxu0 0.0
      %700 = vmatpush1.msra.mxu0 0.0
      %701 = vmatprep.subr.mxu0 0.0
      %702 = vmatpush1.msra.mxu0 0.0
      %703 = vmatprep.subr.mxu0 0.0
      %704 = vmatpush1.msra.mxu0 0.0
      %705 = vmatprep.subr.mxu0 0.0
      %706 = vmatpush1.msra.mxu0 0.0
      %707 = vmatprep.subr.mxu0 0.0
      %708 = vmatpush1.msra.mxu0 0.0
      %709 = vmatprep.subr.mxu0 0.0
      %710 = vmatpush1.msra.mxu0 0.0
      %711 = vmatprep.subr.mxu0 0.0
      %712 = vmatpush1.msra.mxu0 0.0
      %713 = vmatprep.subr.mxu0 0.0
      %714 = vmatpush1.msra.mxu0 0.0
      %715 = vmatprep.subr.mxu0 0.0
      %716 = vmatpush1.msra.mxu0 0.0
      %717 = vmatprep.mubr.f32.mxu0 0.0
      %718 = vmatmul.mubr.f32.gmra.mrb[0].mxu0 %v648
      %v719 = vpop.f32.mrb[0].mxu0
      %v720 = vadd.f32 %v639, %v719
      %v721 = vpop.f32.mrb[0].mxu0
      %722 = vmatprep.mubr.f32.mxu0 0.0
      %723 = vmatmul.mubr.f32.gmra.mrb[0].mxu0 %v651
      %v724 = vpop.f32.mrb[0].mxu0
      %v725 = vadd.f32 %v644, %v724
      %v726 = vpop.f32.mrb[0].mxu0
      %727 = vdwg.mxu0
      %s728 = scalar_lea.vmem %s7, 128
      %v729 = vld [vmem:[%s728] sm:$0xff]
      %v730 = vld [vmem:[%s728 + $0x8] sm:$0xff]
      %v731 = vld [vmem:[%s728 + $0x10] sm:$0xff]
      %v732 = vld [vmem:[%s728 + $0x18] sm:$0xff]
      %v733 = vld [vmem:[%s728 + $0x20] sm:$0xff]
      %v734 = vld [vmem:[%s728 + $0x28] sm:$0xff]
      %v735 = vld [vmem:[%s728 + $0x30] sm:$0xff]
      %v736 = vld [vmem:[%s728 + $0x38] sm:$0xff]
      %v737 = vld [vmem:[%s728 + $0x40] sm:$0xff]
      %v738 = vld [vmem:[%s728 + $0x48] sm:$0xff]
      %v739 = vld [vmem:[%s728 + $0x50] sm:$0xff]
      %v740 = vld [vmem:[%s728 + $0x58] sm:$0xff]
      %v741 = vld [vmem:[%s728 + $0x60] sm:$0xff]
      %v742 = vld [vmem:[%s728 + $0x68] sm:$0xff]
      %v743 = vld [vmem:[%s728 + $0x70] sm:$0xff]
      %v744 = vld [vmem:[%s728 + $0x78] sm:$0xff]
      %vm745 = vcmask 523264
      %v747 = vsel %vm745, %v720, 0
      %v750 = vsel %vm745, %v725, 0
      %752 = vmatprep.subr.mxu0 %v730
      %753 = vmatpush1.msra.mxu0 %v729
      %754 = vmatprep.subr.mxu0 %v732
      %755 = vmatpush1.msra.mxu0 %v731
      %756 = vmatprep.subr.mxu0 %v734
      %757 = vmatpush1.msra.mxu0 %v733
      %758 = vmatprep.subr.mxu0 %v736
      %759 = vmatpush1.msra.mxu0 %v735
      %760 = vmatprep.subr.mxu0 %v738
      %761 = vmatpush1.msra.mxu0 %v737
      %762 = vmatprep.subr.mxu0 %v740
      %763 = vmatpush1.msra.mxu0 %v739
      %764 = vmatprep.subr.mxu0 %v742
      %765 = vmatpush1.msra.mxu0 %v741
      %766 = vmatprep.subr.mxu0 %v744
      %767 = vmatpush1.msra.mxu0 %v743
      %768 = vmatprep.subr.mxu0 0.0
      %769 = vmatpush1.msra.mxu0 0.0
      %770 = vmatprep.subr.mxu0 0.0
      %771 = vmatpush1.msra.mxu0 0.0
      %772 = vmatprep.subr.mxu0 0.0
      %773 = vmatpush1.msra.mxu0 0.0
      %774 = vmatprep.subr.mxu0 0.0
      %775 = vmatpush1.msra.mxu0 0.0
      %776 = vmatprep.subr.mxu0 0.0
      %777 = vmatpush1.msra.mxu0 0.0
      %778 = vmatprep.subr.mxu0 0.0
      %779 = vmatpush1.msra.mxu0 0.0
      %780 = vmatprep.subr.mxu0 0.0
      %781 = vmatpush1.msra.mxu0 0.0
      %782 = vmatprep.subr.mxu0 0.0
      %783 = vmatpush1.msra.mxu0 0.0
      %784 = vmatprep.subr.mxu0 0.0
      %785 = vmatpush1.msra.mxu0 0.0
      %786 = vmatprep.subr.mxu0 0.0
      %787 = vmatpush1.msra.mxu0 0.0
      %788 = vmatprep.subr.mxu0 0.0
      %789 = vmatpush1.msra.mxu0 0.0
      %790 = vmatprep.subr.mxu0 0.0
      %791 = vmatpush1.msra.mxu0 0.0
      %792 = vmatprep.subr.mxu0 0.0
      %793 = vmatpush1.msra.mxu0 0.0
      %794 = vmatprep.subr.mxu0 0.0
      %795 = vmatpush1.msra.mxu0 0.0
      %796 = vmatprep.subr.mxu0 0.0
      %797 = vmatpush1.msra.mxu0 0.0
      %798 = vmatprep.subr.mxu0 0.0
      %799 = vmatpush1.msra.mxu0 0.0
      %800 = vmatprep.subr.mxu0 0.0
      %801 = vmatpush1.msra.mxu0 0.0
      %802 = vmatprep.subr.mxu0 0.0
      %803 = vmatpush1.msra.mxu0 0.0
      %804 = vmatprep.subr.mxu0 0.0
      %805 = vmatpush1.msra.mxu0 0.0
      %806 = vmatprep.subr.mxu0 0.0
      %807 = vmatpush1.msra.mxu0 0.0
      %808 = vmatprep.subr.mxu0 0.0
      %809 = vmatpush1.msra.mxu0 0.0
      %810 = vmatprep.subr.mxu0 0.0
      %811 = vmatpush1.msra.mxu0 0.0
      %812 = vmatprep.subr.mxu0 0.0
      %813 = vmatpush1.msra.mxu0 0.0
      %814 = vmatprep.subr.mxu0 0.0
      %815 = vmatpush1.msra.mxu0 0.0
      %816 = vmatprep.mubr.f32.mxu0 0.0
      %817 = vmatmul.mubr.f32.gmra.mrb[0].mxu0 %v747
      %v818 = vpop.f32.mrb[0].mxu0
      %v819 = vadd.f32 0.0, %v818
      %v820 = vpop.f32.mrb[0].mxu0
      %v821 = vadd.f32 0.0, %v820
      %822 = vmatprep.mubr.f32.mxu0 0.0
      %823 = vmatmul.mubr.f32.gmra.mrb[0].mxu0 %v750
      %v824 = vpop.f32.mrb[0].mxu0
      %v825 = vadd.f32 0.0, %v824
      %v826 = vpop.f32.mrb[0].mxu0
      %v827 = vadd.f32 0.0, %v826
      %828 = vdwg.mxu0
      %v830 = vsel %vm745, %v536, 0
      %v833 = vsel %vm745, %v541, 0
      %835 = vmatprep.subr.mxu0 %v545
      %836 = vmatpush1.msra.mxu0 %v544
      %837 = vmatprep.subr.mxu0 %v547
      %838 = vmatpush1.msra.mxu0 %v546
      %839 = vmatprep.subr.mxu0 %v549
      %840 = vmatpush1.msra.mxu0 %v548
      %841 = vmatprep.subr.mxu0 %v551
      %842 = vmatpush1.msra.mxu0 %v550
      %843 = vmatprep.subr.mxu0 %v553
      %844 = vmatpush1.msra.mxu0 %v552
      %845 = vmatprep.subr.mxu0 %v555
      %846 = vmatpush1.msra.mxu0 %v554
      %847 = vmatprep.subr.mxu0 %v557
      %848 = vmatpush1.msra.mxu0 %v556
      %849 = vmatprep.subr.mxu0 %v559
      %850 = vmatpush1.msra.mxu0 %v558
      %851 = vmatprep.subr.mxu0 0.0
      %852 = vmatpush1.msra.mxu0 0.0
      %853 = vmatprep.subr.mxu0 0.0
      %854 = vmatpush1.msra.mxu0 0.0
      %855 = vmatprep.subr.mxu0 0.0
      %856 = vmatpush1.msra.mxu0 0.0
      %857 = vmatprep.subr.mxu0 0.0
      %858 = vmatpush1.msra.mxu0 0.0
      %859 = vmatprep.subr.mxu0 0.0
      %860 = vmatpush1.msra.mxu0 0.0
      %861 = vmatprep.subr.mxu0 0.0
      %862 = vmatpush1.msra.mxu0 0.0
      %863 = vmatprep.subr.mxu0 0.0
      %864 = vmatpush1.msra.mxu0 0.0
      %865 = vmatprep.subr.mxu0 0.0
      %866 = vmatpush1.msra.mxu0 0.0
      %867 = vmatprep.subr.mxu0 0.0
      %868 = vmatpush1.msra.mxu0 0.0
      %869 = vmatprep.subr.mxu0 0.0
      %870 = vmatpush1.msra.mxu0 0.0
      %871 = vmatprep.subr.mxu0 0.0
      %872 = vmatpush1.msra.mxu0 0.0
      %873 = vmatprep.subr.mxu0 0.0
      %874 = vmatpush1.msra.mxu0 0.0
      %875 = vmatprep.subr.mxu0 0.0
      %876 = vmatpush1.msra.mxu0 0.0
      %877 = vmatprep.subr.mxu0 0.0
      %878 = vmatpush1.msra.mxu0 0.0
      %879 = vmatprep.subr.mxu0 0.0
      %880 = vmatpush1.msra.mxu0 0.0
      %881 = vmatprep.subr.mxu0 0.0
      %882 = vmatpush1.msra.mxu0 0.0
      %883 = vmatprep.subr.mxu0 0.0
      %884 = vmatpush1.msra.mxu0 0.0
      %885 = vmatprep.subr.mxu0 0.0
      %886 = vmatpush1.msra.mxu0 0.0
      %887 = vmatprep.subr.mxu0 0.0
      %888 = vmatpush1.msra.mxu0 0.0
      %889 = vmatprep.subr.mxu0 0.0
      %890 = vmatpush1.msra.mxu0 0.0
      %891 = vmatprep.subr.mxu0 0.0
      %892 = vmatpush1.msra.mxu0 0.0
      %893 = vmatprep.subr.mxu0 0.0
      %894 = vmatpush1.msra.mxu0 0.0
      %895 = vmatprep.subr.mxu0 0.0
      %896 = vmatpush1.msra.mxu0 0.0
      %897 = vmatprep.subr.mxu0 0.0
      %898 = vmatpush1.msra.mxu0 0.0
      %899 = vmatprep.mubr.f32.mxu0 0.0
      %900 = vmatmul.mubr.f32.gmra.mrb[0].mxu0 %v830
      %v901 = vpop.f32.mrb[0].mxu0
      %v902 = vadd.f32 %v819, %v901
      %v903 = vpop.f32.mrb[0].mxu0
      %v904 = vadd.f32 %v821, %v903
      %905 = vmatprep.mubr.f32.mxu0 0.0
      %906 = vmatmul.mubr.f32.gmra.mrb[0].mxu0 %v833
      %v907 = vpop.f32.mrb[0].mxu0
      %v908 = vadd.f32 %v825, %v907
      %v909 = vpop.f32.mrb[0].mxu0
      %v910 = vadd.f32 %v827, %v909
      %911 = vdwg.mxu0
      %s912 = scalar_lea.vmem %s4, 32
      %v913 = vld [vmem:[%s912] sm:$0xff]
      %v914 = vld [vmem:[%s912 + $0x8] sm:$0xff]
      %s915 = scalar_lea.vmem %s5, 32
      %v916 = vld [vmem:[%s915] sm:$0xff]
      %v917 = vld [vmem:[%s915 + $0x8] sm:$0xff]
      %v919 = vsel %vm374, %v916, 0
      %v922 = vsel %vm374, %v917, 0
      %924 = vmatprep.subr.mxu0 0.0
      %925 = vmatpush1.msra.mxu0 %v383
      %926 = vmatprep.subr.mxu0 0.0
      %927 = vmatpush1.msra.mxu0 0.0
      %928 = vmatprep.subr.mxu0 0.0
      %929 = vmatpush1.msra.mxu0 0.0
      %930 = vmatprep.subr.mxu0 0.0
      %931 = vmatpush1.msra.mxu0 0.0
      %932 = vmatprep.subr.mxu0 0.0
      %933 = vmatpush1.msra.mxu0 0.0
      %934 = vmatprep.subr.mxu0 0.0
      %935 = vmatpush1.msra.mxu0 0.0
      %936 = vmatprep.subr.mxu0 0.0
      %937 = vmatpush1.msra.mxu0 0.0
      %938 = vmatprep.subr.mxu0 0.0
      %939 = vmatpush1.msra.mxu0 0.0
      %940 = vmatprep.subr.mxu0 0.0
      %941 = vmatpush1.msra.mxu0 0.0
      %942 = vmatprep.subr.mxu0 0.0
      %943 = vmatpush1.msra.mxu0 0.0
      %944 = vmatprep.subr.mxu0 0.0
      %945 = vmatpush1.msra.mxu0 0.0
      %946 = vmatprep.subr.mxu0 0.0
      %947 = vmatpush1.msra.mxu0 0.0
      %948 = vmatprep.subr.mxu0 0.0
      %949 = vmatpush1.msra.mxu0 0.0
      %950 = vmatprep.subr.mxu0 0.0
      %951 = vmatpush1.msra.mxu0 0.0
      %952 = vmatprep.subr.mxu0 0.0
      %953 = vmatpush1.msra.mxu0 0.0
      %954 = vmatprep.subr.mxu0 0.0
      %955 = vmatpush1.msra.mxu0 0.0
      %956 = vmatprep.subr.mxu0 0.0
      %957 = vmatpush1.msra.mxu0 0.0
      %958 = vmatprep.subr.mxu0 0.0
      %959 = vmatpush1.msra.mxu0 0.0
      %960 = vmatprep.subr.mxu0 0.0
      %961 = vmatpush1.msra.mxu0 0.0
      %962 = vmatprep.subr.mxu0 0.0
      %963 = vmatpush1.msra.mxu0 0.0
      %964 = vmatprep.subr.mxu0 0.0
      %965 = vmatpush1.msra.mxu0 0.0
      %966 = vmatprep.subr.mxu0 0.0
      %967 = vmatpush1.msra.mxu0 0.0
      %968 = vmatprep.subr.mxu0 0.0
      %969 = vmatpush1.msra.mxu0 0.0
      %970 = vmatprep.subr.mxu0 0.0
      %971 = vmatpush1.msra.mxu0 0.0
      %972 = vmatprep.subr.mxu0 0.0
      %973 = vmatpush1.msra.mxu0 0.0
      %974 = vmatprep.subr.mxu0 0.0
      %975 = vmatpush1.msra.mxu0 0.0
      %976 = vmatprep.subr.mxu0 0.0
      %977 = vmatpush1.msra.mxu0 0.0
      %978 = vmatprep.subr.mxu0 0.0
      %979 = vmatpush1.msra.mxu0 0.0
      %980 = vmatprep.subr.mxu0 0.0
      %981 = vmatpush1.msra.mxu0 0.0
      %982 = vmatprep.subr.mxu0 0.0
      %983 = vmatpush1.msra.mxu0 0.0
      %984 = vmatprep.subr.mxu0 0.0
      %985 = vmatpush1.msra.mxu0 0.0
      %986 = vmatprep.subr.mxu0 0.0
      %987 = vmatpush1.msra.mxu0 0.0
      %988 = vmatprep.mubr.f32.mxu0 0.0
      %989 = vmatmul.mubr.f32.gmra.mrb[0].mxu0 %v919
      %v990 = vpop.f32.mrb[0].mxu0
      %v991 = vadd.f32 0.0, %v990
      %v992 = vpop.f32.mrb[0].mxu0
      %993 = vmatprep.mubr.f32.mxu0 0.0
      %994 = vmatmul.mubr.f32.gmra.mrb[0].mxu0 %v922
      %v995 = vpop.f32.mrb[0].mxu0
      %v996 = vadd.f32 0.0, %v995
      %v997 = vpop.f32.mrb[0].mxu0
      %998 = vdwg.mxu0
      %v1000 = vsel %vm374, %v913, 0
      %v1003 = vsel %vm374, %v914, 0
      %1005 = vmatprep.subr.mxu0 0.0
      %1006 = vmatpush1.msra.mxu0 %v467
      %1007 = vmatprep.subr.mxu0 0.0
      %1008 = vmatpush1.msra.mxu0 0.0
      %1009 = vmatprep.subr.mxu0 0.0
      %1010 = vmatpush1.msra.mxu0 0.0
      %1011 = vmatprep.subr.mxu0 0.0
      %1012 = vmatpush1.msra.mxu0 0.0
      %1013 = vmatprep.subr.mxu0 0.0
      %1014 = vmatpush1.msra.mxu0 0.0
      %1015 = vmatprep.subr.mxu0 0.0
      %1016 = vmatpush1.msra.mxu0 0.0
      %1017 = vmatprep.subr.mxu0 0.0
      %1018 = vmatpush1.msra.mxu0 0.0
      %1019 = vmatprep.subr.mxu0 0.0
      %1020 = vmatpush1.msra.mxu0 0.0
      %1021 = vmatprep.subr.mxu0 0.0
      %1022 = vmatpush1.msra.mxu0 0.0
      %1023 = vmatprep.subr.mxu0 0.0
      %1024 = vmatpush1.msra.mxu0 0.0
      %1025 = vmatprep.subr.mxu0 0.0
      %1026 = vmatpush1.msra.mxu0 0.0
      %1027 = vmatprep.subr.mxu0 0.0
      %1028 = vmatpush1.msra.mxu0 0.0
      %1029 = vmatprep.subr.mxu0 0.0
      %1030 = vmatpush1.msra.mxu0 0.0
      %1031 = vmatprep.subr.mxu0 0.0
      %1032 = vmatpush1.msra.mxu0 0.0
      %1033 = vmatprep.subr.mxu0 0.0
      %1034 = vmatpush1.msra.mxu0 0.0
      %1035 = vmatprep.subr.mxu0 0.0
      %1036 = vmatpush1.msra.mxu0 0.0
      %1037 = vmatprep.subr.mxu0 0.0
      %1038 = vmatpush1.msra.mxu0 0.0
      %1039 = vmatprep.subr.mxu0 0.0
      %1040 = vmatpush1.msra.mxu0 0.0
      %1041 = vmatprep.subr.mxu0 0.0
      %1042 = vmatpush1.msra.mxu0 0.0
      %1043 = vmatprep.subr.mxu0 0.0
      %1044 = vmatpush1.msra.mxu0 0.0
      %1045 = vmatprep.subr.mxu0 0.0
      %1046 = vmatpush1.msra.mxu0 0.0
      %1047 = vmatprep.subr.mxu0 0.0
      %1048 = vmatpush1.msra.mxu0 0.0
      %1049 = vmatprep.subr.mxu0 0.0
      %1050 = vmatpush1.msra.mxu0 0.0
      %1051 = vmatprep.subr.mxu0 0.0
      %1052 = vmatpush1.msra.mxu0 0.0
      %1053 = vmatprep.subr.mxu0 0.0
      %1054 = vmatpush1.msra.mxu0 0.0
      %1055 = vmatprep.subr.mxu0 0.0
      %1056 = vmatpush1.msra.mxu0 0.0
      %1057 = vmatprep.subr.mxu0 0.0
      %1058 = vmatpush1.msra.mxu0 0.0
      %1059 = vmatprep.subr.mxu0 0.0
      %1060 = vmatpush1.msra.mxu0 0.0
      %1061 = vmatprep.subr.mxu0 0.0
      %1062 = vmatpush1.msra.mxu0 0.0
      %1063 = vmatprep.subr.mxu0 0.0
      %1064 = vmatpush1.msra.mxu0 0.0
      %1065 = vmatprep.subr.mxu0 0.0
      %1066 = vmatpush1.msra.mxu0 0.0
      %1067 = vmatprep.subr.mxu0 0.0
      %1068 = vmatpush1.msra.mxu0 0.0
      %1069 = vmatprep.mubr.f32.mxu0 0.0
      %1070 = vmatmul.mubr.f32.gmra.mrb[0].mxu0 %v1000
      %v1071 = vpop.f32.mrb[0].mxu0
      %v1072 = vadd.f32 %v991, %v1071
      %v1073 = vpop.f32.mrb[0].mxu0
      %1074 = vmatprep.mubr.f32.mxu0 0.0
      %1075 = vmatmul.mubr.f32.gmra.mrb[0].mxu0 %v1003
      %v1076 = vpop.f32.mrb[0].mxu0
      %v1077 = vadd.f32 %v996, %v1076
      %v1078 = vpop.f32.mrb[0].mxu0
      %1079 = vdwg.mxu0
      %s1080 = scalar_lea.vmem %s7, 256
      %v1081 = vld [vmem:[%s1080] sm:$0xff]
      %v1082 = vld [vmem:[%s1080 + $0x8] sm:$0xff]
      %v1083 = vld [vmem:[%s1080 + $0x10] sm:$0xff]
      %v1084 = vld [vmem:[%s1080 + $0x18] sm:$0xff]
      %v1085 = vld [vmem:[%s1080 + $0x20] sm:$0xff]
      %v1086 = vld [vmem:[%s1080 + $0x28] sm:$0xff]
      %v1087 = vld [vmem:[%s1080 + $0x30] sm:$0xff]
      %v1088 = vld [vmem:[%s1080 + $0x38] sm:$0xff]
      %v1089 = vld [vmem:[%s1080 + $0x40] sm:$0xff]
      %v1090 = vld [vmem:[%s1080 + $0x48] sm:$0xff]
      %v1091 = vld [vmem:[%s1080 + $0x50] sm:$0xff]
      %v1092 = vld [vmem:[%s1080 + $0x58] sm:$0xff]
      %v1093 = vld [vmem:[%s1080 + $0x60] sm:$0xff]
      %v1094 = vld [vmem:[%s1080 + $0x68] sm:$0xff]
      %v1095 = vld [vmem:[%s1080 + $0x70] sm:$0xff]
      %v1096 = vld [vmem:[%s1080 + $0x78] sm:$0xff]
      %v1098 = vsel %vm745, %v1072, 0
      %v1101 = vsel %vm745, %v1077, 0
      %1103 = vmatprep.subr.mxu0 %v1082
      %1104 = vmatpush1.msra.mxu0 %v1081
      %1105 = vmatprep.subr.mxu0 %v1084
      %1106 = vmatpush1.msra.mxu0 %v1083
      %1107 = vmatprep.subr.mxu0 %v1086
      %1108 = vmatpush1.msra.mxu0 %v1085
      %1109 = vmatprep.subr.mxu0 %v1088
      %1110 = vmatpush1.msra.mxu0 %v1087
      %1111 = vmatprep.subr.mxu0 %v1090
      %1112 = vmatpush1.msra.mxu0 %v1089
      %1113 = vmatprep.subr.mxu0 %v1092
      %1114 = vmatpush1.msra.mxu0 %v1091
      %1115 = vmatprep.subr.mxu0 %v1094
      %1116 = vmatpush1.msra.mxu0 %v1093
      %1117 = vmatprep.subr.mxu0 %v1096
      %1118 = vmatpush1.msra.mxu0 %v1095
      %1119 = vmatprep.subr.mxu0 0.0
      %1120 = vmatpush1.msra.mxu0 0.0
      %1121 = vmatprep.subr.mxu0 0.0
      %1122 = vmatpush1.msra.mxu0 0.0
      %1123 = vmatprep.subr.mxu0 0.0
      %1124 = vmatpush1.msra.mxu0 0.0
      %1125 = vmatprep.subr.mxu0 0.0
      %1126 = vmatpush1.msra.mxu0 0.0
      %1127 = vmatprep.subr.mxu0 0.0
      %1128 = vmatpush1.msra.mxu0 0.0
      %1129 = vmatprep.subr.mxu0 0.0
      %1130 = vmatpush1.msra.mxu0 0.0
      %1131 = vmatprep.subr.mxu0 0.0
      %1132 = vmatpush1.msra.mxu0 0.0
      %1133 = vmatprep.subr.mxu0 0.0
      %1134 = vmatpush1.msra.mxu0 0.0
      %1135 = vmatprep.subr.mxu0 0.0
      %1136 = vmatpush1.msra.mxu0 0.0
      %1137 = vmatprep.subr.mxu0 0.0
      %1138 = vmatpush1.msra.mxu0 0.0
      %1139 = vmatprep.subr.mxu0 0.0
      %1140 = vmatpush1.msra.mxu0 0.0
      %1141 = vmatprep.subr.mxu0 0.0
      %1142 = vmatpush1.msra.mxu0 0.0
      %1143 = vmatprep.subr.mxu0 0.0
      %1144 = vmatpush1.msra.mxu0 0.0
      %1145 = vmatprep.subr.mxu0 0.0
      %1146 = vmatpush1.msra.mxu0 0.0
      %1147 = vmatprep.subr.mxu0 0.0
      %1148 = vmatpush1.msra.mxu0 0.0
      %1149 = vmatprep.subr.mxu0 0.0
      %1150 = vmatpush1.msra.mxu0 0.0
      %1151 = vmatprep.subr.mxu0 0.0
      %1152 = vmatpush1.msra.mxu0 0.0
      %1153 = vmatprep.subr.mxu0 0.0
      %1154 = vmatpush1.msra.mxu0 0.0
      %1155 = vmatprep.subr.mxu0 0.0
      %1156 = vmatpush1.msra.mxu0 0.0
      %1157 = vmatprep.subr.mxu0 0.0
      %1158 = vmatpush1.msra.mxu0 0.0
      %1159 = vmatprep.subr.mxu0 0.0
      %1160 = vmatpush1.msra.mxu0 0.0
      %1161 = vmatprep.subr.mxu0 0.0
      %1162 = vmatpush1.msra.mxu0 0.0
      %1163 = vmatprep.subr.mxu0 0.0
      %1164 = vmatpush1.msra.mxu0 0.0
      %1165 = vmatprep.subr.mxu0 0.0
      %1166 = vmatpush1.msra.mxu0 0.0
      %1167 = vmatprep.mubr.f32.mxu0 0.0
      %1168 = vmatmul.mubr.f32.gmra.mrb[0].mxu0 %v1098
      %v1169 = vpop.f32.mrb[0].mxu0
      %v1170 = vadd.f32 0.0, %v1169
      %v1171 = vpop.f32.mrb[0].mxu0
      %v1172 = vadd.f32 0.0, %v1171
      %1173 = vmatprep.mubr.f32.mxu0 0.0
      %1174 = vmatmul.mubr.f32.gmra.mrb[0].mxu0 %v1101
      %v1175 = vpop.f32.mrb[0].mxu0
      %v1176 = vadd.f32 0.0, %v1175
      %v1177 = vpop.f32.mrb[0].mxu0
      %v1178 = vadd.f32 0.0, %v1177
      %1179 = vdwg.mxu0
      %v1180 = vadd.f32 %v902, %v1170
      %v1181 = vadd.f32 %v904, %v1172
      %v1182 = vadd.f32 %v908, %v1176
      %v1183 = vadd.f32 %v910, %v1178
      %s1184 = scalar_lea.vmem %s4, 48
      %v1185 = vld [vmem:[%s1184] sm:$0xff]
      %v1186 = vld [vmem:[%s1184 + $0x8] sm:$0xff]
      %s1187 = scalar_lea.vmem %s5, 48
      %v1188 = vld [vmem:[%s1187] sm:$0xff]
      %v1189 = vld [vmem:[%s1187 + $0x8] sm:$0xff]
      %v1191 = vsel %vm374, %v1188, 0
      %v1194 = vsel %vm374, %v1189, 0
      %1196 = vmatprep.subr.mxu0 0.0
      %1197 = vmatpush1.msra.mxu0 %v383
      %1198 = vmatprep.subr.mxu0 0.0
      %1199 = vmatpush1.msra.mxu0 0.0
      %1200 = vmatprep.subr.mxu0 0.0
      %1201 = vmatpush1.msra.mxu0 0.0
      %1202 = vmatprep.subr.mxu0 0.0
      %1203 = vmatpush1.msra.mxu0 0.0
      %1204 = vmatprep.subr.mxu0 0.0
      %1205 = vmatpush1.msra.mxu0 0.0
      %1206 = vmatprep.subr.mxu0 0.0
      %1207 = vmatpush1.msra.mxu0 0.0
      %1208 = vmatprep.subr.mxu0 0.0
      %1209 = vmatpush1.msra.mxu0 0.0
      %1210 = vmatprep.subr.mxu0 0.0
      %1211 = vmatpush1.msra.mxu0 0.0
      %1212 = vmatprep.subr.mxu0 0.0
      %1213 = vmatpush1.msra.mxu0 0.0
      %1214 = vmatprep.subr.mxu0 0.0
      %1215 = vmatpush1.msra.mxu0 0.0
      %1216 = vmatprep.subr.mxu0 0.0
      %1217 = vmatpush1.msra.mxu0 0.0
      %1218 = vmatprep.subr.mxu0 0.0
      %1219 = vmatpush1.msra.mxu0 0.0
      %1220 = vmatprep.subr.mxu0 0.0
      %1221 = vmatpush1.msra.mxu0 0.0
      %1222 = vmatprep.subr.mxu0 0.0
      %1223 = vmatpush1.msra.mxu0 0.0
      %1224 = vmatprep.subr.mxu0 0.0
      %1225 = vmatpush1.msra.mxu0 0.0
      %1226 = vmatprep.subr.mxu0 0.0
      %1227 = vmatpush1.msra.mxu0 0.0
      %1228 = vmatprep.subr.mxu0 0.0
      %1229 = vmatpush1.msra.mxu0 0.0
      %1230 = vmatprep.subr.mxu0 0.0
      %1231 = vmatpush1.msra.mxu0 0.0
      %1232 = vmatprep.subr.mxu0 0.0
      %1233 = vmatpush1.msra.mxu0 0.0
      %1234 = vmatprep.subr.mxu0 0.0
      %1235 = vmatpush1.msra.mxu0 0.0
      %1236 = vmatprep.subr.mxu0 0.0
      %1237 = vmatpush1.msra.mxu0 0.0
      %1238 = vmatprep.subr.mxu0 0.0
      %1239 = vmatpush1.msra.mxu0 0.0
      %1240 = vmatprep.subr.mxu0 0.0
      %1241 = vmatpush1.msra.mxu0 0.0
      %1242 = vmatprep.subr.mxu0 0.0
      %1243 = vmatpush1.msra.mxu0 0.0
      %1244 = vmatprep.subr.mxu0 0.0
      %1245 = vmatpush1.msra.mxu0 0.0
      %1246 = vmatprep.subr.mxu0 0.0
      %1247 = vmatpush1.msra.mxu0 0.0
      %1248 = vmatprep.subr.mxu0 0.0
      %1249 = vmatpush1.msra.mxu0 0.0
      %1250 = vmatprep.subr.mxu0 0.0
      %1251 = vmatpush1.msra.mxu0 0.0
      %1252 = vmatprep.subr.mxu0 0.0
      %1253 = vmatpush1.msra.mxu0 0.0
      %1254 = vmatprep.subr.mxu0 0.0
      %1255 = vmatpush1.msra.mxu0 0.0
      %1256 = vmatprep.subr.mxu0 0.0
      %1257 = vmatpush1.msra.mxu0 0.0
      %1258 = vmatprep.subr.mxu0 0.0
      %1259 = vmatpush1.msra.mxu0 0.0
      %1260 = vmatprep.mubr.f32.mxu0 0.0
      %1261 = vmatmul.mubr.f32.gmra.mrb[0].mxu0 %v1191
      %v1262 = vpop.f32.mrb[0].mxu0
      %v1263 = vadd.f32 0.0, %v1262
      %v1264 = vpop.f32.mrb[0].mxu0
      %1265 = vmatprep.mubr.f32.mxu0 0.0
      %1266 = vmatmul.mubr.f32.gmra.mrb[0].mxu0 %v1194
      %v1267 = vpop.f32.mrb[0].mxu0
      %v1268 = vadd.f32 0.0, %v1267
      %v1269 = vpop.f32.mrb[0].mxu0
      %1270 = vdwg.mxu0
      %v1272 = vsel %vm374, %v1185, 0
      %v1275 = vsel %vm374, %v1186, 0
      %1277 = vmatprep.subr.mxu0 0.0
      %1278 = vmatpush1.msra.mxu0 %v467
      %1279 = vmatprep.subr.mxu0 0.0
      %1280 = vmatpush1.msra.mxu0 0.0
      %1281 = vmatprep.subr.mxu0 0.0
      %1282 = vmatpush1.msra.mxu0 0.0
      %1283 = vmatprep.subr.mxu0 0.0
      %1284 = vmatpush1.msra.mxu0 0.0
      %1285 = vmatprep.subr.mxu0 0.0
      %1286 = vmatpush1.msra.mxu0 0.0
      %1287 = vmatprep.subr.mxu0 0.0
      %1288 = vmatpush1.msra.mxu0 0.0
      %1289 = vmatprep.subr.mxu0 0.0
      %1290 = vmatpush1.msra.mxu0 0.0
      %1291 = vmatprep.subr.mxu0 0.0
      %1292 = vmatpush1.msra.mxu0 0.0
      %1293 = vmatprep.subr.mxu0 0.0
      %1294 = vmatpush1.msra.mxu0 0.0
      %1295 = vmatprep.subr.mxu0 0.0
      %1296 = vmatpush1.msra.mxu0 0.0
      %1297 = vmatprep.subr.mxu0 0.0
      %1298 = vmatpush1.msra.mxu0 0.0
      %1299 = vmatprep.subr.mxu0 0.0
      %1300 = vmatpush1.msra.mxu0 0.0
      %1301 = vmatprep.subr.mxu0 0.0
      %1302 = vmatpush1.msra.mxu0 0.0
      %1303 = vmatprep.subr.mxu0 0.0
      %1304 = vmatpush1.msra.mxu0 0.0
      %1305 = vmatprep.subr.mxu0 0.0
      %1306 = vmatpush1.msra.mxu0 0.0
      %1307 = vmatprep.subr.mxu0 0.0
      %1308 = vmatpush1.msra.mxu0 0.0
      %1309 = vmatprep.subr.mxu0 0.0
      %1310 = vmatpush1.msra.mxu0 0.0
      %1311 = vmatprep.subr.mxu0 0.0
      %1312 = vmatpush1.msra.mxu0 0.0
      %1313 = vmatprep.subr.mxu0 0.0
      %1314 = vmatpush1.msra.mxu0 0.0
      %1315 = vmatprep.subr.mxu0 0.0
      %1316 = vmatpush1.msra.mxu0 0.0
      %1317 = vmatprep.subr.mxu0 0.0
      %1318 = vmatpush1.msra.mxu0 0.0
      %1319 = vmatprep.subr.mxu0 0.0
      %1320 = vmatpush1.msra.mxu0 0.0
      %1321 = vmatprep.subr.mxu0 0.0
      %1322 = vmatpush1.msra.mxu0 0.0
      %1323 = vmatprep.subr.mxu0 0.0
      %1324 = vmatpush1.msra.mxu0 0.0
      %1325 = vmatprep.subr.mxu0 0.0
      %1326 = vmatpush1.msra.mxu0 0.0
      %1327 = vmatprep.subr.mxu0 0.0
      %1328 = vmatpush1.msra.mxu0 0.0
      %1329 = vmatprep.subr.mxu0 0.0
      %1330 = vmatpush1.msra.mxu0 0.0
      %1331 = vmatprep.subr.mxu0 0.0
      %1332 = vmatpush1.msra.mxu0 0.0
      %1333 = vmatprep.subr.mxu0 0.0
      %1334 = vmatpush1.msra.mxu0 0.0
      %1335 = vmatprep.subr.mxu0 0.0
      %1336 = vmatpush1.msra.mxu0 0.0
      %1337 = vmatprep.subr.mxu0 0.0
      %1338 = vmatpush1.msra.mxu0 0.0
      %1339 = vmatprep.subr.mxu0 0.0
      %1340 = vmatpush1.msra.mxu0 0.0
      %1341 = vmatprep.mubr.f32.mxu0 0.0
      %1342 = vmatmul.mubr.f32.gmra.mrb[0].mxu0 %v1272
      %v1343 = vpop.f32.mrb[0].mxu0
      %v1344 = vadd.f32 %v1263, %v1343
      %v1345 = vpop.f32.mrb[0].mxu0
      %1346 = vmatprep.mubr.f32.mxu0 0.0
      %1347 = vmatmul.mubr.f32.gmra.mrb[0].mxu0 %v1275
      %v1348 = vpop.f32.mrb[0].mxu0
      %v1349 = vadd.f32 %v1268, %v1348
      %v1350 = vpop.f32.mrb[0].mxu0
      %1351 = vdwg.mxu0
      %s1352 = scalar_lea.vmem %s7, 384
      %v1353 = vld [vmem:[%s1352] sm:$0xff]
      %v1354 = vld [vmem:[%s1352 + $0x8] sm:$0xff]
      %v1355 = vld [vmem:[%s1352 + $0x10] sm:$0xff]
      %v1356 = vld [vmem:[%s1352 + $0x18] sm:$0xff]
      %v1357 = vld [vmem:[%s1352 + $0x20] sm:$0xff]
      %v1358 = vld [vmem:[%s1352 + $0x28] sm:$0xff]
      %v1359 = vld [vmem:[%s1352 + $0x30] sm:$0xff]
      %v1360 = vld [vmem:[%s1352 + $0x38] sm:$0xff]
      %v1361 = vld [vmem:[%s1352 + $0x40] sm:$0xff]
      %v1362 = vld [vmem:[%s1352 + $0x48] sm:$0xff]
      %v1363 = vld [vmem:[%s1352 + $0x50] sm:$0xff]
      %v1364 = vld [vmem:[%s1352 + $0x58] sm:$0xff]
      %v1365 = vld [vmem:[%s1352 + $0x60] sm:$0xff]
      %v1366 = vld [vmem:[%s1352 + $0x68] sm:$0xff]
      %v1367 = vld [vmem:[%s1352 + $0x70] sm:$0xff]
      %v1368 = vld [vmem:[%s1352 + $0x78] sm:$0xff]
      %v1370 = vsel %vm745, %v1344, 0
      %v1373 = vsel %vm745, %v1349, 0
      %1375 = vmatprep.subr.mxu0 %v1354
      %1376 = vmatpush1.msra.mxu0 %v1353
      %1377 = vmatprep.subr.mxu0 %v1356
      %1378 = vmatpush1.msra.mxu0 %v1355
      %1379 = vmatprep.subr.mxu0 %v1358
      %1380 = vmatpush1.msra.mxu0 %v1357
      %1381 = vmatprep.subr.mxu0 %v1360
      %1382 = vmatpush1.msra.mxu0 %v1359
      %1383 = vmatprep.subr.mxu0 %v1362
      %1384 = vmatpush1.msra.mxu0 %v1361
      %1385 = vmatprep.subr.mxu0 %v1364
      %1386 = vmatpush1.msra.mxu0 %v1363
      %1387 = vmatprep.subr.mxu0 %v1366
      %1388 = vmatpush1.msra.mxu0 %v1365
      %1389 = vmatprep.subr.mxu0 %v1368
      %1390 = vmatpush1.msra.mxu0 %v1367
      %1391 = vmatprep.subr.mxu0 0.0
      %1392 = vmatpush1.msra.mxu0 0.0
      %1393 = vmatprep.subr.mxu0 0.0
      %1394 = vmatpush1.msra.mxu0 0.0
      %1395 = vmatprep.subr.mxu0 0.0
      %1396 = vmatpush1.msra.mxu0 0.0
      %1397 = vmatprep.subr.mxu0 0.0
      %1398 = vmatpush1.msra.mxu0 0.0
      %1399 = vmatprep.subr.mxu0 0.0
      %1400 = vmatpush1.msra.mxu0 0.0
      %1401 = vmatprep.subr.mxu0 0.0
      %1402 = vmatpush1.msra.mxu0 0.0
      %1403 = vmatprep.subr.mxu0 0.0
      %1404 = vmatpush1.msra.mxu0 0.0
      %1405 = vmatprep.subr.mxu0 0.0
      %1406 = vmatpush1.msra.mxu0 0.0
      %1407 = vmatprep.subr.mxu0 0.0
      %1408 = vmatpush1.msra.mxu0 0.0
      %1409 = vmatprep.subr.mxu0 0.0
      %1410 = vmatpush1.msra.mxu0 0.0
      %1411 = vmatprep.subr.mxu0 0.0
      %1412 = vmatpush1.msra.mxu0 0.0
      %1413 = vmatprep.subr.mxu0 0.0
      %1414 = vmatpush1.msra.mxu0 0.0
      %1415 = vmatprep.subr.mxu0 0.0
      %1416 = vmatpush1.msra.mxu0 0.0
      %1417 = vmatprep.subr.mxu0 0.0
      %1418 = vmatpush1.msra.mxu0 0.0
      %1419 = vmatprep.subr.mxu0 0.0
      %1420 = vmatpush1.msra.mxu0 0.0
      %1421 = vmatprep.subr.mxu0 0.0
      %1422 = vmatpush1.msra.mxu0 0.0
      %1423 = vmatprep.subr.mxu0 0.0
      %1424 = vmatpush1.msra.mxu0 0.0
      %1425 = vmatprep.subr.mxu0 0.0
      %1426 = vmatpush1.msra.mxu0 0.0
      %1427 = vmatprep.subr.mxu0 0.0
      %1428 = vmatpush1.msra.mxu0 0.0
      %1429 = vmatprep.subr.mxu0 0.0
      %1430 = vmatpush1.msra.mxu0 0.0
      %1431 = vmatprep.subr.mxu0 0.0
      %1432 = vmatpush1.msra.mxu0 0.0
      %1433 = vmatprep.subr.mxu0 0.0
      %1434 = vmatpush1.msra.mxu0 0.0
      %1435 = vmatprep.subr.mxu0 0.0
      %1436 = vmatpush1.msra.mxu0 0.0
      %1437 = vmatprep.subr.mxu0 0.0
      %1438 = vmatpush1.msra.mxu0 0.0
      %1439 = vmatprep.mubr.f32.mxu0 0.0
      %1440 = vmatmul.mubr.f32.gmra.mrb[0].mxu0 %v1370
      %v1441 = vpop.f32.mrb[0].mxu0
      %v1442 = vadd.f32 0.0, %v1441
      %v1443 = vpop.f32.mrb[0].mxu0
      %v1444 = vadd.f32 0.0, %v1443
      %1445 = vmatprep.mubr.f32.mxu0 0.0
      %1446 = vmatmul.mubr.f32.gmra.mrb[0].mxu0 %v1373
      %v1447 = vpop.f32.mrb[0].mxu0
      %v1448 = vadd.f32 0.0, %v1447
      %v1449 = vpop.f32.mrb[0].mxu0
      %v1450 = vadd.f32 0.0, %v1449
      %1451 = vdwg.mxu0
      %v1452 = vadd.f32 %v1180, %v1442
      %v1453 = vadd.f32 %v1181, %v1444
      %v1454 = vadd.f32 %v1182, %v1448
      %v1455 = vadd.f32 %v1183, %v1450
      %v1456 = vld [vmem:[%s6] sm:$0xff]
      %v1457 = vld [vmem:[%s6 + $0x8] sm:$0xff]
      %1459 = vset.pattern.permute.xlu0 0
      %1460 = vperm.xlu0 %1459, %v1456
      %v1461 = vpop.permute.xlu0 %1460
      %1464 = vset.pattern.permute.xlu0 0
      %1465 = vperm.xlu0 %1464, %v1457
      %v1466 = vpop.permute.xlu0 %1465
      %v1468 = vadd.f32 %v1452, %v1461
      %v1469 = vadd.f32 %v1453, %v1461
      %v1470 = vadd.f32 %v1454, %v1466
      %v1471 = vadd.f32 %v1455, %v1466
      %v1472 = vmul.f32 %v1468, 0.5
      %v1473 = vmul.f32 %v1469, 0.5
      %v1474 = vmul.f32 %v1470, 0.5
      %v1475 = vmul.f32 %v1471, 0.5
      %v1476 = vmul.f32 %v1468, 0.70710677
      %v1477 = vmul.f32 %v1469, 0.70710677
      %v1478 = vmul.f32 %v1470, 0.70710677
      %v1479 = vmul.f32 %v1471, 0.70710677
      %vm1480 = vcmp.ge.f32.partialorder %v1476, 0.0
      %vm1481 = vcmp.ge.f32.partialorder %v1477, 0.0
      %vm1482 = vcmp.ge.f32.partialorder %v1478, 0.0
      %vm1483 = vcmp.ge.f32.partialorder %v1479, 0.0
      %v1484 = vsel %vm1480, 1.0, -1.0
      %v1485 = vsel %vm1481, 1.0, -1.0
      %v1486 = vsel %vm1482, 1.0, -1.0
      %v1487 = vsel %vm1483, 1.0, -1.0
      %v1488 = vand.u32 2147483647, %v1476
      %v1489 = vand.u32 2147483647, %v1477
      %v1490 = vand.u32 2147483647, %v1478
      %v1491 = vand.u32 2147483647, %v1479
      %v1492 = vmul.f32 %v1488, 0.3275911
      %v1493 = vmul.f32 %v1489, 0.3275911
      %v1494 = vmul.f32 %v1490, 0.3275911
      %v1495 = vmul.f32 %v1491, 0.3275911
      %v1496 = vadd.f32 %v1492, 1.0
      %v1497 = vadd.f32 %v1493, 1.0
      %v1498 = vadd.f32 %v1494, 1.0
      %v1499 = vadd.f32 %v1495, 1.0
      %v1500 = vrcp.pop %v1496
      %v1501 = vrcp.pop %v1497
      %v1502 = vrcp.pop %v1498
      %v1503 = vrcp.pop %v1499
      %v1504 = vmul.f32 %v1500, 1.0614054
      %v1505 = vmul.f32 %v1501, 1.0614054
      %v1506 = vmul.f32 %v1502, 1.0614054
      %v1507 = vmul.f32 %v1503, 1.0614054
      %v1508 = vadd.f32 %v1504, -1.4531521
      %v1509 = vadd.f32 %v1505, -1.4531521
      %v1510 = vadd.f32 %v1506, -1.4531521
      %v1511 = vadd.f32 %v1507, -1.4531521
      %v1512 = vmul.f32 %v1508, %v1500
      %v1513 = vmul.f32 %v1509, %v1501
      %v1514 = vmul.f32 %v1510, %v1502
      %v1515 = vmul.f32 %v1511, %v1503
      %v1516 = vadd.f32 %v1512, 1.4214138
      %v1517 = vadd.f32 %v1513, 1.4214138
      %v1518 = vadd.f32 %v1514, 1.4214138
      %v1519 = vadd.f32 %v1515, 1.4214138
      %v1520 = vmul.f32 %v1516, %v1500
      %v1521 = vmul.f32 %v1517, %v1501
      %v1522 = vmul.f32 %v1518, %v1502
      %v1523 = vmul.f32 %v1519, %v1503
      %v1524 = vadd.f32 %v1520, -0.28449672
      %v1525 = vadd.f32 %v1521, -0.28449672
      %v1526 = vadd.f32 %v1522, -0.28449672
      %v1527 = vadd.f32 %v1523, -0.28449672
      %v1528 = vmul.f32 %v1524, %v1500
      %v1529 = vmul.f32 %v1525, %v1501
      %v1530 = vmul.f32 %v1526, %v1502
      %v1531 = vmul.f32 %v1527, %v1503
      %v1532 = vadd.f32 %v1528, 0.2548296
      %v1533 = vadd.f32 %v1529, 0.2548296
      %v1534 = vadd.f32 %v1530, 0.2548296
      %v1535 = vadd.f32 %v1531, 0.2548296
      %v1536 = vmul.f32 %v1532, %v1500
      %v1537 = vmul.f32 %v1533, %v1501
      %v1538 = vmul.f32 %v1534, %v1502
      %v1539 = vmul.f32 %v1535, %v1503
      %v1540 = vsub.f32 0.0, %v1488
      %v1541 = vsub.f32 0.0, %v1489
      %v1542 = vsub.f32 0.0, %v1490
      %v1543 = vsub.f32 0.0, %v1491
      %v1544 = vmul.f32 %v1540, %v1488
      %v1545 = vmul.f32 %v1541, %v1489
      %v1546 = vmul.f32 %v1542, %v1490
      %v1547 = vmul.f32 %v1543, %v1491
      %v1548 = vmul.f32 %v1544, 1.442695
      %v1549 = vpow.pop %v1548
      %v1550 = vmul.f32 %v1545, 1.442695
      %v1551 = vpow.pop %v1550
      %v1552 = vmul.f32 %v1546, 1.442695
      %v1553 = vpow.pop %v1552
      %v1554 = vmul.f32 %v1547, 1.442695
      %v1555 = vpow.pop %v1554
      %v1556 = vmul.f32 %v1536, %v1549
      %v1557 = vmul.f32 %v1537, %v1551
      %v1558 = vmul.f32 %v1538, %v1553
      %v1559 = vmul.f32 %v1539, %v1555
      %v1560 = vsub.f32 1.0, %v1556
      %v1561 = vsub.f32 1.0, %v1557
      %v1562 = vsub.f32 1.0, %v1558
      %v1563 = vsub.f32 1.0, %v1559
      %v1564 = vmul.f32 %v1484, %v1560
      %v1565 = vmul.f32 %v1485, %v1561
      %v1566 = vmul.f32 %v1486, %v1562
      %v1567 = vmul.f32 %v1487, %v1563
      %v1568 = vadd.f32 %v1564, 1.0
      %v1569 = vadd.f32 %v1565, 1.0
      %v1570 = vadd.f32 %v1566, 1.0
      %v1571 = vadd.f32 %v1567, 1.0
      %v1572 = vmul.f32 %v1472, %v1568
      %v1573 = vmul.f32 %v1473, %v1569
      %v1574 = vmul.f32 %v1474, %v1570
      %v1575 = vmul.f32 %v1475, %v1571
      %1576 = vst [vmem:[%s353] sm:$0xff] %v1572
      %1577 = vst [vmem:[%s353 + $0x8] sm:$0xff] %v1573
      %1578 = vst [vmem:[%s353 + $0x10] sm:$0xff] %v1574
      %1579 = vst [vmem:[%s353 + $0x18] sm:$0xff] %v1575
      %p1580 = scmp.lt.s32.totalorder %s19, 1
      %s1581 = scalar_select %p1580, %s19, 1
      %s1582 = smul.addr %s1581, 4
      %s1583 = smul.addr %s1582, 8
      %s1584 = scalar_lea.vmem %s8, %s1583
      // Predicated region
      $region53: #{unet_upsample_forward.4} parent=51 // pred_check
        %p1585 = pneg %p225
      $region54: #{unet_upsample_forward.4} parent=51 // pred_check_branch
        %1587 = sbr.rel (%p1585) target = $region56
      $region55: #{unet_upsample_forward.4} parent=51 // pred_region
        _
      $region56: #{unet_upsample_forward.4} parent=51 // pred_fallthru
        _
    $region52: #{unet_upsample_forward.4} parent=5 // pred_fallthru
      _
    %p1588 = scmp.le.s32.totalorder 2, %s14
    // Predicated region
    $region57: #{unet_upsample_forward.4} parent=5 // pred_check
      %p1589 = pneg %p1588
    $region58: #{unet_upsample_forward.4} parent=5 // pred_check_branch
      %1591 = sbr.rel (%p1589) target = $region60
    $region59: #{unet_upsample_forward.4} parent=5 // pred_region
      %s1592 = ssub.s32 %s14, 2
      // Predicated region
      $region61: #{unet_upsample_forward.4} parent=59 // pred_check
        %p1593 = pneg %p231
      $region62: #{unet_upsample_forward.4} parent=59 // pred_check_branch
        %1595 = sbr.rel (%p1593) target = $region64
      $region63: #{unet_upsample_forward.4} parent=59 // pred_region
        %p1596 = scmp.lt.s32.totalorder %s20, 1
        %s1597 = scalar_select %p1596, %s20, 1
        %s1598 = smul.addr %s1597, 4
        %s1599 = smul.addr %s1598, 8
        %s1600 = scalar_lea.vmem %s8, %s1599
      $region64: #{unet_upsample_forward.4} parent=59 // pred_fallthru
        _
    $region60: #{unet_upsample_forward.4} parent=5 // pred_fallthru
      _
  $region6: #{unet_upsample_forward.4} parent=0 // loop_footer
    %s18 = sadd.s32 1, %s14
  $region7: #{unet_upsample_forward.4} parent=0 // loop_footer_branch
    %13 = sbr.rel target = $region3
  $region8: #{unet_upsample_forward.4} parent=0 // loop_exit
    _

// kernel: unet_upsample_forward.5
$region0: #{unet_upsample_forward.5}
  #allocation0 [shape = 'u32[]', space=smem, size = 0x4, offset = 0x4, fixed_abs, tag = 'smem constant byte address 0x4 - core index']
  #allocation1 [shape = 'u32[144,128]{1,0:T(1,128)}', space=vmem, size = 0x12000, scoped, tag = 'internal scratch']
  #allocation2 [shape = 'f32[144,256]{1,0:T(8,128)}', space=vmem, size = 0x24000, scoped, tag = 'scratch operand']
  %s0 = inlined_call_operand.vmem [shape: f32[2,16,256], index: 0, kind: input, shape index: {}]
  %s1 = inlined_call_operand.vmem [shape: f32[16,144], index: 1, kind: input, shape index: {}]
  %s2 = inlined_call_operand.vmem [shape: f32[16,144], index: 2, kind: input, shape index: {}]
  %s3 = inlined_call_operand.vmem [shape: f32[16,1], index: 3, kind: input, shape index: {}]
  %s4 = inlined_call_operand.vmem [shape: f32[16,1], index: 4, kind: input, shape index: {}]
  %s5 = inlined_call_operand.vmem [shape: f32[16,1], index: 5, kind: input, shape index: {}]
  %s6 = inlined_call_operand.vmem [shape: f32[16,1], index: 6, kind: input, shape index: {}]
  %s7 = inlined_call_operand.vmem [shape: f32[16,1], index: 7, kind: input, shape index: {}]
  %s8 = inlined_call_operand.vmem [shape: f32[16,1], index: 8, kind: input, shape index: {}]
  %s9 = inlined_call_operand.vmem [shape: f32[16,16], index: 9, kind: input, shape index: {}]
  %s10 = inlined_call_operand.vmem [shape: f32[16,16], index: 10, kind: input, shape index: {}]
  %s11 = inlined_call_operand.vmem [shape: f32[9,1,256], index: 11, kind: input, shape index: {}]
  %s12 = inlined_call_operand.vmem [shape: f32[2,16,256], index: 12, kind: output, shape index: {}]
  %s13 = sld [smem:[#allocation0]]
  $region81: #{unet_upsample_forward.5} parent=0
    _
  %s15 = ssub.s32 1, %s13
  %s16 = scalar_select 0, %s15, %s13
  loop: start=0, step=1, limit=4
  $region2: #{unet_upsample_forward.5} parent=0 // loop_pre_header
    _
  $region3: #{unet_upsample_forward.5} parent=0 // loop_header
    %s18 = sphi 0, %s22
    %p19 = scmp.ge.s32.totalorder %s18, 4
    %s28 = sphi 0, %s30
    %s31 = sphi 0, %s28
    %s32 = sphi 0, %s31
    %s48 = sphi 0, %s32
    %s52 = sphi 0, %s52
    %s54 = sphi 0, %s52
    %s55 = sphi 0, %s54
    %s69 = sphi 0, %s55
    %s73 = sphi 0, %s73
    %s75 = sphi 0, %s73
    %s76 = sphi 0, %s75
    %s90 = sphi 0, %s76
    %s94 = sphi 0, %s94
    %s96 = sphi 0, %s94
    %s97 = sphi 0, %s96
    %s111 = sphi 0, %s97
    %s115 = sphi 0, %s115
    %s117 = sphi 0, %s115
    %s118 = sphi 0, %s117
    %s132 = sphi 0, %s118
    %s136 = sphi 0, %s136
    %s138 = sphi 0, %s136
    %s139 = sphi 0, %s138
    %s153 = sphi 0, %s139
    %s157 = sphi 0, %s157
    %s159 = sphi 0, %s157
    %s160 = sphi 0, %s159
    %s174 = sphi 0, %s160
    %s178 = sphi 0, %s178
    %s180 = sphi 0, %s178
    %s181 = sphi 0, %s180
    %s195 = sphi 0, %s181
    %s199 = sphi 0, %s199
    %s201 = sphi 0, %s199
    %s202 = sphi 0, %s201
    %s216 = sphi 0, %s202
    %s220 = sphi 0, %s220
    %s222 = sphi 0, %s220
    %s223 = sphi 0, %s222
    %s237 = sphi 0, %s223
    %s241 = sphi 0, %s241
    %s243 = sphi 0, %s241
    %s244 = sphi 0, %s243
    %s258 = sphi 0, %s244
    %s262 = sphi 0, %s262
    %s264 = sphi 0, %s262
    %s265 = sphi 0, %s264
    %s279 = sphi 0, %s265
    %s285 = sphi 0, %s287
    %s288 = sphi 0, %s285
    %s289 = sphi 0, %s288
    %s305 = sphi 0, %s289
  $region4: #{unet_upsample_forward.5} parent=0 // loop_header_branch
    %21 = sbr.rel (%p19) target = $region8
  $region5: #{unet_upsample_forward.5} parent=0 // loop_body
    %s23 = ssub.s32 %s18, 1
    %s24 = ssub.s32 %s18, 2
    %s25 = sadd.s32 %s18, 1
    %s26 = ssub.s32 %s18, %s25
    %p27 = scmp.eq.s32.totalorder %s26, 0
    %s29 = sadd.s32 %s28, 1
    %s30 = scalar_select %p27, %s28, %s29
    %p33 = pneg %p27
    %p34 = scmp.eq.s32.totalorder %s18, 1
    %p35 = por %p33, %p34
    %p36 = scmp.ne.s32.totalorder %s28, %s31
    %p37 = scmp.eq.s32.totalorder %s18, 0
    %p38 = por %p36, %p37
    %p39 = scmp.ne.s32.totalorder %s28, %s31
    %p40 = scmp.eq.s32.totalorder %s23, 1
    %p41 = por %p39, %p40
    %p42 = scmp.ne.s32.totalorder %s31, %s32
    %p43 = scmp.eq.s32.totalorder %s23, 0
    %p44 = por %p42, %p43
    %p45 = scmp.ne.s32.totalorder %s31, %s32
    %p46 = scmp.eq.s32.totalorder %s24, 1
    %p47 = por %p45, %p46
    %p49 = scmp.ne.s32.totalorder %s32, %s48
    %p50 = scmp.eq.s32.totalorder %s24, 0
    %p51 = por %p49, %p50
    %s53 = sadd.s32 %s52, 1
    %p56 = scmp.eq.s32.totalorder %s18, 1
    %p57 = scmp.ne.s32.totalorder %s52, %s54
    %p58 = scmp.eq.s32.totalorder %s18, 0
    %p59 = por %p57, %p58
    %p60 = scmp.ne.s32.totalorder %s52, %s54
    %p61 = scmp.eq.s32.totalorder %s23, 1
    %p62 = por %p60, %p61
    %p63 = scmp.ne.s32.totalorder %s54, %s55
    %p64 = scmp.eq.s32.totalorder %s23, 0
    %p65 = por %p63, %p64
    %p66 = scmp.ne.s32.totalorder %s54, %s55
    %p67 = scmp.eq.s32.totalorder %s24, 1
    %p68 = por %p66, %p67
    %p70 = scmp.ne.s32.totalorder %s55, %s69
    %p71 = scmp.eq.s32.totalorder %s24, 0
    %p72 = por %p70, %p71
    %s74 = sadd.s32 %s73, 1
    %p77 = scmp.eq.s32.totalorder %s18, 1
    %p78 = scmp.ne.s32.totalorder %s73, %s75
    %p79 = scmp.eq.s32.totalorder %s18, 0
    %p80 = por %p78, %p79
    %p81 = scmp.ne.s32.totalorder %s73, %s75
    %p82 = scmp.eq.s32.totalorder %s23, 1
    %p83 = por %p81, %p82
    %p84 = scmp.ne.s32.totalorder %s75, %s76
    %p85 = scmp.eq.s32.totalorder %s23, 0
    %p86 = por %p84, %p85
    %p87 = scmp.ne.s32.totalorder %s75, %s76
    %p88 = scmp.eq.s32.totalorder %s24, 1
    %p89 = por %p87, %p88
    %p91 = scmp.ne.s32.totalorder %s76, %s90
    %p92 = scmp.eq.s32.totalorder %s24, 0
    %p93 = por %p91, %p92
    %s95 = sadd.s32 %s94, 1
    %p98 = scmp.eq.s32.totalorder %s18, 1
    %p99 = scmp.ne.s32.totalorder %s94, %s96
    %p100 = scmp.eq.s32.totalorder %s18, 0
    %p101 = por %p99, %p100
    %p102 = scmp.ne.s32.totalorder %s94, %s96
    %p103 = scmp.eq.s32.totalorder %s23, 1
    %p104 = por %p102, %p103
    %p105 = scmp.ne.s32.totalorder %s96, %s97
    %p106 = scmp.eq.s32.totalorder %s23, 0
    %p107 = por %p105, %p106
    %p108 = scmp.ne.s32.totalorder %s96, %s97
    %p109 = scmp.eq.s32.totalorder %s24, 1
    %p110 = por %p108, %p109
    %p112 = scmp.ne.s32.totalorder %s97, %s111
    %p113 = scmp.eq.s32.totalorder %s24, 0
    %p114 = por %p112, %p113
    %s116 = sadd.s32 %s115, 1
    %p119 = scmp.eq.s32.totalorder %s18, 1
    %p120 = scmp.ne.s32.totalorder %s115, %s117
    %p121 = scmp.eq.s32.totalorder %s18, 0
    %p122 = por %p120, %p121
    %p123 = scmp.ne.s32.totalorder %s115, %s117
    %p124 = scmp.eq.s32.totalorder %s23, 1
    %p125 = por %p123, %p124
    %p126 = scmp.ne.s32.totalorder %s117, %s118
    %p127 = scmp.eq.s32.totalorder %s23, 0
    %p128 = por %p126, %p127
    %p129 = scmp.ne.s32.totalorder %s117, %s118
    %p130 = scmp.eq.s32.totalorder %s24, 1
    %p131 = por %p129, %p130
    %p133 = scmp.ne.s32.totalorder %s118, %s132
    %p134 = scmp.eq.s32.totalorder %s24, 0
    %p135 = por %p133, %p134
    %s137 = sadd.s32 %s136, 1
    %p140 = scmp.eq.s32.totalorder %s18, 1
    %p141 = scmp.ne.s32.totalorder %s136, %s138
    %p142 = scmp.eq.s32.totalorder %s18, 0
    %p143 = por %p141, %p142
    %p144 = scmp.ne.s32.totalorder %s136, %s138
    %p145 = scmp.eq.s32.totalorder %s23, 1
    %p146 = por %p144, %p145
    %p147 = scmp.ne.s32.totalorder %s138, %s139
    %p148 = scmp.eq.s32.totalorder %s23, 0
    %p149 = por %p147, %p148
    %p150 = scmp.ne.s32.totalorder %s138, %s139
    %p151 = scmp.eq.s32.totalorder %s24, 1
    %p152 = por %p150, %p151
    %p154 = scmp.ne.s32.totalorder %s139, %s153
    %p155 = scmp.eq.s32.totalorder %s24, 0
    %p156 = por %p154, %p155
    %s158 = sadd.s32 %s157, 1
    %p161 = scmp.eq.s32.totalorder %s18, 1
    %p162 = scmp.ne.s32.totalorder %s157, %s159
    %p163 = scmp.eq.s32.totalorder %s18, 0
    %p164 = por %p162, %p163
    %p165 = scmp.ne.s32.totalorder %s157, %s159
    %p166 = scmp.eq.s32.totalorder %s23, 1
    %p167 = por %p165, %p166
    %p168 = scmp.ne.s32.totalorder %s159, %s160
    %p169 = scmp.eq.s32.totalorder %s23, 0
    %p170 = por %p168, %p169
    %p171 = scmp.ne.s32.totalorder %s159, %s160
    %p172 = scmp.eq.s32.totalorder %s24, 1
    %p173 = por %p171, %p172
    %p175 = scmp.ne.s32.totalorder %s160, %s174
    %p176 = scmp.eq.s32.totalorder %s24, 0
    %p177 = por %p175, %p176
    %s179 = sadd.s32 %s178, 1
    %p182 = scmp.eq.s32.totalorder %s18, 1
    %p183 = scmp.ne.s32.totalorder %s178, %s180
    %p184 = scmp.eq.s32.totalorder %s18, 0
    %p185 = por %p183, %p184
    %p186 = scmp.ne.s32.totalorder %s178, %s180
    %p187 = scmp.eq.s32.totalorder %s23, 1
    %p188 = por %p186, %p187
    %p189 = scmp.ne.s32.totalorder %s180, %s181
    %p190 = scmp.eq.s32.totalorder %s23, 0
    %p191 = por %p189, %p190
    %p192 = scmp.ne.s32.totalorder %s180, %s181
    %p193 = scmp.eq.s32.totalorder %s24, 1
    %p194 = por %p192, %p193
    %p196 = scmp.ne.s32.totalorder %s181, %s195
    %p197 = scmp.eq.s32.totalorder %s24, 0
    %p198 = por %p196, %p197
    %s200 = sadd.s32 %s199, 1
    %p203 = scmp.eq.s32.totalorder %s18, 1
    %p204 = scmp.ne.s32.totalorder %s199, %s201
    %p205 = scmp.eq.s32.totalorder %s18, 0
    %p206 = por %p204, %p205
    %p207 = scmp.ne.s32.totalorder %s199, %s201
    %p208 = scmp.eq.s32.totalorder %s23, 1
    %p209 = por %p207, %p208
    %p210 = scmp.ne.s32.totalorder %s201, %s202
    %p211 = scmp.eq.s32.totalorder %s23, 0
    %p212 = por %p210, %p211
    %p213 = scmp.ne.s32.totalorder %s201, %s202
    %p214 = scmp.eq.s32.totalorder %s24, 1
    %p215 = por %p213, %p214
    %p217 = scmp.ne.s32.totalorder %s202, %s216
    %p218 = scmp.eq.s32.totalorder %s24, 0
    %p219 = por %p217, %p218
    %s221 = sadd.s32 %s220, 1
    %p224 = scmp.eq.s32.totalorder %s18, 1
    %p225 = scmp.ne.s32.totalorder %s220, %s222
    %p226 = scmp.eq.s32.totalorder %s18, 0
    %p227 = por %p225, %p226
    %p228 = scmp.ne.s32.totalorder %s220, %s222
    %p229 = scmp.eq.s32.totalorder %s23, 1
    %p230 = por %p228, %p229
    %p231 = scmp.ne.s32.totalorder %s222, %s223
    %p232 = scmp.eq.s32.totalorder %s23, 0
    %p233 = por %p231, %p232
    %p234 = scmp.ne.s32.totalorder %s222, %s223
    %p235 = scmp.eq.s32.totalorder %s24, 1
    %p236 = por %p234, %p235
    %p238 = scmp.ne.s32.totalorder %s223, %s237
    %p239 = scmp.eq.s32.totalorder %s24, 0
    %p240 = por %p238, %p239
    %s242 = sadd.s32 %s241, 1
    %p245 = scmp.eq.s32.totalorder %s18, 1
    %p246 = scmp.ne.s32.totalorder %s241, %s243
    %p247 = scmp.eq.s32.totalorder %s18, 0
    %p248 = por %p246, %p247
    %p249 = scmp.ne.s32.totalorder %s241, %s243
    %p250 = scmp.eq.s32.totalorder %s23, 1
    %p251 = por %p249, %p250
    %p252 = scmp.ne.s32.totalorder %s243, %s244
    %p253 = scmp.eq.s32.totalorder %s23, 0
    %p254 = por %p252, %p253
    %p255 = scmp.ne.s32.totalorder %s243, %s244
    %p256 = scmp.eq.s32.totalorder %s24, 1
    %p257 = por %p255, %p256
    %p259 = scmp.ne.s32.totalorder %s244, %s258
    %p260 = scmp.eq.s32.totalorder %s24, 0
    %p261 = por %p259, %p260
    %s263 = sadd.s32 %s262, 1
    %p266 = scmp.eq.s32.totalorder %s18, 1
    %p267 = scmp.ne.s32.totalorder %s262, %s264
    %p268 = scmp.eq.s32.totalorder %s18, 0
    %p269 = por %p267, %p268
    %p270 = scmp.ne.s32.totalorder %s262, %s264
    %p271 = scmp.eq.s32.totalorder %s23, 1
    %p272 = por %p270, %p271
    %p273 = scmp.ne.s32.totalorder %s264, %s265
    %p274 = scmp.eq.s32.totalorder %s23, 0
    %p275 = por %p273, %p274
    %p276 = scmp.ne.s32.totalorder %s264, %s265
    %p277 = scmp.eq.s32.totalorder %s24, 1
    %p278 = por %p276, %p277
    %p280 = scmp.ne.s32.totalorder %s265, %s279
    %p281 = scmp.eq.s32.totalorder %s24, 0
    %p282 = por %p280, %p281
    %s283 = ssub.s32 %s18, %s25
    %p284 = scmp.eq.s32.totalorder %s283, 0
    %s286 = sadd.s32 %s285, 1
    %s287 = scalar_select %p284, %s285, %s286
    %p290 = pneg %p284
    %p291 = scmp.eq.s32.totalorder %s18, 1
    %p292 = por %p290, %p291
    %p293 = scmp.ne.s32.totalorder %s285, %s288
    %p294 = scmp.eq.s32.totalorder %s18, 0
    %p295 = por %p293, %p294
    %p296 = scmp.ne.s32.totalorder %s285, %s288
    %p297 = scmp.eq.s32.totalorder %s23, 1
    %p298 = por %p296, %p297
    %p299 = scmp.ne.s32.totalorder %s288, %s289
    %p300 = scmp.eq.s32.totalorder %s23, 0
    %p301 = por %p299, %p300
    %p302 = scmp.ne.s32.totalorder %s288, %s289
    %p303 = scmp.eq.s32.totalorder %s24, 1
    %p304 = por %p302, %p303
    %p306 = scmp.ne.s32.totalorder %s289, %s305
    %p307 = scmp.eq.s32.totalorder %s24, 0
    %p308 = por %p306, %p307
    %p309 = scmp.le.s32.totalorder 1, %s18
    %p310 = scmp.lt.s32.totalorder %s18, 3
    %p311 = pnand %p309, %p310
    %p312 = pneg %p311
    // Predicated region
    $region9: #{unet_upsample_forward.5} parent=5 // pred_check
      _
    $region10: #{unet_upsample_forward.5} parent=5 // pred_check_branch
      %314 = sbr.rel (%p311) target = $region12
    $region11: #{unet_upsample_forward.5} parent=5 // pred_region
      %s315 = ssub.s32 %s18, 1
      // Predicated region
      $region13: #{unet_upsample_forward.5} parent=11 // pred_check
        %p316 = pneg %p65
      $region14: #{unet_upsample_forward.5} parent=11 // pred_check_branch
        %318 = sbr.rel (%p316) target = $region16
      $region15: #{unet_upsample_forward.5} parent=11 // pred_region
        _
      $region16: #{unet_upsample_forward.5} parent=11 // pred_fallthru
        _
      // Predicated region
      $region17: #{unet_upsample_forward.5} parent=11 // pred_check
        %p319 = pneg %p86
      $region18: #{unet_upsample_forward.5} parent=11 // pred_check_branch
        %321 = sbr.rel (%p319) target = $region20
      $region19: #{unet_upsample_forward.5} parent=11 // pred_region
        _
      $region20: #{unet_upsample_forward.5} parent=11 // pred_fallthru
        _
      // Predicated region
      $region21: #{unet_upsample_forward.5} parent=11 // pred_check
        %p322 = pneg %p107
      $region22: #{unet_upsample_forward.5} parent=11 // pred_check_branch
        %324 = sbr.rel (%p322) target = $region24
      $region23: #{unet_upsample_forward.5} parent=11 // pred_region
        _
      $region24: #{unet_upsample_forward.5} parent=11 // pred_fallthru
        _
      // Predicated region
      $region25: #{unet_upsample_forward.5} parent=11 // pred_check
        %p325 = pneg %p128
      $region26: #{unet_upsample_forward.5} parent=11 // pred_check_branch
        %327 = sbr.rel (%p325) target = $region28
      $region27: #{unet_upsample_forward.5} parent=11 // pred_region
        _
      $region28: #{unet_upsample_forward.5} parent=11 // pred_fallthru
        _
      // Predicated region
      $region29: #{unet_upsample_forward.5} parent=11 // pred_check
        %p328 = pneg %p149
      $region30: #{unet_upsample_forward.5} parent=11 // pred_check_branch
        %330 = sbr.rel (%p328) target = $region32
      $region31: #{unet_upsample_forward.5} parent=11 // pred_region
        _
      $region32: #{unet_upsample_forward.5} parent=11 // pred_fallthru
        _
      // Predicated region
      $region33: #{unet_upsample_forward.5} parent=11 // pred_check
        %p331 = pneg %p170
      $region34: #{unet_upsample_forward.5} parent=11 // pred_check_branch
        %333 = sbr.rel (%p331) target = $region36
      $region35: #{unet_upsample_forward.5} parent=11 // pred_region
        _
      $region36: #{unet_upsample_forward.5} parent=11 // pred_fallthru
        _
      // Predicated region
      $region37: #{unet_upsample_forward.5} parent=11 // pred_check
        %p334 = pneg %p191
      $region38: #{unet_upsample_forward.5} parent=11 // pred_check_branch
        %336 = sbr.rel (%p334) target = $region40
      $region39: #{unet_upsample_forward.5} parent=11 // pred_region
        _
      $region40: #{unet_upsample_forward.5} parent=11 // pred_fallthru
        _
      // Predicated region
      $region41: #{unet_upsample_forward.5} parent=11 // pred_check
        %p337 = pneg %p212
      $region42: #{unet_upsample_forward.5} parent=11 // pred_check_branch
        %339 = sbr.rel (%p337) target = $region44
      $region43: #{unet_upsample_forward.5} parent=11 // pred_region
        _
      $region44: #{unet_upsample_forward.5} parent=11 // pred_fallthru
        _
      // Predicated region
      $region45: #{unet_upsample_forward.5} parent=11 // pred_check
        %p340 = pneg %p233
      $region46: #{unet_upsample_forward.5} parent=11 // pred_check_branch
        %342 = sbr.rel (%p340) target = $region48
      $region47: #{unet_upsample_forward.5} parent=11 // pred_region
        _
      $region48: #{unet_upsample_forward.5} parent=11 // pred_fallthru
        _
      // Predicated region
      $region49: #{unet_upsample_forward.5} parent=11 // pred_check
        %p343 = pneg %p254
      $region50: #{unet_upsample_forward.5} parent=11 // pred_check_branch
        %345 = sbr.rel (%p343) target = $region52
      $region51: #{unet_upsample_forward.5} parent=11 // pred_region
        _
      $region52: #{unet_upsample_forward.5} parent=11 // pred_fallthru
        _
      // Predicated region
      $region53: #{unet_upsample_forward.5} parent=11 // pred_check
        %p346 = pneg %p275
      $region54: #{unet_upsample_forward.5} parent=11 // pred_check_branch
        %348 = sbr.rel (%p346) target = $region56
      $region55: #{unet_upsample_forward.5} parent=11 // pred_region
        _
      $region56: #{unet_upsample_forward.5} parent=11 // pred_fallthru
        _
    $region12: #{unet_upsample_forward.5} parent=5 // pred_fallthru
      _
    %p349 = scmp.lt.s32.totalorder %s18, 2
    // Predicated region
    $region57: #{unet_upsample_forward.5} parent=5 // pred_check
      %p350 = pneg %p349
    $region58: #{unet_upsample_forward.5} parent=5 // pred_check_branch
      %352 = sbr.rel (%p350) target = $region60
    $region59: #{unet_upsample_forward.5} parent=5 // pred_region
      // Predicated region
      $region61: #{unet_upsample_forward.5} parent=59 // pred_check
        %p353 = pneg %p38
      $region62: #{unet_upsample_forward.5} parent=59 // pred_check_branch
        %355 = sbr.rel (%p353) target = $region64
      $region63: #{unet_upsample_forward.5} parent=59 // pred_region
        %p356 = scmp.lt.s32.totalorder %s18, 1
        %s357 = scalar_select %p356, %s18, 1
        %s358 = smul.addr %s357, 4
        %s359 = smul.addr %s358, 8
        %s360 = scalar_lea.vmem %s0, %s359
      $region64: #{unet_upsample_forward.5} parent=59 // pred_fallthru
        _
    $region60: #{unet_upsample_forward.5} parent=5 // pred_fallthru
      _
    %p361 = scmp.le.s32.totalorder 1, %s18
    %p362 = scmp.lt.s32.totalorder %s18, 3
    %p363 = pnand %p361, %p362
    %p364 = pneg %p363
    // Predicated region
    $region65: #{unet_upsample_forward.5} parent=5 // pred_check
      _
    $region66: #{unet_upsample_forward.5} parent=5 // pred_check_branch
      %366 = sbr.rel (%p363) target = $region68
    $region67: #{unet_upsample_forward.5} parent=5 // pred_region
      %s367 = ssub.s32 %s18, 1
      %p368 = scmp.lt.s32.totalorder %s23, 1
      %s369 = scalar_select %p368, %s23, 1
      %s370 = smul.addr %s369, 4
      %s371 = smul.addr %s370, 8
      %s372 = scalar_lea.vmem %s0, %s371
      %p373 = pneg %p44
      %p374 = pneg %p41
      %p375 = pneg %p65
      %p376 = pneg %p62
      %p377 = pneg %p86
      %p378 = pneg %p83
      %p379 = pneg %p107
      %p380 = pneg %p104
      %p381 = pneg %p128
      %p382 = pneg %p125
      %p383 = pneg %p149
      %p384 = pneg %p146
      %p385 = pneg %p170
      %p386 = pneg %p167
      %p387 = pneg %p191
      %p388 = pneg %p188
      %p389 = pneg %p212
      %p390 = pneg %p209
      %p391 = pneg %p233
      %p392 = pneg %p230
      %p393 = pneg %p254
      %p394 = pneg %p251
      %p395 = pneg %p275
      %p396 = pneg %p272
      %p397 = pneg %p301
      %p398 = pneg %p298
      %p399 = scmp.lt.s32.totalorder %s23, 1
      %s400 = scalar_select %p399, %s23, 1
      %s401 = smul.addr %s400, 4
      %s402 = smul.addr %s401, 8
      %s403 = scalar_lea.vmem %s12, %s402
      %p404 = scmp.lt.s32.totalorder %s23, 1
      %s405 = scalar_select %p404, %s23, 1
      %s406 = smul.addr %s405, 4
      %s407 = smul.addr %s406, 8
      %s408 = scalar_lea.vmem %s0, %s407
      %p409 = scmp.lt.s32.totalorder %s23, 1
      %s410 = scalar_select %p409, %s23, 1
      %s411 = smul.addr %s410, 4
      %s412 = smul.addr %s411, 8
      %s413 = scalar_lea.vmem %s12, %s412
      %v414 = vld [vmem:[%s408] sm:$0xff]
      %v415 = vld [vmem:[%s408 + $0x8] sm:$0xff]
      %v416 = vld [vmem:[%s408 + $0x10] sm:$0xff]
      %v417 = vld [vmem:[%s408 + $0x18] sm:$0xff]
      %v418 = vld [vmem:[%s3] sm:$0xff]
      %v419 = vld [vmem:[%s3 + $0x8] sm:$0xff]
      %v420 = vld [vmem:[%s4] sm:$0xff]
      %v421 = vld [vmem:[%s4 + $0x8] sm:$0xff]
      %v422 = vld [vmem:[%s11] sm:$0x3]
      %v424 = vlaneseq
      %v425 = vshrl.u32 %v424, 7
      %v426 = vsub.s32 0, %v425
      %v427 = vrot.slane %v422, %v426
      %v428 = vlaneseq
      %v429 = vshrl.u32 %v428, 7
      %v430 = vsub.s32 1, %v429
      %v431 = vrot.slane %v422, %v430
      %432 = vrot.lane.b32.xlu0 %v427, 111
      %v433 = vpop.permute.xlu0 %432
      %434 = vrot.lane.b32.xlu0 %v431, 111
      %v435 = vpop.permute.xlu0 %434
      %vm436 = vcmask 908288
      %v437 = vsel %vm436, %v433, %v435
      %v441 = vmul.f32 %v415, %v433
      %v442 = vmul.f32 %v414, %v437
      %v443 = vmul.f32 %v415, %v435
      %v444 = vmul.f32 %v417, %v433
      %v445 = vmul.f32 %v416, %v437
      %v446 = vmul.f32 %v417, %v435
      %453 = vrot.lane.b32.xlu0 %v441, 17
      %v454 = vpop.permute.xlu0 %453
      %455 = vrot.lane.b32.xlu0 %v442, 17
      %v456 = vpop.permute.xlu0 %455
      %457 = vrot.lane.b32.xlu0 %v443, 17
      %v458 = vpop.permute.xlu0 %457
      %459 = vrot.lane.b32.xlu0 %v444, 17
      %v460 = vpop.permute.xlu0 %459
      %461 = vrot.lane.b32.xlu0 %v445, 17
      %v462 = vpop.permute.xlu0 %461
      %463 = vrot.lane.b32.xlu0 %v446, 17
      %v464 = vpop.permute.xlu0 %463
      %vm465 = vcmask 138240
      %v466 = vsel %vm465, %v454, %v456
      %v467 = vsel %vm465, %v456, %v458
      %v468 = vsel %vm465, %v460, %v462
      %v469 = vsel %vm465, %v462, %v464
      %474 = vst [vmem:[#allocation2] sm:$0xff] %v466
      %475 = vst [vmem:[#allocation2 + $0x8] sm:$0xff] %v467
      %476 = vst [vmem:[#allocation2 + $0x10] sm:$0xff] %v468
      %477 = vst [vmem:[#allocation2 + $0x18] sm:$0xff] %v469
      %s478 = scalar_lea.vmem %s11, 2
      %v479 = vld [vmem:[%s478] sm:$0x3]
      %v481 = vlaneseq
      %v482 = vshrl.u32 %v481, 7
      %v483 = vsub.s32 0, %v482
      %v484 = vrot.slane %v479, %v483
      %v485 = vlaneseq
      %v486 = vshrl.u32 %v485, 7
      %v487 = vsub.s32 1, %v486
      %v488 = vrot.slane %v479, %v487
      %489 = vrot.lane.b32.xlu0 %v484, 112
      %v490 = vpop.permute.xlu0 %489
      %491 = vrot.lane.b32.xlu0 %v488, 112
      %v492 = vpop.permute.xlu0 %491
      %vm493 = vcmask 916480
      %v494 = vsel %vm493, %v490, %v492
      %v498 = vmul.f32 %v415, %v490
      %v499 = vmul.f32 %v414, %v494
      %v500 = vmul.f32 %v415, %v492
      %v501 = vmul.f32 %v417, %v490
      %v502 = vmul.f32 %v416, %v494
      %v503 = vmul.f32 %v417, %v492
      %510 = vrot.lane.b32.xlu0 %v498, 16
      %v511 = vpop.permute.xlu0 %510
      %512 = vrot.lane.b32.xlu0 %v499, 16
      %v513 = vpop.permute.xlu0 %512
      %514 = vrot.lane.b32.xlu0 %v500, 16
      %v515 = vpop.permute.xlu0 %514
      %516 = vrot.lane.b32.xlu0 %v501, 16
      %v517 = vpop.permute.xlu0 %516
      %518 = vrot.lane.b32.xlu0 %v502, 16
      %v519 = vpop.permute.xlu0 %518
      %520 = vrot.lane.b32.xlu0 %v503, 16
      %v521 = vpop.permute.xlu0 %520
      %vm522 = vcmask 130048
      %v523 = vsel %vm522, %v511, %v513
      %v524 = vsel %vm522, %v513, %v515
      %v525 = vsel %vm522, %v517, %v519
      %v526 = vsel %vm522, %v519, %v521
      %531 = vst [vmem:[#allocation2 + $0x20] sm:$0xff] %v523
      %532 = vst [vmem:[#allocation2 + $0x28] sm:$0xff] %v524
      %533 = vst [vmem:[#allocation2 + $0x30] sm:$0xff] %v525
      %534 = vst [vmem:[#allocation2 + $0x38] sm:$0xff] %v526
      %s535 = scalar_lea.vmem %s11, 4
      %v536 = vld [vmem:[%s535] sm:$0x3]
      %v538 = vlaneseq
      %v539 = vshrl.u32 %v538, 7
      %v540 = vsub.s32 0, %v539
      %v541 = vrot.slane %v536, %v540
      %v542 = vlaneseq
      %v543 = vshrl.u32 %v542, 7
      %v544 = vsub.s32 1, %v543
      %v545 = vrot.slane %v536, %v544
      %546 = vrot.lane.b32.xlu0 %v541, 113
      %v547 = vpop.permute.xlu0 %546
      %548 = vrot.lane.b32.xlu0 %v545, 113
      %v549 = vpop.permute.xlu0 %548
      %vm550 = vcmask 924672
      %v551 = vsel %vm550, %v547, %v549
      %v555 = vmul.f32 %v415, %v547
      %v556 = vmul.f32 %v414, %v551
      %v557 = vmul.f32 %v415, %v549
      %v558 = vmul.f32 %v417, %v547
      %v559 = vmul.f32 %v416, %v551
      %v560 = vmul.f32 %v417, %v549
      %567 = vrot.lane.b32.xlu0 %v555, 15
      %v568 = vpop.permute.xlu0 %567
      %569 = vrot.lane.b32.xlu0 %v556, 15
      %v570 = vpop.permute.xlu0 %569
      %571 = vrot.lane.b32.xlu0 %v557, 15
      %v572 = vpop.permute.xlu0 %571
      %573 = vrot.lane.b32.xlu0 %v558, 15
      %v574 = vpop.permute.xlu0 %573
      %575 = vrot.lane.b32.xlu0 %v559, 15
      %v576 = vpop.permute.xlu0 %575
      %577 = vrot.lane.b32.xlu0 %v560, 15
      %v578 = vpop.permute.xlu0 %577
      %vm579 = vcmask 121856
      %v580 = vsel %vm579, %v568, %v570
      %v581 = vsel %vm579, %v570, %v572
      %v582 = vsel %vm579, %v574, %v576
      %v583 = vsel %vm579, %v576, %v578
      %588 = vst [vmem:[#allocation2 + $0x40] sm:$0xff] %v580
      %589 = vst [vmem:[#allocation2 + $0x48] sm:$0xff] %v581
      %590 = vst [vmem:[#allocation2 + $0x50] sm:$0xff] %v582
      %591 = vst [vmem:[#allocation2 + $0x58] sm:$0xff] %v583
      %s592 = scalar_lea.vmem %s11, 6
      %v593 = vld [vmem:[%s592] sm:$0x3]
      %v595 = vlaneseq
      %v596 = vshrl.u32 %v595, 7
      %v597 = vsub.s32 0, %v596
      %v598 = vrot.slane %v593, %v597
      %v599 = vlaneseq
      %v600 = vshrl.u32 %v599, 7
      %v601 = vsub.s32 1, %v600
      %v602 = vrot.slane %v593, %v601
      %603 = vrot.lane.b32.xlu0 %v598, 127
      %v604 = vpop.permute.xlu0 %603
      %605 = vrot.lane.b32.xlu0 %v602, 127
      %v606 = vpop.permute.xlu0 %605
      %vm607 = vcmask 1039360
      %v608 = vsel %vm607, %v604, %v606
      %v612 = vmul.f32 %v415, %v604
      %v613 = vmul.f32 %v414, %v608
      %v614 = vmul.f32 %v415, %v606
      %v615 = vmul.f32 %v417, %v604
      %v616 = vmul.f32 %v416, %v608
      %v617 = vmul.f32 %v417, %v606
      %624 = vrot.lane.b32.xlu0 %v612, 1
      %v625 = vpop.permute.xlu0 %624
      %626 = vrot.lane.b32.xlu0 %v613, 1
      %v627 = vpop.permute.xlu0 %626
      %628 = vrot.lane.b32.xlu0 %v614, 1
      %v629 = vpop.permute.xlu0 %628
      %630 = vrot.lane.b32.xlu0 %v615, 1
      %v631 = vpop.permute.xlu0 %630
      %632 = vrot.lane.b32.xlu0 %v616, 1
      %v633 = vpop.permute.xlu0 %632
      %634 = vrot.lane.b32.xlu0 %v617, 1
      %v635 = vpop.permute.xlu0 %634
      %vm636 = vcmask 7168
      %v637 = vsel %vm636, %v625, %v627
      %v638 = vsel %vm636, %v627, %v629
      %v639 = vsel %vm636, %v631, %v633
      %v640 = vsel %vm636, %v633, %v635
      %645 = vst [vmem:[#allocation2 + $0x60] sm:$0xff] %v637
      %646 = vst [vmem:[#allocation2 + $0x68] sm:$0xff] %v638
      %647 = vst [vmem:[#allocation2 + $0x70] sm:$0xff] %v639
      %648 = vst [vmem:[#allocation2 + $0x78] sm:$0xff] %v640
      %s649 = scalar_lea.vmem %s11, 8
      %v650 = vld [vmem:[%s649] sm:$0x3]
      %v652 = vlaneseq
      %v653 = vshrl.u32 %v652, 7
      %v654 = vsub.s32 0, %v653
      %v655 = vrot.slane %v650, %v654
      %v656 = vlaneseq
      %v657 = vshrl.u32 %v656, 7
      %v658 = vsub.s32 1, %v657
      %v659 = vrot.slane %v650, %v658
      %v662 = vmul.f32 %v414, %v655
      %v663 = vmul.f32 %v415, %v659
      %v664 = vmul.f32 %v416, %v655
      %v665 = vmul.f32 %v417, %v659
      %666 = vst [vmem:[#allocation2 + $0x80] sm:$0xff] %v662
      %667 = vst [vmem:[#allocation2 + $0x88] sm:$0xff] %v663
      %668 = vst [vmem:[#allocation2 + $0x90] sm:$0xff] %v664
      %669 = vst [vmem:[#allocation2 + $0x98] sm:$0xff] %v665
      %s670 = scalar_lea.vmem %s11, 10
      %v671 = vld [vmem:[%s670] sm:$0x3]
      %v673 = vlaneseq
      %v674 = vshrl.u32 %v673, 7
      %v675 = vsub.s32 0, %v674
      %v676 = vrot.slane %v671, %v675
      %v677 = vlaneseq
      %v678 = vshrl.u32 %v677, 7
      %v679 = vsub.s32 1, %v678
      %v680 = vrot.slane %v671, %v679
      %681 = vrot.lane.b32.xlu0 %v676, 1
      %v682 = vpop.permute.xlu0 %681
      %683 = vrot.lane.b32.xlu0 %v680, 1
      %v684 = vpop.permute.xlu0 %683
      %v685 = vsel %vm636, %v682, %v684
      %v689 = vmul.f32 %v414, %v682
      %v690 = vmul.f32 %v415, %v685
      %v691 = vmul.f32 %v414, %v684
      %v692 = vmul.f32 %v416, %v682
      %v693 = vmul.f32 %v417, %v685
      %v694 = vmul.f32 %v416, %v684
      %701 = vrot.lane.b32.xlu0 %v689, 127
      %v702 = vpop.permute.xlu0 %701
      %703 = vrot.lane.b32.xlu0 %v690, 127
      %v704 = vpop.permute.xlu0 %703
      %705 = vrot.lane.b32.xlu0 %v691, 127
      %v706 = vpop.permute.xlu0 %705
      %707 = vrot.lane.b32.xlu0 %v692, 127
      %v708 = vpop.permute.xlu0 %707
      %709 = vrot.lane.b32.xlu0 %v693, 127
      %v710 = vpop.permute.xlu0 %709
      %711 = vrot.lane.b32.xlu0 %v694, 127
      %v712 = vpop.permute.xlu0 %711
      %v713 = vsel %vm607, %v702, %v704
      %v714 = vsel %vm607, %v704, %v706
      %v715 = vsel %vm607, %v708, %v710
      %v716 = vsel %vm607, %v710, %v712
      %721 = vst [vmem:[#allocation2 + $0xa0] sm:$0xff] %v713
      %722 = vst [vmem:[#allocation2 + $0xa8] sm:$0xff] %v714
      %723 = vst [vmem:[#allocation2 + $0xb0] sm:$0xff] %v715
      %724 = vst [vmem:[#allocation2 + $0xb8] sm:$0xff] %v716
      %s725 = scalar_lea.vmem %s11, 12
      %v726 = vld [vmem:[%s725] sm:$0x3]
      %v728 = vlaneseq
      %v729 = vshrl.u32 %v728, 7
      %v730 = vsub.s32 0, %v729
      %v731 = vrot.slane %v726, %v730
      %v732 = vlaneseq
      %v733 = vshrl.u32 %v732, 7
      %v734 = vsub.s32 1, %v733
      %v735 = vrot.slane %v726, %v734
      %736 = vrot.lane.b32.xlu0 %v731, 15
      %v737 = vpop.permute.xlu0 %736
      %738 = vrot.lane.b32.xlu0 %v735, 15
      %v739 = vpop.permute.xlu0 %738
      %v740 = vsel %vm579, %v737, %v739
      %v744 = vmul.f32 %v414, %v737
      %v745 = vmul.f32 %v415, %v740
      %v746 = vmul.f32 %v414, %v739
      %v747 = vmul.f32 %v416, %v737
      %v748 = vmul.f32 %v417, %v740
      %v749 = vmul.f32 %v416, %v739
      %756 = vrot.lane.b32.xlu0 %v744, 113
      %v757 = vpop.permute.xlu0 %756
      %758 = vrot.lane.b32.xlu0 %v745, 113
      %v759 = vpop.permute.xlu0 %758
      %760 = vrot.lane.b32.xlu0 %v746, 113
      %v761 = vpop.permute.xlu0 %760
      %762 = vrot.lane.b32.xlu0 %v747, 113
      %v763 = vpop.permute.xlu0 %762
      %764 = vrot.lane.b32.xlu0 %v748, 113
      %v765 = vpop.permute.xlu0 %764
      %766 = vrot.lane.b32.xlu0 %v749, 113
      %v767 = vpop.permute.xlu0 %766
      %v768 = vsel %vm550, %v757, %v759
      %v769 = vsel %vm550, %v759, %v761
      %v770 = vsel %vm550, %v763, %v765
      %v771 = vsel %vm550, %v765, %v767
      %776 = vst [vmem:[#allocation2 + $0xc0] sm:$0xff] %v768
      %777 = vst [vmem:[#allocation2 + $0xc8] sm:$0xff] %v769
      %778 = vst [vmem:[#allocation2 + $0xd0] sm:$0xff] %v770
      %779 = vst [vmem:[#allocation2 + $0xd8] sm:$0xff] %v771
      %s780 = scalar_lea.vmem %s11, 14
      %v781 = vld [vmem:[%s780] sm:$0x3]
      %v783 = vlaneseq
      %v784 = vshrl.u32 %v783, 7
      %v785 = vsub.s32 0, %v784
      %v786 = vrot.slane %v781, %v785
      %v787 = vlaneseq
      %v788 = vshrl.u32 %v787, 7
      %v789 = vsub.s32 1, %v788
      %v790 = vrot.slane %v781, %v789
      %791 = vrot.lane.b32.xlu0 %v786, 16
      %v792 = vpop.permute.xlu0 %791
      %793 = vrot.lane.b32.xlu0 %v790, 16
      %v794 = vpop.permute.xlu0 %793
      %v795 = vsel %vm522, %v792, %v794
      %v799 = vmul.f32 %v414, %v792
      %v800 = vmul.f32 %v415, %v795
      %v801 = vmul.f32 %v414, %v794
      %v802 = vmul.f32 %v416, %v792
      %v803 = vmul.f32 %v417, %v795
      %v804 = vmul.f32 %v416, %v794
      %811 = vrot.lane.b32.xlu0 %v799, 112
      %v812 = vpop.permute.xlu0 %811
      %813 = vrot.lane.b32.xlu0 %v800, 112
      %v814 = vpop.permute.xlu0 %813
      %815 = vrot.lane.b32.xlu0 %v801, 112
      %v816 = vpop.permute.xlu0 %815
      %817 = vrot.lane.b32.xlu0 %v802, 112
      %v818 = vpop.permute.xlu0 %817
      %819 = vrot.lane.b32.xlu0 %v803, 112
      %v820 = vpop.permute.xlu0 %819
      %821 = vrot.lane.b32.xlu0 %v804, 112
      %v822 = vpop.permute.xlu0 %821
      %v823 = vsel %vm493, %v812, %v814
      %v824 = vsel %vm493, %v814, %v816
      %v825 = vsel %vm493, %v818, %v820
      %v826 = vsel %vm493, %v820, %v822
      %831 = vst [vmem:[#allocation2 + $0xe0] sm:$0xff] %v823
      %832 = vst [vmem:[#allocation2 + $0xe8] sm:$0xff] %v824
      %833 = vst [vmem:[#allocation2 + $0xf0] sm:$0xff] %v825
      %834 = vst [vmem:[#allocation2 + $0xf8] sm:$0xff] %v826
      %s835 = scalar_lea.vmem %s11, 16
      %v836 = vld [vmem:[%s835] sm:$0x3]
      %v838 = vlaneseq
      %v839 = vshrl.u32 %v838, 7
      %v840 = vsub.s32 0, %v839
      %v841 = vrot.slane %v836, %v840
      %v842 = vlaneseq
      %v843 = vshrl.u32 %v842, 7
      %v844 = vsub.s32 1, %v843
      %v845 = vrot.slane %v836, %v844
      %846 = vrot.lane.b32.xlu0 %v841, 17
      %v847 = vpop.permute.xlu0 %846
      %848 = vrot.lane.b32.xlu0 %v845, 17
      %v849 = vpop.permute.xlu0 %848
      %v850 = vsel %vm465, %v847, %v849
      %v854 = vmul.f32 %v414, %v847
      %v855 = vmul.f32 %v415, %v850
      %v856 = vmul.f32 %v414, %v849
      %v857 = vmul.f32 %v416, %v847
      %v858 = vmul.f32 %v417, %v850
      %v859 = vmul.f32 %v416, %v849
      %866 = vrot.lane.b32.xlu0 %v854, 111
      %v867 = vpop.permute.xlu0 %866
      %868 = vrot.lane.b32.xlu0 %v855, 111
      %v869 = vpop.permute.xlu0 %868
      %870 = vrot.lane.b32.xlu0 %v856, 111
      %v871 = vpop.permute.xlu0 %870
      %872 = vrot.lane.b32.xlu0 %v857, 111
      %v873 = vpop.permute.xlu0 %872
      %874 = vrot.lane.b32.xlu0 %v858, 111
      %v875 = vpop.permute.xlu0 %874
      %876 = vrot.lane.b32.xlu0 %v859, 111
      %v877 = vpop.permute.xlu0 %876
      %v878 = vsel %vm436, %v867, %v869
      %v879 = vsel %vm436, %v869, %v871
      %v880 = vsel %vm436, %v873, %v875
      %v881 = vsel %vm436, %v875, %v877
      %886 = vst [vmem:[#allocation2 + $0x100] sm:$0xff] %v878
      %887 = vst [vmem:[#allocation2 + $0x108] sm:$0xff] %v879
      %888 = vst [vmem:[#allocation2 + $0x110] sm:$0xff] %v880
      %889 = vst [vmem:[#allocation2 + $0x118] sm:$0xff] %v881
      %v890 = vld [vmem:[%s1] sm:$0xff]
      %v891 = vld [vmem:[%s1 + $0x8] sm:$0xff]
      %v892 = vld [vmem:[%s1 + $0x10] sm:$0xff]
      %v893 = vld [vmem:[%s1 + $0x18] sm:$0xff]
      %v894 = vld [vmem:[#allocation2] sm:$0xff]
      %v895 = vld [vmem:[#allocation2 + $0x8] sm:$0xff]
      %v896 = vld [vmem:[#allocation2 + $0x10] sm:$0xff]
      %v897 = vld [vmem:[#allocation2 + $0x18] sm:$0xff]
      %v898 = vld [vmem:[#allocation2 + $0x20] sm:$0xff]
      %v899 = vld [vmem:[#allocation2 + $0x28] sm:$0xff]
      %v900 = vld [vmem:[#allocation2 + $0x30] sm:$0xff]
      %v901 = vld [vmem:[#allocation2 + $0x38] sm:$0xff]
      %v902 = vld [vmem:[#allocation2 + $0x40] sm:$0xff]
      %v903 = vld [vmem:[#allocation2 + $0x48] sm:$0xff]
      %v904 = vld [vmem:[#allocation2 + $0x50] sm:$0xff]
      %v905 = vld [vmem:[#allocation2 + $0x58] sm:$0xff]
      %v906 = vld [vmem:[#allocation2 + $0x60] sm:$0xff]
      %v907 = vld [vmem:[#allocation2 + $0x68] sm:$0xff]
      %v908 = vld [vmem:[#allocation2 + $0x70] sm:$0xff]
      %v909 = vld [vmem:[#allocation2 + $0x78] sm:$0xff]
      %v910 = vld [vmem:[#allocation2 + $0x80] sm:$0xff]
      %v911 = vld [vmem:[#allocation2 + $0x88] sm:$0xff]
      %v912 = vld [vmem:[#allocation2 + $0x90] sm:$0xff]
      %v913 = vld [vmem:[#allocation2 + $0x98] sm:$0xff]
      %v914 = vld [vmem:[#allocation2 + $0xa0] sm:$0xff]
      %v915 = vld [vmem:[#allocation2 + $0xa8] sm:$0xff]
      %v916 = vld [vmem:[#allocation2 + $0xb0] sm:$0xff]
      %v917 = vld [vmem:[#allocation2 + $0xb8] sm:$0xff]
      %v918 = vld [vmem:[#allocation2 + $0xc0] sm:$0xff]
      %v919 = vld [vmem:[#allocation2 + $0xc8] sm:$0xff]
      %v920 = vld [vmem:[#allocation2 + $0xd0] sm:$0xff]
      %v921 = vld [vmem:[#allocation2 + $0xd8] sm:$0xff]
      %v922 = vld [vmem:[#allocation2 + $0xe0] sm:$0xff]
      %v923 = vld [vmem:[#allocation2 + $0xe8] sm:$0xff]
      %v924 = vld [vmem:[#allocation2 + $0xf0] sm:$0xff]
      %v925 = vld [vmem:[#allocation2 + $0xf8] sm:$0xff]
      %v926 = vld [vmem:[#allocation2 + $0x100] sm:$0xff]
      %v927 = vld [vmem:[#allocation2 + $0x108] sm:$0xff]
      %v928 = vld [vmem:[#allocation2 + $0x110] sm:$0xff]
      %v929 = vld [vmem:[#allocation2 + $0x118] sm:$0xff]
      %v931 = vsel %vm522, %v891, 0
      %v934 = vsel %vm522, %v893, 0
      %936 = vmatprep.subr.mxu0 %v895
      %937 = vmatpush1.msra.mxu0 %v894
      %938 = vmatprep.subr.mxu0 %v897
      %939 = vmatpush1.msra.mxu0 %v896
      %940 = vmatprep.subr.mxu0 %v899
      %941 = vmatpush1.msra.mxu0 %v898
      %942 = vmatprep.subr.mxu0 %v901
      %943 = vmatpush1.msra.mxu0 %v900
      %944 = vmatprep.subr.mxu0 %v903
      %945 = vmatpush1.msra.mxu0 %v902
      %946 = vmatprep.subr.mxu0 %v905
      %947 = vmatpush1.msra.mxu0 %v904
      %948 = vmatprep.subr.mxu0 %v907
      %949 = vmatpush1.msra.mxu0 %v906
      %950 = vmatprep.subr.mxu0 %v909
      %951 = vmatpush1.msra.mxu0 %v908
      %952 = vmatprep.subr.mxu0 %v911
      %953 = vmatpush1.msra.mxu0 %v910
      %954 = vmatprep.subr.mxu0 %v913
      %955 = vmatpush1.msra.mxu0 %v912
      %956 = vmatprep.subr.mxu0 %v915
      %957 = vmatpush1.msra.mxu0 %v914
      %958 = vmatprep.subr.mxu0 %v917
      %959 = vmatpush1.msra.mxu0 %v916
      %960 = vmatprep.subr.mxu0 %v919
      %961 = vmatpush1.msra.mxu0 %v918
      %962 = vmatprep.subr.mxu0 %v921
      %963 = vmatpush1.msra.mxu0 %v920
      %964 = vmatprep.subr.mxu0 %v923
      %965 = vmatpush1.msra.mxu0 %v922
      %966 = vmatprep.subr.mxu0 %v925
      %967 = vmatpush1.msra.mxu0 %v924
      %968 = vmatprep.subr.mxu0 %v927
      %969 = vmatpush1.msra.mxu0 %v926
      %970 = vmatprep.subr.mxu0 %v929
      %971 = vmatpush1.msra.mxu0 %v928
      %972 = vmatprep.subr.mxu0 0.0
      %973 = vmatpush1.msra.mxu0 0.0
      %974 = vmatprep.subr.mxu0 0.0
      %975 = vmatpush1.msra.mxu0 0.0
      %976 = vmatprep.subr.mxu0 0.0
      %977 = vmatpush1.msra.mxu0 0.0
      %978 = vmatprep.subr.mxu0 0.0
      %979 = vmatpush1.msra.mxu0 0.0
      %980 = vmatprep.subr.mxu0 0.0
      %981 = vmatpush1.msra.mxu0 0.0
      %982 = vmatprep.subr.mxu0 0.0
      %983 = vmatpush1.msra.mxu0 0.0
      %984 = vmatprep.subr.mxu0 0.0
      %985 = vmatpush1.msra.mxu0 0.0
      %986 = vmatprep.subr.mxu0 0.0
      %987 = vmatpush1.msra.mxu0 0.0
      %988 = vmatprep.subr.mxu0 0.0
      %989 = vmatpush1.msra.mxu0 0.0
      %990 = vmatprep.subr.mxu0 0.0
      %991 = vmatpush1.msra.mxu0 0.0
      %992 = vmatprep.subr.mxu0 0.0
      %993 = vmatpush1.msra.mxu0 0.0
      %994 = vmatprep.subr.mxu0 0.0
      %995 = vmatpush1.msra.mxu0 0.0
      %996 = vmatprep.subr.mxu0 0.0
      %997 = vmatpush1.msra.mxu0 0.0
      %998 = vmatprep.subr.mxu0 0.0
      %999 = vmatpush1.msra.mxu0 0.0
      %1000 = vmatprep.mubr.f32.mxu0 %v931
      %1001 = vmatmul.mubr.f32.gmra.mrb[0].mxu0 %v890
      %v1002 = vpop.f32.mrb[0].mxu0
      %v1003 = vadd.f32 0.0, %v1002
      %v1004 = vpop.f32.mrb[0].mxu0
      %v1005 = vadd.f32 0.0, %v1004
      %1006 = vmatprep.mubr.f32.mxu0 %v934
      %1007 = vmatmul.mubr.f32.gmra.mrb[0].mxu0 %v892
      %v1008 = vpop.f32.mrb[0].mxu0
      %v1009 = vadd.f32 0.0, %v1008
      %v1010 = vpop.f32.mrb[0].mxu0
      %v1011 = vadd.f32 0.0, %v1010
      %1012 = vdwg.mxu0
      %v1013 = vld [vmem:[%s9] sm:$0xff]
      %v1014 = vld [vmem:[%s9 + $0x8] sm:$0xff]
      %v1015 = vld [vmem:[%s10] sm:$0xff]
      %v1016 = vld [vmem:[%s10 + $0x8] sm:$0xff]
      %v1018 = vsel %vm522, %v1015, 0
      %v1021 = vsel %vm522, %v1016, 0
      %1023 = vmatprep.subr.mxu0 %v1005
      %1024 = vmatpush1.msra.mxu0 %v1003
      %1025 = vmatprep.subr.mxu0 %v1011
      %1026 = vmatpush1.msra.mxu0 %v1009
      %1027 = vmatprep.subr.mxu0 0.0
      %1028 = vmatpush1.msra.mxu0 0.0
      %1029 = vmatprep.subr.mxu0 0.0
      %1030 = vmatpush1.msra.mxu0 0.0
      %1031 = vmatprep.subr.mxu0 0.0
      %1032 = vmatpush1.msra.mxu0 0.0
      %1033 = vmatprep.subr.mxu0 0.0
      %1034 = vmatpush1.msra.mxu0 0.0
      %1035 = vmatprep.subr.mxu0 0.0
      %1036 = vmatpush1.msra.mxu0 0.0
      %1037 = vmatprep.subr.mxu0 0.0
      %1038 = vmatpush1.msra.mxu0 0.0
      %1039 = vmatprep.subr.mxu0 0.0
      %1040 = vmatpush1.msra.mxu0 0.0
      %1041 = vmatprep.subr.mxu0 0.0
      %1042 = vmatpush1.msra.mxu0 0.0
      %1043 = vmatprep.subr.mxu0 0.0
      %1044 = vmatpush1.msra.mxu0 0.0
      %1045 = vmatprep.subr.mxu0 0.0
      %1046 = vmatpush1.msra.mxu0 0.0
      %1047 = vmatprep.subr.mxu0 0.0
      %1048 = vmatpush1.msra.mxu0 0.0
      %1049 = vmatprep.subr.mxu0 0.0
      %1050 = vmatpush1.msra.mxu0 0.0
      %1051 = vmatprep.subr.mxu0 0.0
      %1052 = vmatpush1.msra.mxu0 0.0
      %1053 = vmatprep.subr.mxu0 0.0
      %1054 = vmatpush1.msra.mxu0 0.0
      %1055 = vmatprep.subr.mxu0 0.0
      %1056 = vmatpush1.msra.mxu0 0.0
      %1057 = vmatprep.subr.mxu0 0.0
      %1058 = vmatpush1.msra.mxu0 0.0
      %1059 = vmatprep.subr.mxu0 0.0
      %1060 = vmatpush1.msra.mxu0 0.0
      %1061 = vmatprep.subr.mxu0 0.0
      %1062 = vmatpush1.msra.mxu0 0.0
      %1063 = vmatprep.subr.mxu0 0.0
      %1064 = vmatpush1.msra.mxu0 0.0
      %1065 = vmatprep.subr.mxu0 0.0
      %1066 = vmatpush1.msra.mxu0 0.0
      %1067 = vmatprep.subr.mxu0 0.0
      %1068 = vmatpush1.msra.mxu0 0.0
      %1069 = vmatprep.subr.mxu0 0.0
      %1070 = vmatpush1.msra.mxu0 0.0
      %1071 = vmatprep.subr.mxu0 0.0
      %1072 = vmatpush1.msra.mxu0 0.0
      %1073 = vmatprep.subr.mxu0 0.0
      %1074 = vmatpush1.msra.mxu0 0.0
      %1075 = vmatprep.subr.mxu0 0.0
      %1076 = vmatpush1.msra.mxu0 0.0
      %1077 = vmatprep.subr.mxu0 0.0
      %1078 = vmatpush1.msra.mxu0 0.0
      %1079 = vmatprep.subr.mxu0 0.0
      %1080 = vmatpush1.msra.mxu0 0.0
      %1081 = vmatprep.subr.mxu0 0.0
      %1082 = vmatpush1.msra.mxu0 0.0
      %1083 = vmatprep.subr.mxu0 0.0
      %1084 = vmatpush1.msra.mxu0 0.0
      %1085 = vmatprep.subr.mxu0 0.0
      %1086 = vmatpush1.msra.mxu0 0.0
      %1087 = vmatprep.mubr.f32.mxu0 0.0
      %1088 = vmatmul.mubr.f32.gmra.mrb[0].mxu0 %v1018
      %v1089 = vpop.f32.mrb[0].mxu0
      %v1090 = vadd.f32 0.0, %v1089
      %v1091 = vpop.f32.mrb[0].mxu0
      %v1092 = vadd.f32 0.0, %v1091
      %1093 = vmatprep.mubr.f32.mxu0 0.0
      %1094 = vmatmul.mubr.f32.gmra.mrb[0].mxu0 %v1021
      %v1095 = vpop.f32.mrb[0].mxu0
      %v1096 = vadd.f32 0.0, %v1095
      %v1097 = vpop.f32.mrb[0].mxu0
      %v1098 = vadd.f32 0.0, %v1097
      %1099 = vdwg.mxu0
      %v1100 = vadd.f32 %v1090, %v1092
      %1101 = vadd.xlane.f32.xlu0 %v1100
      %v1102 = vpop.xlane.xlu0 %1101
      %v1103 = vadd.f32 %v1096, %v1098
      %1104 = vadd.xlane.f32.xlu0 %v1103
      %v1105 = vpop.xlane.xlu0 %1104
      %v1106 = vmul.f32 %v1102, 0.00390625
      %v1107 = vmul.f32 %v1105, 0.00390625
      %v1109 = vsel %vm522, %v1013, 0
      %v1112 = vsel %vm522, %v1014, 0
      %1114 = vmatprep.subr.mxu0 %v1106
      %1115 = vmatpush1.msra.mxu0 %v1106
      %1116 = vmatprep.subr.mxu0 %v1107
      %1117 = vmatpush1.msra.mxu0 %v1107
      %1118 = vmatprep.subr.mxu0 0.0
      %1119 = vmatpush1.msra.mxu0 0.0
      %1120 = vmatprep.subr.mxu0 0.0
      %1121 = vmatpush1.msra.mxu0 0.0
      %1122 = vmatprep.subr.mxu0 0.0
      %1123 = vmatpush1.msra.mxu0 0.0
      %1124 = vmatprep.subr.mxu0 0.0
      %1125 = vmatpush1.msra.mxu0 0.0
      %1126 = vmatprep.subr.mxu0 0.0
      %1127 = vmatpush1.msra.mxu0 0.0
      %1128 = vmatprep.subr.mxu0 0.0
      %1129 = vmatpush1.msra.mxu0 0.0
      %1130 = vmatprep.subr.mxu0 0.0
      %1131 = vmatpush1.msra.mxu0 0.0
      %1132 = vmatprep.subr.mxu0 0.0
      %1133 = vmatpush1.msra.mxu0 0.0
      %1134 = vmatprep.subr.mxu0 0.0
      %1135 = vmatpush1.msra.mxu0 0.0
      %1136 = vmatprep.subr.mxu0 0.0
      %1137 = vmatpush1.msra.mxu0 0.0
      %1138 = vmatprep.subr.mxu0 0.0
      %1139 = vmatpush1.msra.mxu0 0.0
      %1140 = vmatprep.subr.mxu0 0.0
      %1141 = vmatpush1.msra.mxu0 0.0
      %1142 = vmatprep.subr.mxu0 0.0
      %1143 = vmatpush1.msra.mxu0 0.0
      %1144 = vmatprep.subr.mxu0 0.0
      %1145 = vmatpush1.msra.mxu0 0.0
      %1146 = vmatprep.subr.mxu0 0.0
      %1147 = vmatpush1.msra.mxu0 0.0
      %1148 = vmatprep.subr.mxu0 0.0
      %1149 = vmatpush1.msra.mxu0 0.0
      %1150 = vmatprep.subr.mxu0 0.0
      %1151 = vmatpush1.msra.mxu0 0.0
      %1152 = vmatprep.subr.mxu0 0.0
      %1153 = vmatpush1.msra.mxu0 0.0
      %1154 = vmatprep.subr.mxu0 0.0
      %1155 = vmatpush1.msra.mxu0 0.0
      %1156 = vmatprep.subr.mxu0 0.0
      %1157 = vmatpush1.msra.mxu0 0.0
      %1158 = vmatprep.subr.mxu0 0.0
      %1159 = vmatpush1.msra.mxu0 0.0
      %1160 = vmatprep.subr.mxu0 0.0
      %1161 = vmatpush1.msra.mxu0 0.0
      %1162 = vmatprep.subr.mxu0 0.0
      %1163 = vmatpush1.msra.mxu0 0.0
      %1164 = vmatprep.subr.mxu0 0.0
      %1165 = vmatpush1.msra.mxu0 0.0
      %1166 = vmatprep.subr.mxu0 0.0
      %1167 = vmatpush1.msra.mxu0 0.0
      %1168 = vmatprep.subr.mxu0 0.0
      %1169 = vmatpush1.msra.mxu0 0.0
      %1170 = vmatprep.subr.mxu0 0.0
      %1171 = vmatpush1.msra.mxu0 0.0
      %1172 = vmatprep.subr.mxu0 0.0
      %1173 = vmatpush1.msra.mxu0 0.0
      %1174 = vmatprep.subr.mxu0 0.0
      %1175 = vmatpush1.msra.mxu0 0.0
      %1176 = vmatprep.subr.mxu0 0.0
      %1177 = vmatpush1.msra.mxu0 0.0
      %1178 = vmatprep.mubr.f32.mxu0 0.0
      %1179 = vmatmul.mubr.f32.gmra.mrb[0].mxu0 %v1109
      %v1180 = vpop.f32.mrb[0].mxu0
      %v1181 = vadd.f32 0.0, %v1180
      %v1182 = vpop.f32.mrb[0].mxu0
      %v1183 = vadd.f32 0.0, %v1182
      %1184 = vmatprep.mubr.f32.mxu0 0.0
      %1185 = vmatmul.mubr.f32.gmra.mrb[0].mxu0 %v1112
      %v1186 = vpop.f32.mrb[0].mxu0
      %v1187 = vadd.f32 0.0, %v1186
      %v1188 = vpop.f32.mrb[0].mxu0
      %v1189 = vadd.f32 0.0, %v1188
      %1190 = vdwg.mxu0
      %v1191 = vsub.f32 %v1003, %v1181
      %v1192 = vsub.f32 %v1005, %v1183
      %v1193 = vsub.f32 %v1009, %v1187
      %v1194 = vsub.f32 %v1011, %v1189
      %v1195 = vmul.f32 %v1191, %v1191
      %v1196 = vmul.f32 %v1192, %v1192
      %v1197 = vmul.f32 %v1193, %v1193
      %v1198 = vmul.f32 %v1194, %v1194
      %1199 = vmatprep.subr.mxu0 %v1196
      %1200 = vmatpush1.msra.mxu0 %v1195
      %1201 = vmatprep.subr.mxu0 %v1198
      %1202 = vmatpush1.msra.mxu0 %v1197
      %1203 = vmatprep.subr.mxu0 0.0
      %1204 = vmatpush1.msra.mxu0 0.0
      %1205 = vmatprep.subr.mxu0 0.0
      %1206 = vmatpush1.msra.mxu0 0.0
      %1207 = vmatprep.subr.mxu0 0.0
      %1208 = vmatpush1.msra.mxu0 0.0
      %1209 = vmatprep.subr.mxu0 0.0
      %1210 = vmatpush1.msra.mxu0 0.0
      %1211 = vmatprep.subr.mxu0 0.0
      %1212 = vmatpush1.msra.mxu0 0.0
      %1213 = vmatprep.subr.mxu0 0.0
      %1214 = vmatpush1.msra.mxu0 0.0
      %1215 = vmatprep.subr.mxu0 0.0
      %1216 = vmatpush1.msra.mxu0 0.0
      %1217 = vmatprep.subr.mxu0 0.0
      %1218 = vmatpush1.msra.mxu0 0.0
      %1219 = vmatprep.subr.mxu0 0.0
      %1220 = vmatpush1.msra.mxu0 0.0
      %1221 = vmatprep.subr.mxu0 0.0
      %1222 = vmatpush1.msra.mxu0 0.0
      %1223 = vmatprep.subr.mxu0 0.0
      %1224 = vmatpush1.msra.mxu0 0.0
      %1225 = vmatprep.subr.mxu0 0.0
      %1226 = vmatpush1.msra.mxu0 0.0
      %1227 = vmatprep.subr.mxu0 0.0
      %1228 = vmatpush1.msra.mxu0 0.0
      %1229 = vmatprep.subr.mxu0 0.0
      %1230 = vmatpush1.msra.mxu0 0.0
      %1231 = vmatprep.subr.mxu0 0.0
      %1232 = vmatpush1.msra.mxu0 0.0
      %1233 = vmatprep.subr.mxu0 0.0
      %1234 = vmatpush1.msra.mxu0 0.0
      %1235 = vmatprep.subr.mxu0 0.0
      %1236 = vmatpush1.msra.mxu0 0.0
      %1237 = vmatprep.subr.mxu0 0.0
      %1238 = vmatpush1.msra.mxu0 0.0
      %1239 = vmatprep.subr.mxu0 0.0
      %1240 = vmatpush1.msra.mxu0 0.0
      %1241 = vmatprep.subr.mxu0 0.0
      %1242 = vmatpush1.msra.mxu0 0.0
      %1243 = vmatprep.subr.mxu0 0.0
      %1244 = vmatpush1.msra.mxu0 0.0
      %1245 = vmatprep.subr.mxu0 0.0
      %1246 = vmatpush1.msra.mxu0 0.0
      %1247 = vmatprep.subr.mxu0 0.0
      %1248 = vmatpush1.msra.mxu0 0.0
      %1249 = vmatprep.subr.mxu0 0.0
      %1250 = vmatpush1.msra.mxu0 0.0
      %1251 = vmatprep.subr.mxu0 0.0
      %1252 = vmatpush1.msra.mxu0 0.0
      %1253 = vmatprep.subr.mxu0 0.0
      %1254 = vmatpush1.msra.mxu0 0.0
      %1255 = vmatprep.subr.mxu0 0.0
      %1256 = vmatpush1.msra.mxu0 0.0
      %1257 = vmatprep.subr.mxu0 0.0
      %1258 = vmatpush1.msra.mxu0 0.0
      %1259 = vmatprep.subr.mxu0 0.0
      %1260 = vmatpush1.msra.mxu0 0.0
      %1261 = vmatprep.subr.mxu0 0.0
      %1262 = vmatpush1.msra.mxu0 0.0
      %1263 = vmatprep.mubr.f32.mxu0 0.0
      %1264 = vmatmul.mubr.f32.gmra.mrb[0].mxu0 %v1018
      %v1265 = vpop.f32.mrb[0].mxu0
      %v1266 = vadd.f32 0.0, %v1265
      %v1267 = vpop.f32.mrb[0].mxu0
      %v1268 = vadd.f32 0.0, %v1267
      %1269 = vmatprep.mubr.f32.mxu0 0.0
      %1270 = vmatmul.mubr.f32.gmra.mrb[0].mxu0 %v1021
      %v1271 = vpop.f32.mrb[0].mxu0
      %v1272 = vadd.f32 0.0, %v1271
      %v1273 = vpop.f32.mrb[0].mxu0
      %v1274 = vadd.f32 0.0, %v1273
      %1275 = vdwg.mxu0
      %v1276 = vadd.f32 %v1266, %v1268
      %1277 = vadd.xlane.f32.xlu0 %v1276
      %v1278 = vpop.xlane.xlu0 %1277
      %v1279 = vadd.f32 %v1272, %v1274
      %1280 = vadd.xlane.f32.xlu0 %v1279
      %v1281 = vpop.xlane.xlu0 %1280
      %v1282 = vmul.f32 %v1278, 0.00390625
      %v1283 = vmul.f32 %v1281, 0.00390625
      %v1284 = vadd.f32 %v1282, 1e-05
      %v1285 = vadd.f32 %v1283, 1e-05
      %v1286 = vrsqrt.pop %v1284
      %v1287 = vrsqrt.pop %v1285
      %1288 = vmatprep.subr.mxu0 %v1286
      %1289 = vmatpush1.msra.mxu0 %v1286
      %1290 = vmatprep.subr.mxu0 %v1287
      %1291 = vmatpush1.msra.mxu0 %v1287
      %1292 = vmatprep.subr.mxu0 0.0
      %1293 = vmatpush1.msra.mxu0 0.0
      %1294 = vmatprep.subr.mxu0 0.0
      %1295 = vmatpush1.msra.mxu0 0.0
      %1296 = vmatprep.subr.mxu0 0.0
      %1297 = vmatpush1.msra.mxu0 0.0
      %1298 = vmatprep.subr.mxu0 0.0
      %1299 = vmatpush1.msra.mxu0 0.0
      %1300 = vmatprep.subr.mxu0 0.0
      %1301 = vmatpush1.msra.mxu0 0.0
      %1302 = vmatprep.subr.mxu0 0.0
      %1303 = vmatpush1.msra.mxu0 0.0
      %1304 = vmatprep.subr.mxu0 0.0
      %1305 = vmatpush1.msra.mxu0 0.0
      %1306 = vmatprep.subr.mxu0 0.0
      %1307 = vmatpush1.msra.mxu0 0.0
      %1308 = vmatprep.subr.mxu0 0.0
      %1309 = vmatpush1.msra.mxu0 0.0
      %1310 = vmatprep.subr.mxu0 0.0
      %1311 = vmatpush1.msra.mxu0 0.0
      %1312 = vmatprep.subr.mxu0 0.0
      %1313 = vmatpush1.msra.mxu0 0.0
      %1314 = vmatprep.subr.mxu0 0.0
      %1315 = vmatpush1.msra.mxu0 0.0
      %1316 = vmatprep.subr.mxu0 0.0
      %1317 = vmatpush1.msra.mxu0 0.0
      %1318 = vmatprep.subr.mxu0 0.0
      %1319 = vmatpush1.msra.mxu0 0.0
      %1320 = vmatprep.subr.mxu0 0.0
      %1321 = vmatpush1.msra.mxu0 0.0
      %1322 = vmatprep.subr.mxu0 0.0
      %1323 = vmatpush1.msra.mxu0 0.0
      %1324 = vmatprep.subr.mxu0 0.0
      %1325 = vmatpush1.msra.mxu0 0.0
      %1326 = vmatprep.subr.mxu0 0.0
      %1327 = vmatpush1.msra.mxu0 0.0
      %1328 = vmatprep.subr.mxu0 0.0
      %1329 = vmatpush1.msra.mxu0 0.0
      %1330 = vmatprep.subr.mxu0 0.0
      %1331 = vmatpush1.msra.mxu0 0.0
      %1332 = vmatprep.subr.mxu0 0.0
      %1333 = vmatpush1.msra.mxu0 0.0
      %1334 = vmatprep.subr.mxu0 0.0
      %1335 = vmatpush1.msra.mxu0 0.0
      %1336 = vmatprep.subr.mxu0 0.0
      %1337 = vmatpush1.msra.mxu0 0.0
      %1338 = vmatprep.subr.mxu0 0.0
      %1339 = vmatpush1.msra.mxu0 0.0
      %1340 = vmatprep.subr.mxu0 0.0
      %1341 = vmatpush1.msra.mxu0 0.0
      %1342 = vmatprep.subr.mxu0 0.0
      %1343 = vmatpush1.msra.mxu0 0.0
      %1344 = vmatprep.subr.mxu0 0.0
      %1345 = vmatpush1.msra.mxu0 0.0
      %1346 = vmatprep.subr.mxu0 0.0
      %1347 = vmatpush1.msra.mxu0 0.0
      %1348 = vmatprep.subr.mxu0 0.0
      %1349 = vmatpush1.msra.mxu0 0.0
      %1350 = vmatprep.subr.mxu0 0.0
      %1351 = vmatpush1.msra.mxu0 0.0
      %1352 = vmatprep.mubr.f32.mxu0 0.0
      %1353 = vmatmul.mubr.f32.gmra.mrb[0].mxu0 %v1109
      %v1354 = vpop.f32.mrb[0].mxu0
      %v1355 = vadd.f32 0.0, %v1354
      %v1356 = vpop.f32.mrb[0].mxu0
      %v1357 = vadd.f32 0.0, %v1356
      %1358 = vmatprep.mubr.f32.mxu0 0.0
      %1359 = vmatmul.mubr.f32.gmra.mrb[0].mxu0 %v1112
      %v1360 = vpop.f32.mrb[0].mxu0
      %v1361 = vadd.f32 0.0, %v1360
      %v1362 = vpop.f32.mrb[0].mxu0
      %v1363 = vadd.f32 0.0, %v1362
      %1364 = vdwg.mxu0
      %v1365 = vmul.f32 %v1191, %v1355
      %v1366 = vmul.f32 %v1192, %v1357
      %v1367 = vmul.f32 %v1193, %v1361
      %v1368 = vmul.f32 %v1194, %v1363
      %1370 = vset.pattern.permute.xlu0 0
      %1371 = vperm.xlu0 %1370, %v418
      %v1372 = vpop.permute.xlu0 %1371
      %1375 = vset.pattern.permute.xlu0 0
      %1376 = vperm.xlu0 %1375, %v419
      %v1377 = vpop.permute.xlu0 %1376
      %v1379 = vmul.f32 %v1365, %v1372
      %v1380 = vmul.f32 %v1366, %v1372
      %v1381 = vmul.f32 %v1367, %v1377
      %v1382 = vmul.f32 %v1368, %v1377
      %1384 = vset.pattern.permute.xlu0 0
      %1385 = vperm.xlu0 %1384, %v420
      %v1386 = vpop.permute.xlu0 %1385
      %1389 = vset.pattern.permute.xlu0 0
      %1390 = vperm.xlu0 %1389, %v421
      %v1391 = vpop.permute.xlu0 %1390
      %v1393 = vadd.f32 %v1379, %v1386
      %v1394 = vadd.f32 %v1380, %v1386
      %v1395 = vadd.f32 %v1381, %v1391
      %v1396 = vadd.f32 %v1382, %v1391
      %v1397 = vmul.f32 %v1393, 0.5
      %v1398 = vmul.f32 %v1394, 0.5
      %v1399 = vmul.f32 %v1395, 0.5
      %v1400 = vmul.f32 %v1396, 0.5
      %v1401 = vmul.f32 %v1393, 0.70710677
      %v1402 = vmul.f32 %v1394, 0.70710677
      %v1403 = vmul.f32 %v1395, 0.70710677
      %v1404 = vmul.f32 %v1396, 0.70710677
      %vm1405 = vcmp.ge.f32.partialorder %v1401, 0.0
      %vm1406 = vcmp.ge.f32.partialorder %v1402, 0.0
      %vm1407 = vcmp.ge.f32.partialorder %v1403, 0.0
      %vm1408 = vcmp.ge.f32.partialorder %v1404, 0.0
      %v1409 = vsel %vm1405, 1.0, -1.0
      %v1410 = vsel %vm1406, 1.0, -1.0
      %v1411 = vsel %vm1407, 1.0, -1.0
      %v1412 = vsel %vm1408, 1.0, -1.0
      %v1413 = vand.u32 2147483647, %v1401
      %v1414 = vand.u32 2147483647, %v1402
      %v1415 = vand.u32 2147483647, %v1403
      %v1416 = vand.u32 2147483647, %v1404
      %v1417 = vmul.f32 %v1413, 0.3275911
      %v1418 = vmul.f32 %v1414, 0.3275911
      %v1419 = vmul.f32 %v1415, 0.3275911
      %v1420 = vmul.f32 %v1416, 0.3275911
      %v1421 = vadd.f32 %v1417, 1.0
      %v1422 = vadd.f32 %v1418, 1.0
      %v1423 = vadd.f32 %v1419, 1.0
      %v1424 = vadd.f32 %v1420, 1.0
      %v1425 = vrcp.pop %v1421
      %v1426 = vrcp.pop %v1422
      %v1427 = vrcp.pop %v1423
      %v1428 = vrcp.pop %v1424
      %v1429 = vmul.f32 %v1425, 1.0614054
      %v1430 = vmul.f32 %v1426, 1.0614054
      %v1431 = vmul.f32 %v1427, 1.0614054
      %v1432 = vmul.f32 %v1428, 1.0614054
      %v1433 = vadd.f32 %v1429, -1.4531521
      %v1434 = vadd.f32 %v1430, -1.4531521
      %v1435 = vadd.f32 %v1431, -1.4531521
      %v1436 = vadd.f32 %v1432, -1.4531521
      %v1437 = vmul.f32 %v1433, %v1425
      %v1438 = vmul.f32 %v1434, %v1426
      %v1439 = vmul.f32 %v1435, %v1427
      %v1440 = vmul.f32 %v1436, %v1428
      %v1441 = vadd.f32 %v1437, 1.4214138
      %v1442 = vadd.f32 %v1438, 1.4214138
      %v1443 = vadd.f32 %v1439, 1.4214138
      %v1444 = vadd.f32 %v1440, 1.4214138
      %v1445 = vmul.f32 %v1441, %v1425
      %v1446 = vmul.f32 %v1442, %v1426
      %v1447 = vmul.f32 %v1443, %v1427
      %v1448 = vmul.f32 %v1444, %v1428
      %v1449 = vadd.f32 %v1445, -0.28449672
      %v1450 = vadd.f32 %v1446, -0.28449672
      %v1451 = vadd.f32 %v1447, -0.28449672
      %v1452 = vadd.f32 %v1448, -0.28449672
      %v1453 = vmul.f32 %v1449, %v1425
      %v1454 = vmul.f32 %v1450, %v1426
      %v1455 = vmul.f32 %v1451, %v1427
      %v1456 = vmul.f32 %v1452, %v1428
      %v1457 = vadd.f32 %v1453, 0.2548296
      %v1458 = vadd.f32 %v1454, 0.2548296
      %v1459 = vadd.f32 %v1455, 0.2548296
      %v1460 = vadd.f32 %v1456, 0.2548296
      %v1461 = vmul.f32 %v1457, %v1425
      %v1462 = vmul.f32 %v1458, %v1426
      %v1463 = vmul.f32 %v1459, %v1427
      %v1464 = vmul.f32 %v1460, %v1428
      %v1465 = vsub.f32 0.0, %v1413
      %v1466 = vsub.f32 0.0, %v1414
      %v1467 = vsub.f32 0.0, %v1415
      %v1468 = vsub.f32 0.0, %v1416
      %v1469 = vmul.f32 %v1465, %v1413
      %v1470 = vmul.f32 %v1466, %v1414
      %v1471 = vmul.f32 %v1467, %v1415
      %v1472 = vmul.f32 %v1468, %v1416
      %v1473 = vmul.f32 %v1469, 1.442695
      %v1474 = vpow.pop %v1473
      %v1475 = vmul.f32 %v1470, 1.442695
      %v1476 = vpow.pop %v1475
      %v1477 = vmul.f32 %v1471, 1.442695
      %v1478 = vpow.pop %v1477
      %v1479 = vmul.f32 %v1472, 1.442695
      %v1480 = vpow.pop %v1479
      %v1481 = vmul.f32 %v1461, %v1474
      %v1482 = vmul.f32 %v1462, %v1476
      %v1483 = vmul.f32 %v1463, %v1478
      %v1484 = vmul.f32 %v1464, %v1480
      %v1485 = vsub.f32 1.0, %v1481
      %v1486 = vsub.f32 1.0, %v1482
      %v1487 = vsub.f32 1.0, %v1483
      %v1488 = vsub.f32 1.0, %v1484
      %v1489 = vmul.f32 %v1409, %v1485
      %v1490 = vmul.f32 %v1410, %v1486
      %v1491 = vmul.f32 %v1411, %v1487
      %v1492 = vmul.f32 %v1412, %v1488
      %v1493 = vadd.f32 %v1489, 1.0
      %v1494 = vadd.f32 %v1490, 1.0
      %v1495 = vadd.f32 %v1491, 1.0
      %v1496 = vadd.f32 %v1492, 1.0
      %v1497 = vmul.f32 %v1397, %v1493
      %v1498 = vmul.f32 %v1398, %v1494
      %v1499 = vmul.f32 %v1399, %v1495
      %v1500 = vmul.f32 %v1400, %v1496
      %v1501 = vld [vmem:[%s5] sm:$0xff]
      %v1502 = vld [vmem:[%s5 + $0x8] sm:$0xff]
      %v1503 = vld [vmem:[%s6] sm:$0xff]
      %v1504 = vld [vmem:[%s6 + $0x8] sm:$0xff]
      %v1505 = vld [vmem:[%s11] sm:$0x3]
      %v1507 = vlaneseq
      %v1508 = vshrl.u32 %v1507, 7
      %v1509 = vsub.s32 0, %v1508
      %v1510 = vrot.slane %v1505, %v1509
      %v1511 = vlaneseq
      %v1512 = vshrl.u32 %v1511, 7
      %v1513 = vsub.s32 1, %v1512
      %v1514 = vrot.slane %v1505, %v1513
      %1515 = vrot.lane.b32.xlu0 %v1510, 111
      %v1516 = vpop.permute.xlu0 %1515
      %1517 = vrot.lane.b32.xlu0 %v1514, 111
      %v1518 = vpop.permute.xlu0 %1517
      %v1519 = vsel %vm436, %v1516, %v1518
      %v1523 = vmul.f32 %v1498, %v1516
      %v1524 = vmul.f32 %v1497, %v1519
      %v1525 = vmul.f32 %v1498, %v1518
      %v1526 = vmul.f32 %v1500, %v1516
      %v1527 = vmul.f32 %v1499, %v1519
      %v1528 = vmul.f32 %v1500, %v1518
      %1535 = vrot.lane.b32.xlu0 %v1523, 17
      %v1536 = vpop.permute.xlu0 %1535
      %1537 = vrot.lane.b32.xlu0 %v1524, 17
      %v1538 = vpop.permute.xlu0 %1537
      %1539 = vrot.lane.b32.xlu0 %v1525, 17
      %v1540 = vpop.permute.xlu0 %1539
      %1541 = vrot.lane.b32.xlu0 %v1526, 17
      %v1542 = vpop.permute.xlu0 %1541
      %1543 = vrot.lane.b32.xlu0 %v1527, 17
      %v1544 = vpop.permute.xlu0 %1543
      %1545 = vrot.lane.b32.xlu0 %v1528, 17
      %v1546 = vpop.permute.xlu0 %1545
      %v1547 = vsel %vm465, %v1536, %v1538
      %v1548 = vsel %vm465, %v1538, %v1540
      %v1549 = vsel %vm465, %v1542, %v1544
      %v1550 = vsel %vm465, %v1544, %v1546
      %1555 = vst [vmem:[#allocation2] sm:$0xff] %v1547
      %1556 = vst [vmem:[#allocation2 + $0x8] sm:$0xff] %v1548
      %1557 = vst [vmem:[#allocation2 + $0x10] sm:$0xff] %v1549
      %1558 = vst [vmem:[#allocation2 + $0x18] sm:$0xff] %v1550
      %v1559 = vld [vmem:[%s478] sm:$0x3]
      %v1561 = vlaneseq
      %v1562 = vshrl.u32 %v1561, 7
      %v1563 = vsub.s32 0, %v1562
      %v1564 = vrot.slane %v1559, %v1563
      %v1565 = vlaneseq
      %v1566 = vshrl.u32 %v1565, 7
      %v1567 = vsub.s32 1, %v1566
      %v1568 = vrot.slane %v1559, %v1567
      %1569 = vrot.lane.b32.xlu0 %v1564, 112
      %v1570 = vpop.permute.xlu0 %1569
      %1571 = vrot.lane.b32.xlu0 %v1568, 112
      %v1572 = vpop.permute.xlu0 %1571
      %v1573 = vsel %vm493, %v1570, %v1572
      %v1577 = vmul.f32 %v1498, %v1570
      %v1578 = vmul.f32 %v1497, %v1573
      %v1579 = vmul.f32 %v1498, %v1572
      %v1580 = vmul.f32 %v1500, %v1570
      %v1581 = vmul.f32 %v1499, %v1573
      %v1582 = vmul.f32 %v1500, %v1572
      %1589 = vrot.lane.b32.xlu0 %v1577, 16
      %v1590 = vpop.permute.xlu0 %1589
      %1591 = vrot.lane.b32.xlu0 %v1578, 16
      %v1592 = vpop.permute.xlu0 %1591
      %1593 = vrot.lane.b32.xlu0 %v1579, 16
      %v1594 = vpop.permute.xlu0 %1593
      %1595 = vrot.lane.b32.xlu0 %v1580, 16
      %v1596 = vpop.permute.xlu0 %1595
      %1597 = vrot.lane.b32.xlu0 %v1581, 16
      %v1598 = vpop.permute.xlu0 %1597
      %1599 = vrot.lane.b32.xlu0 %v1582, 16
      %v1600 = vpop.permute.xlu0 %1599
      %v1601 = vsel %vm522, %v1590, %v1592
      %v1602 = vsel %vm522, %v1592, %v1594
      %v1603 = vsel %vm522, %v1596, %v1598
      %v1604 = vsel %vm522, %v1598, %v1600
      %1609 = vst [vmem:[#allocation2 + $0x20] sm:$0xff] %v1601
      %1610 = vst [vmem:[#allocation2 + $0x28] sm:$0xff] %v1602
      %1611 = vst [vmem:[#allocation2 + $0x30] sm:$0xff] %v1603
      %1612 = vst [vmem:[#allocation2 + $0x38] sm:$0xff] %v1604
      %v1613 = vld [vmem:[%s535] sm:$0x3]
      %v1615 = vlaneseq
      %v1616 = vshrl.u32 %v1615, 7
      %v1617 = vsub.s32 0, %v1616
      %v1618 = vrot.slane %v1613, %v1617
      %v1619 = vlaneseq
      %v1620 = vshrl.u32 %v1619, 7
      %v1621 = vsub.s32 1, %v1620
      %v1622 = vrot.slane %v1613, %v1621
      %1623 = vrot.lane.b32.xlu0 %v1618, 113
      %v1624 = vpop.permute.xlu0 %1623
      %1625 = vrot.lane.b32.xlu0 %v1622, 113
      %v1626 = vpop.permute.xlu0 %1625
      %v1627 = vsel %vm550, %v1624, %v1626
      %v1631 = vmul.f32 %v1498, %v1624
      %v1632 = vmul.f32 %v1497, %v1627
      %v1633 = vmul.f32 %v1498, %v1626
      %v1634 = vmul.f32 %v1500, %v1624
      %v1635 = vmul.f32 %v1499, %v1627
      %v1636 = vmul.f32 %v1500, %v1626
      %1643 = vrot.lane.b32.xlu0 %v1631, 15
      %v1644 = vpop.permute.xlu0 %1643
      %1645 = vrot.lane.b32.xlu0 %v1632, 15
      %v1646 = vpop.permute.xlu0 %1645
      %1647 = vrot.lane.b32.xlu0 %v1633, 15
      %v1648 = vpop.permute.xlu0 %1647
      %1649 = vrot.lane.b32.xlu0 %v1634, 15
      %v1650 = vpop.permute.xlu0 %1649
      %1651 = vrot.lane.b32.xlu0 %v1635, 15
      %v1652 = vpop.permute.xlu0 %1651
      %1653 = vrot.lane.b32.xlu0 %v1636, 15
      %v1654 = vpop.permute.xlu0 %1653
      %v1655 = vsel %vm579, %v1644, %v1646
      %v1656 = vsel %vm579, %v1646, %v1648
      %v1657 = vsel %vm579, %v1650, %v1652
      %v1658 = vsel %vm579, %v1652, %v1654
      %1663 = vst [vmem:[#allocation2 + $0x40] sm:$0xff] %v1655
      %1664 = vst [vmem:[#allocation2 + $0x48] sm:$0xff] %v1656
      %1665 = vst [vmem:[#allocation2 + $0x50] sm:$0xff] %v1657
      %1666 = vst [vmem:[#allocation2 + $0x58] sm:$0xff] %v1658
      %v1667 = vld [vmem:[%s592] sm:$0x3]
      %v1669 = vlaneseq
      %v1670 = vshrl.u32 %v1669, 7
      %v1671 = vsub.s32 0, %v1670
      %v1672 = vrot.slane %v1667, %v1671
      %v1673 = vlaneseq
      %v1674 = vshrl.u32 %v1673, 7
      %v1675 = vsub.s32 1, %v1674
      %v1676 = vrot.slane %v1667, %v1675
      %1677 = vrot.lane.b32.xlu0 %v1672, 127
      %v1678 = vpop.permute.xlu0 %1677
      %1679 = vrot.lane.b32.xlu0 %v1676, 127
      %v1680 = vpop.permute.xlu0 %1679
      %v1681 = vsel %vm607, %v1678, %v1680
      %v1685 = vmul.f32 %v1498, %v1678
      %v1686 = vmul.f32 %v1497, %v1681
      %v1687 = vmul.f32 %v1498, %v1680
      %v1688 = vmul.f32 %v1500, %v1678
      %v1689 = vmul.f32 %v1499, %v1681
      %v1690 = vmul.f32 %v1500, %v1680
      %1697 = vrot.lane.b32.xlu0 %v1685, 1
      %v1698 = vpop.permute.xlu0 %1697
      %1699 = vrot.lane.b32.xlu0 %v1686, 1
      %v1700 = vpop.permute.xlu0 %1699
      %1701 = vrot.lane.b32.xlu0 %v1687, 1
      %v1702 = vpop.permute.xlu0 %1701
      %1703 = vrot.lane.b32.xlu0 %v1688, 1
      %v1704 = vpop.permute.xlu0 %1703
      %1705 = vrot.lane.b32.xlu0 %v1689, 1
      %v1706 = vpop.permute.xlu0 %1705
      %1707 = vrot.lane.b32.xlu0 %v1690, 1
      %v1708 = vpop.permute.xlu0 %1707
      %v1709 = vsel %vm636, %v1698, %v1700
      %v1710 = vsel %vm636, %v1700, %v1702
      %v1711 = vsel %vm636, %v1704, %v1706
      %v1712 = vsel %vm636, %v1706, %v1708
      %1717 = vst [vmem:[#allocation2 + $0x60] sm:$0xff] %v1709
      %1718 = vst [vmem:[#allocation2 + $0x68] sm:$0xff] %v1710
      %1719 = vst [vmem:[#allocation2 + $0x70] sm:$0xff] %v1711
      %1720 = vst [vmem:[#allocation2 + $0x78] sm:$0xff] %v1712
      %v1721 = vld [vmem:[%s649] sm:$0x3]
      %v1723 = vlaneseq
      %v1724 = vshrl.u32 %v1723, 7
      %v1725 = vsub.s32 0, %v1724
      %v1726 = vrot.slane %v1721, %v1725
      %v1727 = vlaneseq
      %v1728 = vshrl.u32 %v1727, 7
      %v1729 = vsub.s32 1, %v1728
      %v1730 = vrot.slane %v1721, %v1729
      %v1733 = vmul.f32 %v1497, %v1726
      %v1734 = vmul.f32 %v1498, %v1730
      %v1735 = vmul.f32 %v1499, %v1726
      %v1736 = vmul.f32 %v1500, %v1730
      %1737 = vst [vmem:[#allocation2 + $0x80] sm:$0xff] %v1733
      %1738 = vst [vmem:[#allocation2 + $0x88] sm:$0xff] %v1734
      %1739 = vst [vmem:[#allocation2 + $0x90] sm:$0xff] %v1735
      %1740 = vst [vmem:[#allocation2 + $0x98] sm:$0xff] %v1736
      %v1741 = vld [vmem:[%s670] sm:$0x3]
      %v1743 = vlaneseq
      %v1744 = vshrl.u32 %v1743, 7
      %v1745 = vsub.s32 0, %v1744
      %v1746 = vrot.slane %v1741, %v1745
      %v1747 = vlaneseq
      %v1748 = vshrl.u32 %v1747, 7
      %v1749 = vsub.s32 1, %v1748
      %v1750 = vrot.slane %v1741, %v1749
      %1751 = vrot.lane.b32.xlu0 %v1746, 1
      %v1752 = vpop.permute.xlu0 %1751
      %1753 = vrot.lane.b32.xlu0 %v1750, 1
      %v1754 = vpop.permute.xlu0 %1753
      %v1755 = vsel %vm636, %v1752, %v1754
      %v1759 = vmul.f32 %v1497, %v1752
      %v1760 = vmul.f32 %v1498, %v1755
      %v1761 = vmul.f32 %v1497, %v1754
      %v1762 = vmul.f32 %v1499, %v1752
      %v1763 = vmul.f32 %v1500, %v1755
      %v1764 = vmul.f32 %v1499, %v1754
      %1771 = vrot.lane.b32.xlu0 %v1759, 127
      %v1772 = vpop.permute.xlu0 %1771
      %1773 = vrot.lane.b32.xlu0 %v1760, 127
      %v1774 = vpop.permute.xlu0 %1773
      %1775 = vrot.lane.b32.xlu0 %v1761, 127
      %v1776 = vpop.permute.xlu0 %1775
      %1777 = vrot.lane.b32.xlu0 %v1762, 127
      %v1778 = vpop.permute.xlu0 %1777
      %1779 = vrot.lane.b32.xlu0 %v1763, 127
      %v1780 = vpop.permute.xlu0 %1779
      %1781 = vrot.lane.b32.xlu0 %v1764, 127
      %v1782 = vpop.permute.xlu0 %1781
      %v1783 = vsel %vm607, %v1772, %v1774
      %v1784 = vsel %vm607, %v1774, %v1776
      %v1785 = vsel %vm607, %v1778, %v1780
      %v1786 = vsel %vm607, %v1780, %v1782
      %1791 = vst [vmem:[#allocation2 + $0xa0] sm:$0xff] %v1783
      %1792 = vst [vmem:[#allocation2 + $0xa8] sm:$0xff] %v1784
      %1793 = vst [vmem:[#allocation2 + $0xb0] sm:$0xff] %v1785
      %1794 = vst [vmem:[#allocation2 + $0xb8] sm:$0xff] %v1786
      %v1795 = vld [vmem:[%s725] sm:$0x3]
      %v1797 = vlaneseq
      %v1798 = vshrl.u32 %v1797, 7
      %v1799 = vsub.s32 0, %v1798
      %v1800 = vrot.slane %v1795, %v1799
      %v1801 = vlaneseq
      %v1802 = vshrl.u32 %v1801, 7
      %v1803 = vsub.s32 1, %v1802
      %v1804 = vrot.slane %v1795, %v1803
      %1805 = vrot.lane.b32.xlu0 %v1800, 15
      %v1806 = vpop.permute.xlu0 %1805
      %1807 = vrot.lane.b32.xlu0 %v1804, 15
      %v1808 = vpop.permute.xlu0 %1807
      %v1809 = vsel %vm579, %v1806, %v1808
      %v1813 = vmul.f32 %v1497, %v1806
      %v1814 = vmul.f32 %v1498, %v1809
      %v1815 = vmul.f32 %v1497, %v1808
      %v1816 = vmul.f32 %v1499, %v1806
      %v1817 = vmul.f32 %v1500, %v1809
      %v1818 = vmul.f32 %v1499, %v1808
      %1825 = vrot.lane.b32.xlu0 %v1813, 113
      %v1826 = vpop.permute.xlu0 %1825
      %1827 = vrot.lane.b32.xlu0 %v1814, 113
      %v1828 = vpop.permute.xlu0 %1827
      %1829 = vrot.lane.b32.xlu0 %v1815, 113
      %v1830 = vpop.permute.xlu0 %1829
      %1831 = vrot.lane.b32.xlu0 %v1816, 113
      %v1832 = vpop.permute.xlu0 %1831
      %1833 = vrot.lane.b32.xlu0 %v1817, 113
      %v1834 = vpop.permute.xlu0 %1833
      %1835 = vrot.lane.b32.xlu0 %v1818, 113
      %v1836 = vpop.permute.xlu0 %1835
      %v1837 = vsel %vm550, %v1826, %v1828
      %v1838 = vsel %vm550, %v1828, %v1830
      %v1839 = vsel %vm550, %v1832, %v1834
      %v1840 = vsel %vm550, %v1834, %v1836
      %1845 = vst [vmem:[#allocation2 + $0xc0] sm:$0xff] %v1837
      %1846 = vst [vmem:[#allocation2 + $0xc8] sm:$0xff] %v1838
      %1847 = vst [vmem:[#allocation2 + $0xd0] sm:$0xff] %v1839
      %1848 = vst [vmem:[#allocation2 + $0xd8] sm:$0xff] %v1840
      %v1849 = vld [vmem:[%s780] sm:$0x3]
      %v1851 = vlaneseq
      %v1852 = vshrl.u32 %v1851, 7
      %v1853 = vsub.s32 0, %v1852
      %v1854 = vrot.slane %v1849, %v1853
      %v1855 = vlaneseq
      %v1856 = vshrl.u32 %v1855, 7
      %v1857 = vsub.s32 1, %v1856
      %v1858 = vrot.slane %v1849, %v1857
      %1859 = vrot.lane.b32.xlu0 %v1854, 16
      %v1860 = vpop.permute.xlu0 %1859
      %1861 = vrot.lane.b32.xlu0 %v1858, 16
      %v1862 = vpop.permute.xlu0 %1861
      %v1863 = vsel %vm522, %v1860, %v1862
      %v1867 = vmul.f32 %v1497, %v1860
      %v1868 = vmul.f32 %v1498, %v1863
      %v1869 = vmul.f32 %v1497, %v1862
      %v1870 = vmul.f32 %v1499, %v1860
      %v1871 = vmul.f32 %v1500, %v1863
      %v1872 = vmul.f32 %v1499, %v1862
      %1879 = vrot.lane.b32.xlu0 %v1867, 112
      %v1880 = vpop.permute.xlu0 %1879
      %1881 = vrot.lane.b32.xlu0 %v1868, 112
      %v1882 = vpop.permute.xlu0 %1881
      %1883 = vrot.lane.b32.xlu0 %v1869, 112
      %v1884 = vpop.permute.xlu0 %1883
      %1885 = vrot.lane.b32.xlu0 %v1870, 112
      %v1886 = vpop.permute.xlu0 %1885
      %1887 = vrot.lane.b32.xlu0 %v1871, 112
      %v1888 = vpop.permute.xlu0 %1887
      %1889 = vrot.lane.b32.xlu0 %v1872, 112
      %v1890 = vpop.permute.xlu0 %1889
      %v1891 = vsel %vm493, %v1880, %v1882
      %v1892 = vsel %vm493, %v1882, %v1884
      %v1893 = vsel %vm493, %v1886, %v1888
      %v1894 = vsel %vm493, %v1888, %v1890
      %1899 = vst [vmem:[#allocation2 + $0xe0] sm:$0xff] %v1891
      %1900 = vst [vmem:[#allocation2 + $0xe8] sm:$0xff] %v1892
      %1901 = vst [vmem:[#allocation2 + $0xf0] sm:$0xff] %v1893
      %1902 = vst [vmem:[#allocation2 + $0xf8] sm:$0xff] %v1894
      %v1903 = vld [vmem:[%s835] sm:$0x3]
      %v1905 = vlaneseq
      %v1906 = vshrl.u32 %v1905, 7
      %v1907 = vsub.s32 0, %v1906
      %v1908 = vrot.slane %v1903, %v1907
      %v1909 = vlaneseq
      %v1910 = vshrl.u32 %v1909, 7
      %v1911 = vsub.s32 1, %v1910
      %v1912 = vrot.slane %v1903, %v1911
      %1913 = vrot.lane.b32.xlu0 %v1908, 17
      %v1914 = vpop.permute.xlu0 %1913
      %1915 = vrot.lane.b32.xlu0 %v1912, 17
      %v1916 = vpop.permute.xlu0 %1915
      %v1917 = vsel %vm465, %v1914, %v1916
      %v1921 = vmul.f32 %v1497, %v1914
      %v1922 = vmul.f32 %v1498, %v1917
      %v1923 = vmul.f32 %v1497, %v1916
      %v1924 = vmul.f32 %v1499, %v1914
      %v1925 = vmul.f32 %v1500, %v1917
      %v1926 = vmul.f32 %v1499, %v1916
      %1933 = vrot.lane.b32.xlu0 %v1921, 111
      %v1934 = vpop.permute.xlu0 %1933
      %1935 = vrot.lane.b32.xlu0 %v1922, 111
      %v1936 = vpop.permute.xlu0 %1935
      %1937 = vrot.lane.b32.xlu0 %v1923, 111
      %v1938 = vpop.permute.xlu0 %1937
      %1939 = vrot.lane.b32.xlu0 %v1924, 111
      %v1940 = vpop.permute.xlu0 %1939
      %1941 = vrot.lane.b32.xlu0 %v1925, 111
      %v1942 = vpop.permute.xlu0 %1941
      %1943 = vrot.lane.b32.xlu0 %v1926, 111
      %v1944 = vpop.permute.xlu0 %1943
      %v1945 = vsel %vm436, %v1934, %v1936
      %v1946 = vsel %vm436, %v1936, %v1938
      %v1947 = vsel %vm436, %v1940, %v1942
      %v1948 = vsel %vm436, %v1942, %v1944
      %1953 = vst [vmem:[#allocation2 + $0x100] sm:$0xff] %v1945
      %1954 = vst [vmem:[#allocation2 + $0x108] sm:$0xff] %v1946
      %1955 = vst [vmem:[#allocation2 + $0x110] sm:$0xff] %v1947
      %1956 = vst [vmem:[#allocation2 + $0x118] sm:$0xff] %v1948
      %v1957 = vld [vmem:[%s2] sm:$0xff]
      %v1958 = vld [vmem:[%s2 + $0x8] sm:$0xff]
      %v1959 = vld [vmem:[%s2 + $0x10] sm:$0xff]
      %v1960 = vld [vmem:[%s2 + $0x18] sm:$0xff]
      %v1961 = vld [vmem:[#allocation2] sm:$0xff]
      %v1962 = vld [vmem:[#allocation2 + $0x8] sm:$0xff]
      %v1963 = vld [vmem:[#allocation2 + $0x10] sm:$0xff]
      %v1964 = vld [vmem:[#allocation2 + $0x18] sm:$0xff]
      %v1965 = vld [vmem:[#allocation2 + $0x20] sm:$0xff]
      %v1966 = vld [vmem:[#allocation2 + $0x28] sm:$0xff]
      %v1967 = vld [vmem:[#allocation2 + $0x30] sm:$0xff]
      %v1968 = vld [vmem:[#allocation2 + $0x38] sm:$0xff]
      %v1969 = vld [vmem:[#allocation2 + $0x40] sm:$0xff]
      %v1970 = vld [vmem:[#allocation2 + $0x48] sm:$0xff]
      %v1971 = vld [vmem:[#allocation2 + $0x50] sm:$0xff]
      %v1972 = vld [vmem:[#allocation2 + $0x58] sm:$0xff]
      %v1973 = vld [vmem:[#allocation2 + $0x60] sm:$0xff]
      %v1974 = vld [vmem:[#allocation2 + $0x68] sm:$0xff]
      %v1975 = vld [vmem:[#allocation2 + $0x70] sm:$0xff]
      %v1976 = vld [vmem:[#allocation2 + $0x78] sm:$0xff]
      %v1977 = vld [vmem:[#allocation2 + $0x80] sm:$0xff]
      %v1978 = vld [vmem:[#allocation2 + $0x88] sm:$0xff]
      %v1979 = vld [vmem:[#allocation2 + $0x90] sm:$0xff]
      %v1980 = vld [vmem:[#allocation2 + $0x98] sm:$0xff]
      %v1981 = vld [vmem:[#allocation2 + $0xa0] sm:$0xff]
      %v1982 = vld [vmem:[#allocation2 + $0xa8] sm:$0xff]
      %v1983 = vld [vmem:[#allocation2 + $0xb0] sm:$0xff]
      %v1984 = vld [vmem:[#allocation2 + $0xb8] sm:$0xff]
      %v1985 = vld [vmem:[#allocation2 + $0xc0] sm:$0xff]
      %v1986 = vld [vmem:[#allocation2 + $0xc8] sm:$0xff]
      %v1987 = vld [vmem:[#allocation2 + $0xd0] sm:$0xff]
      %v1988 = vld [vmem:[#allocation2 + $0xd8] sm:$0xff]
      %v1989 = vld [vmem:[#allocation2 + $0xe0] sm:$0xff]
      %v1990 = vld [vmem:[#allocation2 + $0xe8] sm:$0xff]
      %v1991 = vld [vmem:[#allocation2 + $0xf0] sm:$0xff]
      %v1992 = vld [vmem:[#allocation2 + $0xf8] sm:$0xff]
      %v1993 = vld [vmem:[#allocation2 + $0x100] sm:$0xff]
      %v1994 = vld [vmem:[#allocation2 + $0x108] sm:$0xff]
      %v1995 = vld [vmem:[#allocation2 + $0x110] sm:$0xff]
      %v1996 = vld [vmem:[#allocation2 + $0x118] sm:$0xff]
      %v1998 = vsel %vm522, %v1958, 0
      %v2001 = vsel %vm522, %v1960, 0
      %2003 = vmatprep.subr.mxu0 %v1962
      %2004 = vmatpush1.msra.mxu0 %v1961
      %2005 = vmatprep.subr.mxu0 %v1964
      %2006 = vmatpush1.msra.mxu0 %v1963
      %2007 = vmatprep.subr.mxu0 %v1966
      %2008 = vmatpush1.msra.mxu0 %v1965
      %2009 = vmatprep.subr.mxu0 %v1968
      %2010 = vmatpush1.msra.mxu0 %v1967
      %2011 = vmatprep.subr.mxu0 %v1970
      %2012 = vmatpush1.msra.mxu0 %v1969
      %2013 = vmatprep.subr.mxu0 %v1972
      %2014 = vmatpush1.msra.mxu0 %v1971
      %2015 = vmatprep.subr.mxu0 %v1974
      %2016 = vmatpush1.msra.mxu0 %v1973
      %2017 = vmatprep.subr.mxu0 %v1976
      %2018 = vmatpush1.msra.mxu0 %v1975
      %2019 = vmatprep.subr.mxu0 %v1978
      %2020 = vmatpush1.msra.mxu0 %v1977
      %2021 = vmatprep.subr.mxu0 %v1980
      %2022 = vmatpush1.msra.mxu0 %v1979
      %2023 = vmatprep.subr.mxu0 %v1982
      %2024 = vmatpush1.msra.mxu0 %v1981
      %2025 = vmatprep.subr.mxu0 %v1984
      %2026 = vmatpush1.msra.mxu0 %v1983
      %2027 = vmatprep.subr.mxu0 %v1986
      %2028 = vmatpush1.msra.mxu0 %v1985
      %2029 = vmatprep.subr.mxu0 %v1988
      %2030 = vmatpush1.msra.mxu0 %v1987
      %2031 = vmatprep.subr.mxu0 %v1990
      %2032 = vmatpush1.msra.mxu0 %v1989
      %2033 = vmatprep.subr.mxu0 %v1992
      %2034 = vmatpush1.msra.mxu0 %v1991
      %2035 = vmatprep.subr.mxu0 %v1994
      %2036 = vmatpush1.msra.mxu0 %v1993
      %2037 = vmatprep.subr.mxu0 %v1996
      %2038 = vmatpush1.msra.mxu0 %v1995
      %2039 = vmatprep.subr.mxu0 0.0
      %2040 = vmatpush1.msra.mxu0 0.0
      %2041 = vmatprep.subr.mxu0 0.0
      %2042 = vmatpush1.msra.mxu0 0.0
      %2043 = vmatprep.subr.mxu0 0.0
      %2044 = vmatpush1.msra.mxu0 0.0
      %2045 = vmatprep.subr.mxu0 0.0
      %2046 = vmatpush1.msra.mxu0 0.0
      %2047 = vmatprep.subr.mxu0 0.0
      %2048 = vmatpush1.msra.mxu0 0.0
      %2049 = vmatprep.subr.mxu0 0.0
      %2050 = vmatpush1.msra.mxu0 0.0
      %2051 = vmatprep.subr.mxu0 0.0
      %2052 = vmatpush1.msra.mxu0 0.0
      %2053 = vmatprep.subr.mxu0 0.0
      %2054 = vmatpush1.msra.mxu0 0.0
      %2055 = vmatprep.subr.mxu0 0.0
      %2056 = vmatpush1.msra.mxu0 0.0
      %2057 = vmatprep.subr.mxu0 0.0
      %2058 = vmatpush1.msra.mxu0 0.0
      %2059 = vmatprep.subr.mxu0 0.0
      %2060 = vmatpush1.msra.mxu0 0.0
      %2061 = vmatprep.subr.mxu0 0.0
      %2062 = vmatpush1.msra.mxu0 0.0
      %2063 = vmatprep.subr.mxu0 0.0
      %2064 = vmatpush1.msra.mxu0 0.0
      %2065 = vmatprep.subr.mxu0 0.0
      %2066 = vmatpush1.msra.mxu0 0.0
      %2067 = vmatprep.mubr.f32.mxu0 %v1998
      %2068 = vmatmul.mubr.f32.gmra.mrb[0].mxu0 %v1957
      %v2069 = vpop.f32.mrb[0].mxu0
      %v2070 = vadd.f32 0.0, %v2069
      %v2071 = vpop.f32.mrb[0].mxu0
      %v2072 = vadd.f32 0.0, %v2071
      %2073 = vmatprep.mubr.f32.mxu0 %v2001
      %2074 = vmatmul.mubr.f32.gmra.mrb[0].mxu0 %v1959
      %v2075 = vpop.f32.mrb[0].mxu0
      %v2076 = vadd.f32 0.0, %v2075
      %v2077 = vpop.f32.mrb[0].mxu0
      %v2078 = vadd.f32 0.0, %v2077
      %2079 = vdwg.mxu0
      %v2080 = vld [vmem:[%s9] sm:$0xff]
      %v2081 = vld [vmem:[%s9 + $0x8] sm:$0xff]
      %v2082 = vld [vmem:[%s10] sm:$0xff]
      %v2083 = vld [vmem:[%s10 + $0x8] sm:$0xff]
      %v2085 = vsel %vm522, %v2082, 0
      %v2088 = vsel %vm522, %v2083, 0
      %2090 = vmatprep.subr.mxu0 %v2072
      %2091 = vmatpush1.msra.mxu0 %v2070
      %2092 = vmatprep.subr.mxu0 %v2078
      %2093 = vmatpush1.msra.mxu0 %v2076
      %2094 = vmatprep.subr.mxu0 0.0
      %2095 = vmatpush1.msra.mxu0 0.0
      %2096 = vmatprep.subr.mxu0 0.0
      %2097 = vmatpush1.msra.mxu0 0.0
      %2098 = vmatprep.subr.mxu0 0.0
      %2099 = vmatpush1.msra.mxu0 0.0
      %2100 = vmatprep.subr.mxu0 0.0
      %2101 = vmatpush1.msra.mxu0 0.0
      %2102 = vmatprep.subr.mxu0 0.0
      %2103 = vmatpush1.msra.mxu0 0.0
      %2104 = vmatprep.subr.mxu0 0.0
      %2105 = vmatpush1.msra.mxu0 0.0
      %2106 = vmatprep.subr.mxu0 0.0
      %2107 = vmatpush1.msra.mxu0 0.0
      %2108 = vmatprep.subr.mxu0 0.0
      %2109 = vmatpush1.msra.mxu0 0.0
      %2110 = vmatprep.subr.mxu0 0.0
      %2111 = vmatpush1.msra.mxu0 0.0
      %2112 = vmatprep.subr.mxu0 0.0
      %2113 = vmatpush1.msra.mxu0 0.0
      %2114 = vmatprep.subr.mxu0 0.0
      %2115 = vmatpush1.msra.mxu0 0.0
      %2116 = vmatprep.subr.mxu0 0.0
      %2117 = vmatpush1.msra.mxu0 0.0
      %2118 = vmatprep.subr.mxu0 0.0
      %2119 = vmatpush1.msra.mxu0 0.0
      %2120 = vmatprep.subr.mxu0 0.0
      %2121 = vmatpush1.msra.mxu0 0.0
      %2122 = vmatprep.subr.mxu0 0.0
      %2123 = vmatpush1.msra.mxu0 0.0
      %2124 = vmatprep.subr.mxu0 0.0
      %2125 = vmatpush1.msra.mxu0 0.0
      %2126 = vmatprep.subr.mxu0 0.0
      %2127 = vmatpush1.msra.mxu0 0.0
      %2128 = vmatprep.subr.mxu0 0.0
      %2129 = vmatpush1.msra.mxu0 0.0
      %2130 = vmatprep.subr.mxu0 0.0
      %2131 = vmatpush1.msra.mxu0 0.0
      %2132 = vmatprep.subr.mxu0 0.0
      %2133 = vmatpush1.msra.mxu0 0.0
      %2134 = vmatprep.subr.mxu0 0.0
      %2135 = vmatpush1.msra.mxu0 0.0
      %2136 = vmatprep.subr.mxu0 0.0
      %2137 = vmatpush1.msra.mxu0 0.0
      %2138 = vmatprep.subr.mxu0 0.0
      %2139 = vmatpush1.msra.mxu0 0.0
      %2140 = vmatprep.subr.mxu0 0.0
      %2141 = vmatpush1.msra.mxu0 0.0
      %2142 = vmatprep.subr.mxu0 0.0
      %2143 = vmatpush1.msra.mxu0 0.0
      %2144 = vmatprep.subr.mxu0 0.0
      %2145 = vmatpush1.msra.mxu0 0.0
      %2146 = vmatprep.subr.mxu0 0.0
      %2147 = vmatpush1.msra.mxu0 0.0
      %2148 = vmatprep.subr.mxu0 0.0
      %2149 = vmatpush1.msra.mxu0 0.0
      %2150 = vmatprep.subr.mxu0 0.0
      %2151 = vmatpush1.msra.mxu0 0.0
      %2152 = vmatprep.subr.mxu0 0.0
      %2153 = vmatpush1.msra.mxu0 0.0
      %2154 = vmatprep.mubr.f32.mxu0 0.0
      %2155 = vmatmul.mubr.f32.gmra.mrb[0].mxu0 %v2085
      %v2156 = vpop.f32.mrb[0].mxu0
      %v2157 = vadd.f32 0.0, %v2156
      %v2158 = vpop.f32.mrb[0].mxu0
      %v2159 = vadd.f32 0.0, %v2158
      %2160 = vmatprep.mubr.f32.mxu0 0.0
      %2161 = vmatmul.mubr.f32.gmra.mrb[0].mxu0 %v2088
      %v2162 = vpop.f32.mrb[0].mxu0
      %v2163 = vadd.f32 0.0, %v2162
      %v2164 = vpop.f32.mrb[0].mxu0
      %v2165 = vadd.f32 0.0, %v2164
      %2166 = vdwg.mxu0
      %v2167 = vadd.f32 %v2157, %v2159
      %2168 = vadd.xlane.f32.xlu0 %v2167
      %v2169 = vpop.xlane.xlu0 %2168
      %v2170 = vadd.f32 %v2163, %v2165
      %2171 = vadd.xlane.f32.xlu0 %v2170
      %v2172 = vpop.xlane.xlu0 %2171
      %v2173 = vmul.f32 %v2169, 0.00390625
      %v2174 = vmul.f32 %v2172, 0.00390625
      %v2176 = vsel %vm522, %v2080, 0
      %v2179 = vsel %vm522, %v2081, 0
      %2181 = vmatprep.subr.mxu0 %v2173
      %2182 = vmatpush1.msra.mxu0 %v2173
      %2183 = vmatprep.subr.mxu0 %v2174
      %2184 = vmatpush1.msra.mxu0 %v2174
      %2185 = vmatprep.subr.mxu0 0.0
      %2186 = vmatpush1.msra.mxu0 0.0
      %2187 = vmatprep.subr.mxu0 0.0
      %2188 = vmatpush1.msra.mxu0 0.0
      %2189 = vmatprep.subr.mxu0 0.0
      %2190 = vmatpush1.msra.mxu0 0.0
      %2191 = vmatprep.subr.mxu0 0.0
      %2192 = vmatpush1.msra.mxu0 0.0
      %2193 = vmatprep.subr.mxu0 0.0
      %2194 = vmatpush1.msra.mxu0 0.0
      %2195 = vmatprep.subr.mxu0 0.0
      %2196 = vmatpush1.msra.mxu0 0.0
      %2197 = vmatprep.subr.mxu0 0.0
      %2198 = vmatpush1.msra.mxu0 0.0
      %2199 = vmatprep.subr.mxu0 0.0
      %2200 = vmatpush1.msra.mxu0 0.0
      %2201 = vmatprep.subr.mxu0 0.0
      %2202 = vmatpush1.msra.mxu0 0.0
      %2203 = vmatprep.subr.mxu0 0.0
      %2204 = vmatpush1.msra.mxu0 0.0
      %2205 = vmatprep.subr.mxu0 0.0
      %2206 = vmatpush1.msra.mxu0 0.0
      %2207 = vmatprep.subr.mxu0 0.0
      %2208 = vmatpush1.msra.mxu0 0.0
      %2209 = vmatprep.subr.mxu0 0.0
      %2210 = vmatpush1.msra.mxu0 0.0
      %2211 = vmatprep.subr.mxu0 0.0
      %2212 = vmatpush1.msra.mxu0 0.0
      %2213 = vmatprep.subr.mxu0 0.0
      %2214 = vmatpush1.msra.mxu0 0.0
      %2215 = vmatprep.subr.mxu0 0.0
      %2216 = vmatpush1.msra.mxu0 0.0
      %2217 = vmatprep.subr.mxu0 0.0
      %2218 = vmatpush1.msra.mxu0 0.0
      %2219 = vmatprep.subr.mxu0 0.0
      %2220 = vmatpush1.msra.mxu0 0.0
      %2221 = vmatprep.subr.mxu0 0.0
      %2222 = vmatpush1.msra.mxu0 0.0
      %2223 = vmatprep.subr.mxu0 0.0
      %2224 = vmatpush1.msra.mxu0 0.0
      %2225 = vmatprep.subr.mxu0 0.0
      %2226 = vmatpush1.msra.mxu0 0.0
      %2227 = vmatprep.subr.mxu0 0.0
      %2228 = vmatpush1.msra.mxu0 0.0
      %2229 = vmatprep.subr.mxu0 0.0
      %2230 = vmatpush1.msra.mxu0 0.0
      %2231 = vmatprep.subr.mxu0 0.0
      %2232 = vmatpush1.msra.mxu0 0.0
      %2233 = vmatprep.subr.mxu0 0.0
      %2234 = vmatpush1.msra.mxu0 0.0
      %2235 = vmatprep.subr.mxu0 0.0
      %2236 = vmatpush1.msra.mxu0 0.0
      %2237 = vmatprep.subr.mxu0 0.0
      %2238 = vmatpush1.msra.mxu0 0.0
      %2239 = vmatprep.subr.mxu0 0.0
      %2240 = vmatpush1.msra.mxu0 0.0
      %2241 = vmatprep.subr.mxu0 0.0
      %2242 = vmatpush1.msra.mxu0 0.0
      %2243 = vmatprep.subr.mxu0 0.0
      %2244 = vmatpush1.msra.mxu0 0.0
      %2245 = vmatprep.mubr.f32.mxu0 0.0
      %2246 = vmatmul.mubr.f32.gmra.mrb[0].mxu0 %v2176
      %v2247 = vpop.f32.mrb[0].mxu0
      %v2248 = vadd.f32 0.0, %v2247
      %v2249 = vpop.f32.mrb[0].mxu0
      %v2250 = vadd.f32 0.0, %v2249
      %2251 = vmatprep.mubr.f32.mxu0 0.0
      %2252 = vmatmul.mubr.f32.gmra.mrb[0].mxu0 %v2179
      %v2253 = vpop.f32.mrb[0].mxu0
      %v2254 = vadd.f32 0.0, %v2253
      %v2255 = vpop.f32.mrb[0].mxu0
      %v2256 = vadd.f32 0.0, %v2255
      %2257 = vdwg.mxu0
      %v2258 = vsub.f32 %v2070, %v2248
      %v2259 = vsub.f32 %v2072, %v2250
      %v2260 = vsub.f32 %v2076, %v2254
      %v2261 = vsub.f32 %v2078, %v2256
      %v2262 = vmul.f32 %v2258, %v2258
      %v2263 = vmul.f32 %v2259, %v2259
      %v2264 = vmul.f32 %v2260, %v2260
      %v2265 = vmul.f32 %v2261, %v2261
      %2266 = vmatprep.subr.mxu0 %v2263
      %2267 = vmatpush1.msra.mxu0 %v2262
      %2268 = vmatprep.subr.mxu0 %v2265
      %2269 = vmatpush1.msra.mxu0 %v2264
      %2270 = vmatprep.subr.mxu0 0.0
      %2271 = vmatpush1.msra.mxu0 0.0
      %2272 = vmatprep.subr.mxu0 0.0
      %2273 = vmatpush1.msra.mxu0 0.0
      %2274 = vmatprep.subr.mxu0 0.0
      %2275 = vmatpush1.msra.mxu0 0.0
      %2276 = vmatprep.subr.mxu0 0.0
      %2277 = vmatpush1.msra.mxu0 0.0
      %2278 = vmatprep.subr.mxu0 0.0
      %2279 = vmatpush1.msra.mxu0 0.0
      %2280 = vmatprep.subr.mxu0 0.0
      %2281 = vmatpush1.msra.mxu0 0.0
      %2282 = vmatprep.subr.mxu0 0.0
      %2283 = vmatpush1.msra.mxu0 0.0
      %2284 = vmatprep.subr.mxu0 0.0
      %2285 = vmatpush1.msra.mxu0 0.0
      %2286 = vmatprep.subr.mxu0 0.0
      %2287 = vmatpush1.msra.mxu0 0.0
      %2288 = vmatprep.subr.mxu0 0.0
      %2289 = vmatpush1.msra.mxu0 0.0
      %2290 = vmatprep.subr.mxu0 0.0
      %2291 = vmatpush1.msra.mxu0 0.0
      %2292 = vmatprep.subr.mxu0 0.0
      %2293 = vmatpush1.msra.mxu0 0.0
      %2294 = vmatprep.subr.mxu0 0.0
      %2295 = vmatpush1.msra.mxu0 0.0
      %2296 = vmatprep.subr.mxu0 0.0
      %2297 = vmatpush1.msra.mxu0 0.0
      %2298 = vmatprep.subr.mxu0 0.0
      %2299 = vmatpush1.msra.mxu0 0.0
      %2300 = vmatprep.subr.mxu0 0.0
      %2301 = vmatpush1.msra.mxu0 0.0
      %2302 = vmatprep.subr.mxu0 0.0
      %2303 = vmatpush1.msra.mxu0 0.0
      %2304 = vmatprep.subr.mxu0 0.0
      %2305 = vmatpush1.msra.mxu0 0.0
      %2306 = vmatprep.subr.mxu0 0.0
      %2307 = vmatpush1.msra.mxu0 0.0
      %2308 = vmatprep.subr.mxu0 0.0
      %2309 = vmatpush1.msra.mxu0 0.0
      %2310 = vmatprep.subr.mxu0 0.0
      %2311 = vmatpush1.msra.mxu0 0.0
      %2312 = vmatprep.subr.mxu0 0.0
      %2313 = vmatpush1.msra.mxu0 0.0
      %2314 = vmatprep.subr.mxu0 0.0
      %2315 = vmatpush1.msra.mxu0 0.0
      %2316 = vmatprep.subr.mxu0 0.0
      %2317 = vmatpush1.msra.mxu0 0.0
      %2318 = vmatprep.subr.mxu0 0.0
      %2319 = vmatpush1.msra.mxu0 0.0
      %2320 = vmatprep.subr.mxu0 0.0
      %2321 = vmatpush1.msra.mxu0 0.0
      %2322 = vmatprep.subr.mxu0 0.0
      %2323 = vmatpush1.msra.mxu0 0.0
      %2324 = vmatprep.subr.mxu0 0.0
      %2325 = vmatpush1.msra.mxu0 0.0
      %2326 = vmatprep.subr.mxu0 0.0
      %2327 = vmatpush1.msra.mxu0 0.0
      %2328 = vmatprep.subr.mxu0 0.0
      %2329 = vmatpush1.msra.mxu0 0.0
      %2330 = vmatprep.mubr.f32.mxu0 0.0
      %2331 = vmatmul.mubr.f32.gmra.mrb[0].mxu0 %v2085
      %v2332 = vpop.f32.mrb[0].mxu0
      %v2333 = vadd.f32 0.0, %v2332
      %v2334 = vpop.f32.mrb[0].mxu0
      %v2335 = vadd.f32 0.0, %v2334
      %2336 = vmatprep.mubr.f32.mxu0 0.0
      %2337 = vmatmul.mubr.f32.gmra.mrb[0].mxu0 %v2088
      %v2338 = vpop.f32.mrb[0].mxu0
      %v2339 = vadd.f32 0.0, %v2338
      %v2340 = vpop.f32.mrb[0].mxu0
      %v2341 = vadd.f32 0.0, %v2340
      %2342 = vdwg.mxu0
      %v2343 = vadd.f32 %v2333, %v2335
      %2344 = vadd.xlane.f32.xlu0 %v2343
      %v2345 = vpop.xlane.xlu0 %2344
      %v2346 = vadd.f32 %v2339, %v2341
      %2347 = vadd.xlane.f32.xlu0 %v2346
      %v2348 = vpop.xlane.xlu0 %2347
      %v2349 = vmul.f32 %v2345, 0.00390625
      %v2350 = vmul.f32 %v2348, 0.00390625
      %v2351 = vadd.f32 %v2349, 1e-05
      %v2352 = vadd.f32 %v2350, 1e-05
      %v2353 = vrsqrt.pop %v2351
      %v2354 = vrsqrt.pop %v2352
      %2355 = vmatprep.subr.mxu0 %v2353
      %2356 = vmatpush1.msra.mxu0 %v2353
      %2357 = vmatprep.subr.mxu0 %v2354
      %2358 = vmatpush1.msra.mxu0 %v2354
      %2359 = vmatprep.subr.mxu0 0.0
      %2360 = vmatpush1.msra.mxu0 0.0
      %2361 = vmatprep.subr.mxu0 0.0
      %2362 = vmatpush1.msra.mxu0 0.0
      %2363 = vmatprep.subr.mxu0 0.0
      %2364 = vmatpush1.msra.mxu0 0.0
      %2365 = vmatprep.subr.mxu0 0.0
      %2366 = vmatpush1.msra.mxu0 0.0
      %2367 = vmatprep.subr.mxu0 0.0
      %2368 = vmatpush1.msra.mxu0 0.0
      %2369 = vmatprep.subr.mxu0 0.0
      %2370 = vmatpush1.msra.mxu0 0.0
      %2371 = vmatprep.subr.mxu0 0.0
      %2372 = vmatpush1.msra.mxu0 0.0
      %2373 = vmatprep.subr.mxu0 0.0
      %2374 = vmatpush1.msra.mxu0 0.0
      %2375 = vmatprep.subr.mxu0 0.0
      %2376 = vmatpush1.msra.mxu0 0.0
      %2377 = vmatprep.subr.mxu0 0.0
      %2378 = vmatpush1.msra.mxu0 0.0
      %2379 = vmatprep.subr.mxu0 0.0
      %2380 = vmatpush1.msra.mxu0 0.0
      %2381 = vmatprep.subr.mxu0 0.0
      %2382 = vmatpush1.msra.mxu0 0.0
      %2383 = vmatprep.subr.mxu0 0.0
      %2384 = vmatpush1.msra.mxu0 0.0
      %2385 = vmatprep.subr.mxu0 0.0
      %2386 = vmatpush1.msra.mxu0 0.0
      %2387 = vmatprep.subr.mxu0 0.0
      %2388 = vmatpush1.msra.mxu0 0.0
      %2389 = vmatprep.subr.mxu0 0.0
      %2390 = vmatpush1.msra.mxu0 0.0
      %2391 = vmatprep.subr.mxu0 0.0
      %2392 = vmatpush1.msra.mxu0 0.0
      %2393 = vmatprep.subr.mxu0 0.0
      %2394 = vmatpush1.msra.mxu0 0.0
      %2395 = vmatprep.subr.mxu0 0.0
      %2396 = vmatpush1.msra.mxu0 0.0
      %2397 = vmatprep.subr.mxu0 0.0
      %2398 = vmatpush1.msra.mxu0 0.0
      %2399 = vmatprep.subr.mxu0 0.0
      %2400 = vmatpush1.msra.mxu0 0.0
      %2401 = vmatprep.subr.mxu0 0.0
      %2402 = vmatpush1.msra.mxu0 0.0
      %2403 = vmatprep.subr.mxu0 0.0
      %2404 = vmatpush1.msra.mxu0 0.0
      %2405 = vmatprep.subr.mxu0 0.0
      %2406 = vmatpush1.msra.mxu0 0.0
      %2407 = vmatprep.subr.mxu0 0.0
      %2408 = vmatpush1.msra.mxu0 0.0
      %2409 = vmatprep.subr.mxu0 0.0
      %2410 = vmatpush1.msra.mxu0 0.0
      %2411 = vmatprep.subr.mxu0 0.0
      %2412 = vmatpush1.msra.mxu0 0.0
      %2413 = vmatprep.subr.mxu0 0.0
      %2414 = vmatpush1.msra.mxu0 0.0
      %2415 = vmatprep.subr.mxu0 0.0
      %2416 = vmatpush1.msra.mxu0 0.0
      %2417 = vmatprep.subr.mxu0 0.0
      %2418 = vmatpush1.msra.mxu0 0.0
      %2419 = vmatprep.mubr.f32.mxu0 0.0
      %2420 = vmatmul.mubr.f32.gmra.mrb[0].mxu0 %v2176
      %v2421 = vpop.f32.mrb[0].mxu0
      %v2422 = vadd.f32 0.0, %v2421
      %v2423 = vpop.f32.mrb[0].mxu0
      %v2424 = vadd.f32 0.0, %v2423
      %2425 = vmatprep.mubr.f32.mxu0 0.0
      %2426 = vmatmul.mubr.f32.gmra.mrb[0].mxu0 %v2179
      %v2427 = vpop.f32.mrb[0].mxu0
      %v2428 = vadd.f32 0.0, %v2427
      %v2429 = vpop.f32.mrb[0].mxu0
      %v2430 = vadd.f32 0.0, %v2429
      %2431 = vdwg.mxu0
      %v2432 = vmul.f32 %v2258, %v2422
      %v2433 = vmul.f32 %v2259, %v2424
      %v2434 = vmul.f32 %v2260, %v2428
      %v2435 = vmul.f32 %v2261, %v2430
      %2437 = vset.pattern.permute.xlu0 0
      %2438 = vperm.xlu0 %2437, %v1501
      %v2439 = vpop.permute.xlu0 %2438
      %2442 = vset.pattern.permute.xlu0 0
      %2443 = vperm.xlu0 %2442, %v1502
      %v2444 = vpop.permute.xlu0 %2443
      %v2446 = vmul.f32 %v2432, %v2439
      %v2447 = vmul.f32 %v2433, %v2439
      %v2448 = vmul.f32 %v2434, %v2444
      %v2449 = vmul.f32 %v2435, %v2444
      %2451 = vset.pattern.permute.xlu0 0
      %2452 = vperm.xlu0 %2451, %v1503
      %v2453 = vpop.permute.xlu0 %2452
      %2456 = vset.pattern.permute.xlu0 0
      %2457 = vperm.xlu0 %2456, %v1504
      %v2458 = vpop.permute.xlu0 %2457
      %v2460 = vadd.f32 %v2446, %v2453
      %v2461 = vadd.f32 %v2447, %v2453
      %v2462 = vadd.f32 %v2448, %v2458
      %v2463 = vadd.f32 %v2449, %v2458
      %v2464 = vmul.f32 %v2460, 0.5
      %v2465 = vmul.f32 %v2461, 0.5
      %v2466 = vmul.f32 %v2462, 0.5
      %v2467 = vmul.f32 %v2463, 0.5
      %v2468 = vmul.f32 %v2460, 0.70710677
      %v2469 = vmul.f32 %v2461, 0.70710677
      %v2470 = vmul.f32 %v2462, 0.70710677
      %v2471 = vmul.f32 %v2463, 0.70710677
      %vm2472 = vcmp.ge.f32.partialorder %v2468, 0.0
      %vm2473 = vcmp.ge.f32.partialorder %v2469, 0.0
      %vm2474 = vcmp.ge.f32.partialorder %v2470, 0.0
      %vm2475 = vcmp.ge.f32.partialorder %v2471, 0.0
      %v2476 = vsel %vm2472, 1.0, -1.0
      %v2477 = vsel %vm2473, 1.0, -1.0
      %v2478 = vsel %vm2474, 1.0, -1.0
      %v2479 = vsel %vm2475, 1.0, -1.0
      %v2480 = vand.u32 2147483647, %v2468
      %v2481 = vand.u32 2147483647, %v2469
      %v2482 = vand.u32 2147483647, %v2470
      %v2483 = vand.u32 2147483647, %v2471
      %v2484 = vmul.f32 %v2480, 0.3275911
      %v2485 = vmul.f32 %v2481, 0.3275911
      %v2486 = vmul.f32 %v2482, 0.3275911
      %v2487 = vmul.f32 %v2483, 0.3275911
      %v2488 = vadd.f32 %v2484, 1.0
      %v2489 = vadd.f32 %v2485, 1.0
      %v2490 = vadd.f32 %v2486, 1.0
      %v2491 = vadd.f32 %v2487, 1.0
      %v2492 = vrcp.pop %v2488
      %v2493 = vrcp.pop %v2489
      %v2494 = vrcp.pop %v2490
      %v2495 = vrcp.pop %v2491
      %v2496 = vmul.f32 %v2492, 1.0614054
      %v2497 = vmul.f32 %v2493, 1.0614054
      %v2498 = vmul.f32 %v2494, 1.0614054
      %v2499 = vmul.f32 %v2495, 1.0614054
      %v2500 = vadd.f32 %v2496, -1.4531521
      %v2501 = vadd.f32 %v2497, -1.4531521
      %v2502 = vadd.f32 %v2498, -1.4531521
      %v2503 = vadd.f32 %v2499, -1.4531521
      %v2504 = vmul.f32 %v2500, %v2492
      %v2505 = vmul.f32 %v2501, %v2493
      %v2506 = vmul.f32 %v2502, %v2494
      %v2507 = vmul.f32 %v2503, %v2495
      %v2508 = vadd.f32 %v2504, 1.4214138
      %v2509 = vadd.f32 %v2505, 1.4214138
      %v2510 = vadd.f32 %v2506, 1.4214138
      %v2511 = vadd.f32 %v2507, 1.4214138
      %v2512 = vmul.f32 %v2508, %v2492
      %v2513 = vmul.f32 %v2509, %v2493
      %v2514 = vmul.f32 %v2510, %v2494
      %v2515 = vmul.f32 %v2511, %v2495
      %v2516 = vadd.f32 %v2512, -0.28449672
      %v2517 = vadd.f32 %v2513, -0.28449672
      %v2518 = vadd.f32 %v2514, -0.28449672
      %v2519 = vadd.f32 %v2515, -0.28449672
      %v2520 = vmul.f32 %v2516, %v2492
      %v2521 = vmul.f32 %v2517, %v2493
      %v2522 = vmul.f32 %v2518, %v2494
      %v2523 = vmul.f32 %v2519, %v2495
      %v2524 = vadd.f32 %v2520, 0.2548296
      %v2525 = vadd.f32 %v2521, 0.2548296
      %v2526 = vadd.f32 %v2522, 0.2548296
      %v2527 = vadd.f32 %v2523, 0.2548296
      %v2528 = vmul.f32 %v2524, %v2492
      %v2529 = vmul.f32 %v2525, %v2493
      %v2530 = vmul.f32 %v2526, %v2494
      %v2531 = vmul.f32 %v2527, %v2495
      %v2532 = vsub.f32 0.0, %v2480
      %v2533 = vsub.f32 0.0, %v2481
      %v2534 = vsub.f32 0.0, %v2482
      %v2535 = vsub.f32 0.0, %v2483
      %v2536 = vmul.f32 %v2532, %v2480
      %v2537 = vmul.f32 %v2533, %v2481
      %v2538 = vmul.f32 %v2534, %v2482
      %v2539 = vmul.f32 %v2535, %v2483
      %v2540 = vmul.f32 %v2536, 1.442695
      %v2541 = vpow.pop %v2540
      %v2542 = vmul.f32 %v2537, 1.442695
      %v2543 = vpow.pop %v2542
      %v2544 = vmul.f32 %v2538, 1.442695
      %v2545 = vpow.pop %v2544
      %v2546 = vmul.f32 %v2539, 1.442695
      %v2547 = vpow.pop %v2546
      %v2548 = vmul.f32 %v2528, %v2541
      %v2549 = vmul.f32 %v2529, %v2543
      %v2550 = vmul.f32 %v2530, %v2545
      %v2551 = vmul.f32 %v2531, %v2547
      %v2552 = vsub.f32 1.0, %v2548
      %v2553 = vsub.f32 1.0, %v2549
      %v2554 = vsub.f32 1.0, %v2550
      %v2555 = vsub.f32 1.0, %v2551
      %v2556 = vmul.f32 %v2476, %v2552
      %v2557 = vmul.f32 %v2477, %v2553
      %v2558 = vmul.f32 %v2478, %v2554
      %v2559 = vmul.f32 %v2479, %v2555
      %v2560 = vadd.f32 %v2556, 1.0
      %v2561 = vadd.f32 %v2557, 1.0
      %v2562 = vadd.f32 %v2558, 1.0
      %v2563 = vadd.f32 %v2559, 1.0
      %v2564 = vmul.f32 %v2464, %v2560
      %v2565 = vmul.f32 %v2465, %v2561
      %v2566 = vmul.f32 %v2466, %v2562
      %v2567 = vmul.f32 %v2467, %v2563
      %v2568 = vadd.f32 %v2564, %v414
      %v2569 = vadd.f32 %v2565, %v415
      %v2570 = vadd.f32 %v2566, %v416
      %v2571 = vadd.f32 %v2567, %v417
      %v2572 = vld [vmem:[%s7] sm:$0xff]
      %v2573 = vld [vmem:[%s7 + $0x8] sm:$0xff]
      %v2574 = vld [vmem:[%s8] sm:$0xff]
      %v2575 = vld [vmem:[%s8 + $0x8] sm:$0xff]
      %2576 = vmatprep.subr.mxu0 %v2569
      %2577 = vmatpush1.msra.mxu0 %v2568
      %2578 = vmatprep.subr.mxu0 %v2571
      %2579 = vmatpush1.msra.mxu0 %v2570
      %2580 = vmatprep.subr.mxu0 0.0
      %2581 = vmatpush1.msra.mxu0 0.0
      %2582 = vmatprep.subr.mxu0 0.0
      %2583 = vmatpush1.msra.mxu0 0.0
      %2584 = vmatprep.subr.mxu0 0.0
      %2585 = vmatpush1.msra.mxu0 0.0
      %2586 = vmatprep.subr.mxu0 0.0
      %2587 = vmatpush1.msra.mxu0 0.0
      %2588 = vmatprep.subr.mxu0 0.0
      %2589 = vmatpush1.msra.mxu0 0.0
      %2590 = vmatprep.subr.mxu0 0.0
      %2591 = vmatpush1.msra.mxu0 0.0
      %2592 = vmatprep.subr.mxu0 0.0
      %2593 = vmatpush1.msra.mxu0 0.0
      %2594 = vmatprep.subr.mxu0 0.0
      %2595 = vmatpush1.msra.mxu0 0.0
      %2596 = vmatprep.subr.mxu0 0.0
      %2597 = vmatpush1.msra.mxu0 0.0
      %2598 = vmatprep.subr.mxu0 0.0
      %2599 = vmatpush1.msra.mxu0 0.0
      %2600 = vmatprep.subr.mxu0 0.0
      %2601 = vmatpush1.msra.mxu0 0.0
      %2602 = vmatprep.subr.mxu0 0.0
      %2603 = vmatpush1.msra.mxu0 0.0
      %2604 = vmatprep.subr.mxu0 0.0
      %2605 = vmatpush1.msra.mxu0 0.0
      %2606 = vmatprep.subr.mxu0 0.0
      %2607 = vmatpush1.msra.mxu0 0.0
      %2608 = vmatprep.subr.mxu0 0.0
      %2609 = vmatpush1.msra.mxu0 0.0
      %2610 = vmatprep.subr.mxu0 0.0
      %2611 = vmatpush1.msra.mxu0 0.0
      %2612 = vmatprep.subr.mxu0 0.0
      %2613 = vmatpush1.msra.mxu0 0.0
      %2614 = vmatprep.subr.mxu0 0.0
      %2615 = vmatpush1.msra.mxu0 0.0
      %2616 = vmatprep.subr.mxu0 0.0
      %2617 = vmatpush1.msra.mxu0 0.0
      %2618 = vmatprep.subr.mxu0 0.0
      %2619 = vmatpush1.msra.mxu0 0.0
      %2620 = vmatprep.subr.mxu0 0.0
      %2621 = vmatpush1.msra.mxu0 0.0
      %2622 = vmatprep.subr.mxu0 0.0
      %2623 = vmatpush1.msra.mxu0 0.0
      %2624 = vmatprep.subr.mxu0 0.0
      %2625 = vmatpush1.msra.mxu0 0.0
      %2626 = vmatprep.subr.mxu0 0.0
      %2627 = vmatpush1.msra.mxu0 0.0
      %2628 = vmatprep.subr.mxu0 0.0
      %2629 = vmatpush1.msra.mxu0 0.0
      %2630 = vmatprep.subr.mxu0 0.0
      %2631 = vmatpush1.msra.mxu0 0.0
      %2632 = vmatprep.subr.mxu0 0.0
      %2633 = vmatpush1.msra.mxu0 0.0
      %2634 = vmatprep.subr.mxu0 0.0
      %2635 = vmatpush1.msra.mxu0 0.0
      %2636 = vmatprep.subr.mxu0 0.0
      %2637 = vmatpush1.msra.mxu0 0.0
      %2638 = vmatprep.subr.mxu0 0.0
      %2639 = vmatpush1.msra.mxu0 0.0
      %2640 = vmatprep.mubr.f32.mxu0 0.0
      %2641 = vmatmul.mubr.f32.gmra.mrb[0].mxu0 %v2085
      %v2642 = vpop.f32.mrb[0].mxu0
      %v2643 = vadd.f32 0.0, %v2642
      %v2644 = vpop.f32.mrb[0].mxu0
      %v2645 = vadd.f32 0.0, %v2644
      %2646 = vmatprep.mubr.f32.mxu0 0.0
      %2647 = vmatmul.mubr.f32.gmra.mrb[0].mxu0 %v2088
      %v2648 = vpop.f32.mrb[0].mxu0
      %v2649 = vadd.f32 0.0, %v2648
      %v2650 = vpop.f32.mrb[0].mxu0
      %v2651 = vadd.f32 0.0, %v2650
      %2652 = vdwg.mxu0
      %v2653 = vadd.f32 %v2643, %v2645
      %2654 = vadd.xlane.f32.xlu0 %v2653
      %v2655 = vpop.xlane.xlu0 %2654
      %v2656 = vadd.f32 %v2649, %v2651
      %2657 = vadd.xlane.f32.xlu0 %v2656
      %v2658 = vpop.xlane.xlu0 %2657
      %v2659 = vmul.f32 %v2655, 0.00390625
      %v2660 = vmul.f32 %v2658, 0.00390625
      %2661 = vmatprep.subr.mxu0 %v2659
      %2662 = vmatpush1.msra.mxu0 %v2659
      %2663 = vmatprep.subr.mxu0 %v2660
      %2664 = vmatpush1.msra.mxu0 %v2660
      %2665 = vmatprep.subr.mxu0 0.0
      %2666 = vmatpush1.msra.mxu0 0.0
      %2667 = vmatprep.subr.mxu0 0.0
      %2668 = vmatpush1.msra.mxu0 0.0
      %2669 = vmatprep.subr.mxu0 0.0
      %2670 = vmatpush1.msra.mxu0 0.0
      %2671 = vmatprep.subr.mxu0 0.0
      %2672 = vmatpush1.msra.mxu0 0.0
      %2673 = vmatprep.subr.mxu0 0.0
      %2674 = vmatpush1.msra.mxu0 0.0
      %2675 = vmatprep.subr.mxu0 0.0
      %2676 = vmatpush1.msra.mxu0 0.0
      %2677 = vmatprep.subr.mxu0 0.0
      %2678 = vmatpush1.msra.mxu0 0.0
      %2679 = vmatprep.subr.mxu0 0.0
      %2680 = vmatpush1.msra.mxu0 0.0
      %2681 = vmatprep.subr.mxu0 0.0
      %2682 = vmatpush1.msra.mxu0 0.0
      %2683 = vmatprep.subr.mxu0 0.0
      %2684 = vmatpush1.msra.mxu0 0.0
      %2685 = vmatprep.subr.mxu0 0.0
      %2686 = vmatpush1.msra.mxu0 0.0
      %2687 = vmatprep.subr.mxu0 0.0
      %2688 = vmatpush1.msra.mxu0 0.0
      %2689 = vmatprep.subr.mxu0 0.0
      %2690 = vmatpush1.msra.mxu0 0.0
      %2691 = vmatprep.subr.mxu0 0.0
      %2692 = vmatpush1.msra.mxu0 0.0
      %2693 = vmatprep.subr.mxu0 0.0
      %2694 = vmatpush1.msra.mxu0 0.0
      %2695 = vmatprep.subr.mxu0 0.0
      %2696 = vmatpush1.msra.mxu0 0.0
      %2697 = vmatprep.subr.mxu0 0.0
      %2698 = vmatpush1.msra.mxu0 0.0
      %2699 = vmatprep.subr.mxu0 0.0
      %2700 = vmatpush1.msra.mxu0 0.0
      %2701 = vmatprep.subr.mxu0 0.0
      %2702 = vmatpush1.msra.mxu0 0.0
      %2703 = vmatprep.subr.mxu0 0.0
      %2704 = vmatpush1.msra.mxu0 0.0
      %2705 = vmatprep.subr.mxu0 0.0
      %2706 = vmatpush1.msra.mxu0 0.0
      %2707 = vmatprep.subr.mxu0 0.0
      %2708 = vmatpush1.msra.mxu0 0.0
      %2709 = vmatprep.subr.mxu0 0.0
      %2710 = vmatpush1.msra.mxu0 0.0
      %2711 = vmatprep.subr.mxu0 0.0
      %2712 = vmatpush1.msra.mxu0 0.0
      %2713 = vmatprep.subr.mxu0 0.0
      %2714 = vmatpush1.msra.mxu0 0.0
      %2715 = vmatprep.subr.mxu0 0.0
      %2716 = vmatpush1.msra.mxu0 0.0
      %2717 = vmatprep.subr.mxu0 0.0
      %2718 = vmatpush1.msra.mxu0 0.0
      %2719 = vmatprep.subr.mxu0 0.0
      %2720 = vmatpush1.msra.mxu0 0.0
      %2721 = vmatprep.subr.mxu0 0.0
      %2722 = vmatpush1.msra.mxu0 0.0
      %2723 = vmatprep.subr.mxu0 0.0
      %2724 = vmatpush1.msra.mxu0 0.0
      %2725 = vmatprep.mubr.f32.mxu0 0.0
      %2726 = vmatmul.mubr.f32.gmra.mrb[0].mxu0 %v2176
      %v2727 = vpop.f32.mrb[0].mxu0
      %v2728 = vadd.f32 0.0, %v2727
      %v2729 = vpop.f32.mrb[0].mxu0
      %v2730 = vadd.f32 0.0, %v2729
      %2731 = vmatprep.mubr.f32.mxu0 0.0
      %2732 = vmatmul.mubr.f32.gmra.mrb[0].mxu0 %v2179
      %v2733 = vpop.f32.mrb[0].mxu0
      %v2734 = vadd.f32 0.0, %v2733
      %v2735 = vpop.f32.mrb[0].mxu0
      %v2736 = vadd.f32 0.0, %v2735
      %2737 = vdwg.mxu0
      %v2738 = vsub.f32 %v2568, %v2728
      %v2739 = vsub.f32 %v2569, %v2730
      %v2740 = vsub.f32 %v2570, %v2734
      %v2741 = vsub.f32 %v2571, %v2736
      %v2742 = vmul.f32 %v2738, %v2738
      %v2743 = vmul.f32 %v2739, %v2739
      %v2744 = vmul.f32 %v2740, %v2740
      %v2745 = vmul.f32 %v2741, %v2741
      %2746 = vmatprep.subr.mxu0 %v2743
      %2747 = vmatpush1.msra.mxu0 %v2742
      %2748 = vmatprep.subr.mxu0 %v2745
      %2749 = vmatpush1.msra.mxu0 %v2744
      %2750 = vmatprep.subr.mxu0 0.0
      %2751 = vmatpush1.msra.mxu0 0.0
      %2752 = vmatprep.subr.mxu0 0.0
      %2753 = vmatpush1.msra.mxu0 0.0
      %2754 = vmatprep.subr.mxu0 0.0
      %2755 = vmatpush1.msra.mxu0 0.0
      %2756 = vmatprep.subr.mxu0 0.0
      %2757 = vmatpush1.msra.mxu0 0.0
      %2758 = vmatprep.subr.mxu0 0.0
      %2759 = vmatpush1.msra.mxu0 0.0
      %2760 = vmatprep.subr.mxu0 0.0
      %2761 = vmatpush1.msra.mxu0 0.0
      %2762 = vmatprep.subr.mxu0 0.0
      %2763 = vmatpush1.msra.mxu0 0.0
      %2764 = vmatprep.subr.mxu0 0.0
      %2765 = vmatpush1.msra.mxu0 0.0
      %2766 = vmatprep.subr.mxu0 0.0
      %2767 = vmatpush1.msra.mxu0 0.0
      %2768 = vmatprep.subr.mxu0 0.0
      %2769 = vmatpush1.msra.mxu0 0.0
      %2770 = vmatprep.subr.mxu0 0.0
      %2771 = vmatpush1.msra.mxu0 0.0
      %2772 = vmatprep.subr.mxu0 0.0
      %2773 = vmatpush1.msra.mxu0 0.0
      %2774 = vmatprep.subr.mxu0 0.0
      %2775 = vmatpush1.msra.mxu0 0.0
      %2776 = vmatprep.subr.mxu0 0.0
      %2777 = vmatpush1.msra.mxu0 0.0
      %2778 = vmatprep.subr.mxu0 0.0
      %2779 = vmatpush1.msra.mxu0 0.0
      %2780 = vmatprep.subr.mxu0 0.0
      %2781 = vmatpush1.msra.mxu0 0.0
      %2782 = vmatprep.subr.mxu0 0.0
      %2783 = vmatpush1.msra.mxu0 0.0
      %2784 = vmatprep.subr.mxu0 0.0
      %2785 = vmatpush1.msra.mxu0 0.0
      %2786 = vmatprep.subr.mxu0 0.0
      %2787 = vmatpush1.msra.mxu0 0.0
      %2788 = vmatprep.subr.mxu0 0.0
      %2789 = vmatpush1.msra.mxu0 0.0
      %2790 = vmatprep.subr.mxu0 0.0
      %2791 = vmatpush1.msra.mxu0 0.0
      %2792 = vmatprep.subr.mxu0 0.0
      %2793 = vmatpush1.msra.mxu0 0.0
      %2794 = vmatprep.subr.mxu0 0.0
      %2795 = vmatpush1.msra.mxu0 0.0
      %2796 = vmatprep.subr.mxu0 0.0
      %2797 = vmatpush1.msra.mxu0 0.0
      %2798 = vmatprep.subr.mxu0 0.0
      %2799 = vmatpush1.msra.mxu0 0.0
      %2800 = vmatprep.subr.mxu0 0.0
      %2801 = vmatpush1.msra.mxu0 0.0
      %2802 = vmatprep.subr.mxu0 0.0
      %2803 = vmatpush1.msra.mxu0 0.0
      %2804 = vmatprep.subr.mxu0 0.0
      %2805 = vmatpush1.msra.mxu0 0.0
      %2806 = vmatprep.subr.mxu0 0.0
      %2807 = vmatpush1.msra.mxu0 0.0
      %2808 = vmatprep.subr.mxu0 0.0
      %2809 = vmatpush1.msra.mxu0 0.0
      %2810 = vmatprep.mubr.f32.mxu0 0.0
      %2811 = vmatmul.mubr.f32.gmra.mrb[0].mxu0 %v2085
      %v2812 = vpop.f32.mrb[0].mxu0
      %v2813 = vadd.f32 0.0, %v2812
      %v2814 = vpop.f32.mrb[0].mxu0
      %v2815 = vadd.f32 0.0, %v2814
      %2816 = vmatprep.mubr.f32.mxu0 0.0
      %2817 = vmatmul.mubr.f32.gmra.mrb[0].mxu0 %v2088
      %v2818 = vpop.f32.mrb[0].mxu0
      %v2819 = vadd.f32 0.0, %v2818
      %v2820 = vpop.f32.mrb[0].mxu0
      %v2821 = vadd.f32 0.0, %v2820
      %2822 = vdwg.mxu0
      %v2823 = vadd.f32 %v2813, %v2815
      %2824 = vadd.xlane.f32.xlu0 %v2823
      %v2825 = vpop.xlane.xlu0 %2824
      %v2826 = vadd.f32 %v2819, %v2821
      %2827 = vadd.xlane.f32.xlu0 %v2826
      %v2828 = vpop.xlane.xlu0 %2827
      %v2829 = vmul.f32 %v2825, 0.00390625
      %v2830 = vmul.f32 %v2828, 0.00390625
      %v2831 = vadd.f32 %v2829, 1e-05
      %v2832 = vadd.f32 %v2830, 1e-05
      %v2833 = vrsqrt.pop %v2831
      %v2834 = vrsqrt.pop %v2832
      %2835 = vmatprep.subr.mxu0 %v2833
      %2836 = vmatpush1.msra.mxu0 %v2833
      %2837 = vmatprep.subr.mxu0 %v2834
      %2838 = vmatpush1.msra.mxu0 %v2834
      %2839 = vmatprep.subr.mxu0 0.0
      %2840 = vmatpush1.msra.mxu0 0.0
      %2841 = vmatprep.subr.mxu0 0.0
      %2842 = vmatpush1.msra.mxu0 0.0
      %2843 = vmatprep.subr.mxu0 0.0
      %2844 = vmatpush1.msra.mxu0 0.0
      %2845 = vmatprep.subr.mxu0 0.0
      %2846 = vmatpush1.msra.mxu0 0.0
      %2847 = vmatprep.subr.mxu0 0.0
      %2848 = vmatpush1.msra.mxu0 0.0
      %2849 = vmatprep.subr.mxu0 0.0
      %2850 = vmatpush1.msra.mxu0 0.0
      %2851 = vmatprep.subr.mxu0 0.0
      %2852 = vmatpush1.msra.mxu0 0.0
      %2853 = vmatprep.subr.mxu0 0.0
      %2854 = vmatpush1.msra.mxu0 0.0
      %2855 = vmatprep.subr.mxu0 0.0
      %2856 = vmatpush1.msra.mxu0 0.0
      %2857 = vmatprep.subr.mxu0 0.0
      %2858 = vmatpush1.msra.mxu0 0.0
      %2859 = vmatprep.subr.mxu0 0.0
      %2860 = vmatpush1.msra.mxu0 0.0
      %2861 = vmatprep.subr.mxu0 0.0
      %2862 = vmatpush1.msra.mxu0 0.0
      %2863 = vmatprep.subr.mxu0 0.0
      %2864 = vmatpush1.msra.mxu0 0.0
      %2865 = vmatprep.subr.mxu0 0.0
      %2866 = vmatpush1.msra.mxu0 0.0
      %2867 = vmatprep.subr.mxu0 0.0
      %2868 = vmatpush1.msra.mxu0 0.0
      %2869 = vmatprep.subr.mxu0 0.0
      %2870 = vmatpush1.msra.mxu0 0.0
      %2871 = vmatprep.subr.mxu0 0.0
      %2872 = vmatpush1.msra.mxu0 0.0
      %2873 = vmatprep.subr.mxu0 0.0
      %2874 = vmatpush1.msra.mxu0 0.0
      %2875 = vmatprep.subr.mxu0 0.0
      %2876 = vmatpush1.msra.mxu0 0.0
      %2877 = vmatprep.subr.mxu0 0.0
      %2878 = vmatpush1.msra.mxu0 0.0
      %2879 = vmatprep.subr.mxu0 0.0
      %2880 = vmatpush1.msra.mxu0 0.0
      %2881 = vmatprep.subr.mxu0 0.0
      %2882 = vmatpush1.msra.mxu0 0.0
      %2883 = vmatprep.subr.mxu0 0.0
      %2884 = vmatpush1.msra.mxu0 0.0
      %2885 = vmatprep.subr.mxu0 0.0
      %2886 = vmatpush1.msra.mxu0 0.0
      %2887 = vmatprep.subr.mxu0 0.0
      %2888 = vmatpush1.msra.mxu0 0.0
      %2889 = vmatprep.subr.mxu0 0.0
      %2890 = vmatpush1.msra.mxu0 0.0
      %2891 = vmatprep.subr.mxu0 0.0
      %2892 = vmatpush1.msra.mxu0 0.0
      %2893 = vmatprep.subr.mxu0 0.0
      %2894 = vmatpush1.msra.mxu0 0.0
      %2895 = vmatprep.subr.mxu0 0.0
      %2896 = vmatpush1.msra.mxu0 0.0
      %2897 = vmatprep.subr.mxu0 0.0
      %2898 = vmatpush1.msra.mxu0 0.0
      %2899 = vmatprep.mubr.f32.mxu0 0.0
      %2900 = vmatmul.mubr.f32.gmra.mrb[0].mxu0 %v2176
      %v2901 = vpop.f32.mrb[0].mxu0
      %v2902 = vadd.f32 0.0, %v2901
      %v2903 = vpop.f32.mrb[0].mxu0
      %v2904 = vadd.f32 0.0, %v2903
      %2905 = vmatprep.mubr.f32.mxu0 0.0
      %2906 = vmatmul.mubr.f32.gmra.mrb[0].mxu0 %v2179
      %v2907 = vpop.f32.mrb[0].mxu0
      %v2908 = vadd.f32 0.0, %v2907
      %v2909 = vpop.f32.mrb[0].mxu0
      %v2910 = vadd.f32 0.0, %v2909
      %2911 = vdwg.mxu0
      %v2912 = vmul.f32 %v2738, %v2902
      %v2913 = vmul.f32 %v2739, %v2904
      %v2914 = vmul.f32 %v2740, %v2908
      %v2915 = vmul.f32 %v2741, %v2910
      %2917 = vset.pattern.permute.xlu0 0
      %2918 = vperm.xlu0 %2917, %v2572
      %v2919 = vpop.permute.xlu0 %2918
      %2922 = vset.pattern.permute.xlu0 0
      %2923 = vperm.xlu0 %2922, %v2573
      %v2924 = vpop.permute.xlu0 %2923
      %v2926 = vmul.f32 %v2912, %v2919
      %v2927 = vmul.f32 %v2913, %v2919
      %v2928 = vmul.f32 %v2914, %v2924
      %v2929 = vmul.f32 %v2915, %v2924
      %2931 = vset.pattern.permute.xlu0 0
      %2932 = vperm.xlu0 %2931, %v2574
      %v2933 = vpop.permute.xlu0 %2932
      %2936 = vset.pattern.permute.xlu0 0
      %2937 = vperm.xlu0 %2936, %v2575
      %v2938 = vpop.permute.xlu0 %2937
      %v2940 = vadd.f32 %v2926, %v2933
      %v2941 = vadd.f32 %v2927, %v2933
      %v2942 = vadd.f32 %v2928, %v2938
      %v2943 = vadd.f32 %v2929, %v2938
      %2944 = vst [vmem:[%s413] sm:$0xff] %v2940
      %2945 = vst [vmem:[%s413 + $0x8] sm:$0xff] %v2941
      %2946 = vst [vmem:[%s413 + $0x10] sm:$0xff] %v2942
      %2947 = vst [vmem:[%s413 + $0x18] sm:$0xff] %v2943
      %p2948 = scmp.lt.s32.totalorder %s23, 1
      %s2949 = scalar_select %p2948, %s23, 1
      %s2950 = smul.addr %s2949, 4
      %s2951 = smul.addr %s2950, 8
      %s2952 = scalar_lea.vmem %s12, %s2951
      // Predicated region
      $region69: #{unet_upsample_forward.5} parent=67 // pred_check
        %p2953 = pneg %p298
      $region70: #{unet_upsample_forward.5} parent=67 // pred_check_branch
        %2955 = sbr.rel (%p2953) target = $region72
      $region71: #{unet_upsample_forward.5} parent=67 // pred_region
        _
      $region72: #{unet_upsample_forward.5} parent=67 // pred_fallthru
        _
    $region68: #{unet_upsample_forward.5} parent=5 // pred_fallthru
      _
    %p2956 = scmp.le.s32.totalorder 2, %s18
    // Predicated region
    $region73: #{unet_upsample_forward.5} parent=5 // pred_check
      %p2957 = pneg %p2956
    $region74: #{unet_upsample_forward.5} parent=5 // pred_check_branch
      %2959 = sbr.rel (%p2957) target = $region76
    $region75: #{unet_upsample_forward.5} parent=5 // pred_region
      %s2960 = ssub.s32 %s18, 2
      // Predicated region
      $region77: #{unet_upsample_forward.5} parent=75 // pred_check
        %p2961 = pneg %p304
      $region78: #{unet_upsample_forward.5} parent=75 // pred_check_branch
        %2963 = sbr.rel (%p2961) target = $region80
      $region79: #{unet_upsample_forward.5} parent=75 // pred_region
        %p2964 = scmp.lt.s32.totalorder %s24, 1
        %s2965 = scalar_select %p2964, %s24, 1
        %s2966 = smul.addr %s2965, 4
        %s2967 = smul.addr %s2966, 8
        %s2968 = scalar_lea.vmem %s12, %s2967
      $region80: #{unet_upsample_forward.5} parent=75 // pred_fallthru
        _
    $region76: #{unet_upsample_forward.5} parent=5 // pred_fallthru
      _
  $region6: #{unet_upsample_forward.5} parent=0 // loop_footer
    %s22 = sadd.s32 1, %s18
  $region7: #{unet_upsample_forward.5} parent=0 // loop_footer_branch
    %17 = sbr.rel target = $region3
  $region8: #{unet_upsample_forward.5} parent=0 // loop_exit
    _

</llo_original>
